<compile_context>
chip_gen: v6e
topology: v6e:2x2x1
jax: 0.10.0
libtpu: 0.0.40
codegen_flags: <defaults>
</compile_context>

<pallas_src>
import functools

import numpy as np
import jax
import jax.numpy as jnp
from jax.experimental import pallas as pl
from jax.experimental.pallas import tpu as pltpu


def _attention_kernel(q_ref, k_ref, wq_ref, wkv_ref, o_ref, *,
                      attention_dim, block_b, inv_temperature):
    # q_ref  : (NQ, TB, QD)   queries for TB batch elements (native layout)
    # k_ref  : (NK, TB, KD)
    # wq_ref : (NQ, QD, A)    resident across grid steps
    # wkv_ref: (NK, KD, A+OD) fused key/value weights, resident
    # o_ref  : (NQ, TB*OD)    lane-dense output slab
    A = attention_dim

    # Per-slot projections on the MXU: slot axis is the (leading) batch dim.
    query = jax.lax.dot_general(
        q_ref[...], wq_ref[...],
        dimension_numbers=(((2,), (1,)), ((0,), (0,))),
        preferred_element_type=jnp.float32)                      # (NQ, TB, A)
    kv = jax.lax.dot_general(
        k_ref[...], wkv_ref[...],
        dimension_numbers=(((2,), (1,)), ((0,), (0,))),
        preferred_element_type=jnp.float32)                      # (NK, TB, A+OD)

    # Batch-major for the attention matmuls (batch dim leading on both operands).
    query_b = jnp.swapaxes(query, 0, 1)                          # (TB, NQ, A)
    kv_b = jnp.swapaxes(kv, 0, 1)                                # (TB, NK, A+OD)
    key_b = kv_b[:, :, :A]                                       # (TB, NK, A)
    val_b = kv_b[:, :, A:]                                       # (TB, NK, OD)

    # logits[b,n,m] = <query[n,b,:], key[m,b,:]> / temperature   (batched MXU)
    logits = jax.lax.dot_general(
        query_b, key_b,
        dimension_numbers=(((2,), (2,)), ((0,), (0,))),
        preferred_element_type=jnp.float32) * inv_temperature    # (TB, NQ, NK)

    # Softmax over keys (f32, max-subtracted); the divide goes to the EUP.
    m = jnp.max(logits, axis=-1, keepdims=True)
    p = jnp.exp(logits - m)
    attn = p * pl.reciprocal(jnp.sum(p, axis=-1, keepdims=True), approx=True)

    # out[b,n,:] = sum_m attn[b,n,m] * value[m,b,:]              (batched MXU)
    out_b = jax.lax.dot_general(
        attn, val_b,
        dimension_numbers=(((2,), (1,)), ((0,), (0,))),
        preferred_element_type=jnp.float32)                      # (TB, NQ, OD)

    # Lane-dense store: pack the TB batch elements along lanes -> (NQ, TB*OD).
    # Column order (t-major, then out-dim) matches row-major (NQ, B, OD).
    o = jnp.concatenate([out_b[t] for t in range(block_b)], axis=-1)
    o_ref[...] = o.astype(o_ref.dtype)


def attention_forward(q, k, query_weight, key_weight, value_weight, *,
                      attention_dim, block_b=8, mxu_dtype=None):
    """q: (NQ, B, QD), k: (NK, B, KD) -> (NQ, B, OD). Mirrors Attention.forward defaults."""
    NQ, B, QD = q.shape
    NK, Bk, KD = k.shape
    assert Bk == B
    A = query_weight.shape[-1]
    OD = value_weight.shape[-1]

    # Batch tile: sublane-aligned (multiple of 8) when possible, else whole batch.
    if B % block_b != 0:
        block_b = B
    grid_b = B // block_b

    # Fuse K and V projection weights: one resident tensor, one pass over k.
    wq = query_weight
    wkv = jnp.concatenate([key_weight, value_weight], axis=-1)   # (NK, KD, A+OD)

    # Optional bf16 MXU path (v6e / v7x): cast only at the kernel boundary;
    # accumulation and softmax stay f32 inside the kernel.
    if mxu_dtype is not None:
        q_in = q.astype(mxu_dtype)
        k_in = k.astype(mxu_dtype)
        wq = wq.astype(mxu_dtype)
        wkv = wkv.astype(mxu_dtype)
    else:
        q_in, k_in = q, k

    kernel = functools.partial(
        _attention_kernel,
        attention_dim=A,
        block_b=block_b,
        inv_temperature=float(1.0 / np.sqrt(attention_dim)))

    out_flat = pl.pallas_call(
        kernel,
        out_shape=jax.ShapeDtypeStruct((NQ, B * OD), q.dtype),
        grid_spec=pltpu.PrefetchScalarGridSpec(
            num_scalar_prefetch=0,
            grid=(grid_b,),
            in_specs=[
                pl.BlockSpec((NQ, block_b, QD), lambda b: (0, b, 0)),   # native-layout queries
                pl.BlockSpec((NK, block_b, KD), lambda b: (0, b, 0)),   # native-layout keys
                pl.BlockSpec((NQ, QD, A), lambda b: (0, 0, 0)),         # resident Wq
                pl.BlockSpec((NK, KD, A + OD), lambda b: (0, 0, 0)),    # resident fused Wk|Wv
            ],
            out_specs=pl.BlockSpec((NQ, block_b * OD), lambda b: (0, b)),
        ),
        compiler_params=pltpu.CompilerParams(
            dimension_semantics=("parallel",)),
    )(q_in, k_in, wq, wkv)

    # Free reshape back to the PyTorch output convention (num_queries, bs, out_dim).
    return out_flat.reshape(NQ, B, OD)


if __name__ == "__main__":
    # Small shapes consistent with the module:
    #   q: (num_queries, bs, query_dim), k: (num_keys, bs, key_dim)
    NQ, NK, B = 8, 8, 16
    QD = KD = 32
    A = 32      # attention_dim
    OD = 32     # out_dim

    root = jax.random.PRNGKey(0)
    kq, kk, kwq, kwk, kwv = jax.random.split(root, 5)

    b_w = 1.0 / np.sqrt(A)
    b_v = 1.0 / np.sqrt(OD)
    q = jax.random.normal(kq, (NQ, B, QD), dtype=jnp.float32)
    k = jax.random.normal(kk, (NK, B, KD), dtype=jnp.float32)
    wq = jax.random.uniform(kwq, (NQ, QD, A), jnp.float32, -b_w, b_w)
    wk = jax.random.uniform(kwk, (NK, KD, A), jnp.float32, -b_w, b_w)
    wv = jax.random.uniform(kwv, (NK, KD, OD), jnp.float32, -b_v, b_v)

    # Pure-JAX reference mirroring the PyTorch forward (use_bias=False defaults).
    temperature = np.sqrt(A)
    query = jnp.einsum('nbq,nqa->nba', q, wq)
    key_p = jnp.einsum('mbk,mka->mba', k, wk)
    value = jnp.einsum('mbk,mko->mbo', k, wv)
    logits = jnp.einsum('nba,mba->bnm', query, key_p) / temperature
    attn = jax.nn.softmax(logits, axis=-1)
    ref = jnp.einsum('bnm,mbo->nbo', attn, value)

    # f32 path (approx reciprocal in the softmax -> slightly relaxed tolerance).
    out = attention_forward(q, k, wq, wk, wv, attention_dim=A)
    out = jax.block_until_ready(out)
    np.testing.assert_allclose(np.asarray(out), np.asarray(ref), rtol=1e-2, atol=1e-2)

    # bf16 MXU path (v6e/v7x): inputs/weights cast at the kernel boundary.
    out_bf16 = attention_forward(q, k, wq, wk, wv, attention_dim=A,
                                 mxu_dtype=jnp.bfloat16)
    out_bf16 = jax.block_until_ready(out_bf16)
    np.testing.assert_allclose(np.asarray(out_bf16), np.asarray(ref),
                               rtol=5e-2, atol=5e-2)

    print("KERNEL_OK")
</pallas_src>

<mosaic_0001>
module attributes {stable_mosaic.version = 11 : i64} {
  func.func @_attention_kernel(%arg0: i32, %arg1: memref<8x8x32xf32, #tpu.memory_space<vmem>>, %arg2: memref<8x8x32xf32, #tpu.memory_space<vmem>>, %arg3: memref<8x32x32xf32, #tpu.memory_space<vmem>>, %arg4: memref<8x32x64xf32, #tpu.memory_space<vmem>>, %arg5: memref<8x256xf32, #tpu.memory_space<vmem>>) attributes {dimension_semantics = [#tpu.dimension_semantics<parallel>], iteration_bounds = array<i64: 2>, scalar_prefetch = 0 : i64, scratch_operands = 0 : i64, tpu.core_type = #tpu.core_type<tc>, window_params = [{transform_indices = @transform_0, window_bounds = array<i64: 8, 8, 32>}, {transform_indices = @transform_1, window_bounds = array<i64: 8, 8, 32>}, {pipeline_mode = #tpu.pipeline_mode<synchronous>, transform_indices = @transform_2, window_bounds = array<i64: 8, 32, 32>}, {pipeline_mode = #tpu.pipeline_mode<synchronous>, transform_indices = @transform_3, window_bounds = array<i64: 8, 32, 64>}, {transform_indices = @transform_4, window_bounds = array<i64: 8, 256>}]} {
    %c0 = arith.constant 0 : index
    %c0_0 = arith.constant 0 : index
    %c0_1 = arith.constant 0 : index
    %0 = vector.load %arg1[%c0, %c0_0, %c0_1] : memref<8x8x32xf32, #tpu.memory_space<vmem>>, vector<8x8x32xf32>
    %c0_2 = arith.constant 0 : index
    %c0_3 = arith.constant 0 : index
    %c0_4 = arith.constant 0 : index
    %1 = vector.load %arg3[%c0_2, %c0_3, %c0_4] : memref<8x32x32xf32, #tpu.memory_space<vmem>>, vector<8x32x32xf32>
    %cst = arith.constant dense<0.000000e+00> : vector<8x8x32xf32>
    %2 = tpu.matmul %0, %1, %cst {dimension_numbers = #tpu.dot_dimension_numbers<[2], [1], [1], [2], [0, 0, 0, 1, 1, 2], [0], [0]>} : vector<8x8x32xf32>, vector<8x32x32xf32>, vector<8x8x32xf32> -> vector<8x8x32xf32>
    %c0_5 = arith.constant 0 : index
    %c0_6 = arith.constant 0 : index
    %c0_7 = arith.constant 0 : index
    %3 = vector.load %arg2[%c0_5, %c0_6, %c0_7] : memref<8x8x32xf32, #tpu.memory_space<vmem>>, vector<8x8x32xf32>
    %c0_8 = arith.constant 0 : index
    %c0_9 = arith.constant 0 : index
    %c0_10 = arith.constant 0 : index
    %4 = vector.load %arg4[%c0_8, %c0_9, %c0_10] : memref<8x32x64xf32, #tpu.memory_space<vmem>>, vector<8x32x64xf32>
    %cst_11 = arith.constant dense<0.000000e+00> : vector<8x8x64xf32>
    %5 = tpu.matmul %3, %4, %cst_11 {dimension_numbers = #tpu.dot_dimension_numbers<[2], [1], [1], [2], [0, 0, 0, 1, 1, 2], [0], [0]>} : vector<8x8x32xf32>, vector<8x32x64xf32>, vector<8x8x64xf32> -> vector<8x8x64xf32>
    %6 = tpu.transpose %2, [1, 0, 2] : vector<8x8x32xf32> -> vector<8x8x32xf32>
    %7 = tpu.transpose %5, [1, 0, 2] : vector<8x8x64xf32> -> vector<8x8x64xf32>
    %8 = vector.extract_strided_slice %7 {offsets = [0, 0, 0], sizes = [8, 8, 32], strides = [1, 1, 1]} : vector<8x8x64xf32> to vector<8x8x32xf32>
    %9 = vector.extract_strided_slice %7 {offsets = [0, 0, 32], sizes = [8, 8, 32], strides = [1, 1, 1]} : vector<8x8x64xf32> to vector<8x8x32xf32>
    %cst_12 = arith.constant dense<0.000000e+00> : vector<8x8x8xf32>
    %10 = tpu.matmul %6, %8, %cst_12 {dimension_numbers = #tpu.dot_dimension_numbers<[2], [2], [1], [1], [0, 0, 0, 1, 1, 1], [0], [0]>} : vector<8x8x32xf32>, vector<8x8x32xf32>, vector<8x8x8xf32> -> vector<8x8x8xf32>
    %cst_13 = arith.constant 0.176776692 : f32
    %11 = vector.broadcast %cst_13 : f32 to vector<8x8x8xf32>
    %12 = arith.mulf %10, %11 : vector<8x8x8xf32>
    %cst_14 = arith.constant dense<0xFF800000> : vector<8x8xf32>
    %13 = vector.multi_reduction <maximumf>, %12, %cst_14 [2] : vector<8x8x8xf32> to vector<8x8xf32>
    %14 = vector.shape_cast %13 : vector<8x8xf32> to vector<8x8x1xf32>
    %15 = vector.broadcast %14 : vector<8x8x1xf32> to vector<8x8x8xf32>
    %16 = arith.subf %12, %15 : vector<8x8x8xf32>
    %17 = math.exp %16 : vector<8x8x8xf32>
    %cst_15 = arith.constant dense<0.000000e+00> : vector<8x8xf32>
    %18 = vector.multi_reduction <add>, %17, %cst_15 [2] : vector<8x8x8xf32> to vector<8x8xf32>
    %19 = vector.shape_cast %18 : vector<8x8xf32> to vector<8x8x1xf32>
    %20 = tpu.reciprocal %19 {approx = true} : vector<8x8x1xf32> -> vector<8x8x1xf32>
    %21 = vector.broadcast %20 : vector<8x8x1xf32> to vector<8x8x8xf32>
    %22 = arith.mulf %17, %21 : vector<8x8x8xf32>
    %cst_16 = arith.constant dense<0.000000e+00> : vector<8x8x32xf32>
    %23 = tpu.matmul %22, %9, %cst_16 {dimension_numbers = #tpu.dot_dimension_numbers<[2], [1], [1], [2], [0, 0, 0, 1, 1, 2], [0], [0]>} : vector<8x8x8xf32>, vector<8x8x32xf32>, vector<8x8x32xf32> -> vector<8x8x32xf32>
    %24 = vector.extract_strided_slice %23 {offsets = [0, 0, 0], sizes = [1, 8, 32], strides = [1, 1, 1]} : vector<8x8x32xf32> to vector<1x8x32xf32>
    %25 = vector.shape_cast %24 : vector<1x8x32xf32> to vector<8x32xf32>
    %26 = vector.extract_strided_slice %23 {offsets = [1, 0, 0], sizes = [1, 8, 32], strides = [1, 1, 1]} : vector<8x8x32xf32> to vector<1x8x32xf32>
    %27 = vector.shape_cast %26 : vector<1x8x32xf32> to vector<8x32xf32>
    %28 = vector.extract_strided_slice %23 {offsets = [2, 0, 0], sizes = [1, 8, 32], strides = [1, 1, 1]} : vector<8x8x32xf32> to vector<1x8x32xf32>
    %29 = vector.shape_cast %28 : vector<1x8x32xf32> to vector<8x32xf32>
    %30 = vector.extract_strided_slice %23 {offsets = [3, 0, 0], sizes = [1, 8, 32], strides = [1, 1, 1]} : vector<8x8x32xf32> to vector<1x8x32xf32>
    %31 = vector.shape_cast %30 : vector<1x8x32xf32> to vector<8x32xf32>
    %32 = vector.extract_strided_slice %23 {offsets = [4, 0, 0], sizes = [1, 8, 32], strides = [1, 1, 1]} : vector<8x8x32xf32> to vector<1x8x32xf32>
    %33 = vector.shape_cast %32 : vector<1x8x32xf32> to vector<8x32xf32>
    %34 = vector.extract_strided_slice %23 {offsets = [5, 0, 0], sizes = [1, 8, 32], strides = [1, 1, 1]} : vector<8x8x32xf32> to vector<1x8x32xf32>
    %35 = vector.shape_cast %34 : vector<1x8x32xf32> to vector<8x32xf32>
    %36 = vector.extract_strided_slice %23 {offsets = [6, 0, 0], sizes = [1, 8, 32], strides = [1, 1, 1]} : vector<8x8x32xf32> to vector<1x8x32xf32>
    %37 = vector.shape_cast %36 : vector<1x8x32xf32> to vector<8x32xf32>
    %38 = vector.extract_strided_slice %23 {offsets = [7, 0, 0], sizes = [1, 8, 32], strides = [1, 1, 1]} : vector<8x8x32xf32> to vector<1x8x32xf32>
    %39 = vector.shape_cast %38 : vector<1x8x32xf32> to vector<8x32xf32>
    %40 = tpu.concatenate %25, %27, %29, %31, %33, %35, %37, %39 in 1 : vector<8x32xf32>, vector<8x32xf32>, vector<8x32xf32>, vector<8x32xf32>, vector<8x32xf32>, vector<8x32xf32>, vector<8x32xf32>, vector<8x32xf32> -> vector<8x256xf32>
    %c0_17 = arith.constant 0 : index
    %c0_18 = arith.constant 0 : index
    %41 = vector.load %arg5[%c0_17, %c0_18] : memref<8x256xf32, #tpu.memory_space<vmem>>, vector<8x256xf32>
    tpu.vector_store %arg5[%c0_17, %c0_18], %40 {strides = array<i32>} : memref<8x256xf32, #tpu.memory_space<vmem>>, vector<8x256xf32>,
    return
  }
  func.func @transform_0(%arg0: i32) -> (i32, i32, i32) {
    %c0_i32 = arith.constant 0 : i32
    %c0_i32_0 = arith.constant 0 : i32
    %c0_i32_1 = arith.constant 0 : i32
    return %c0_i32, %arg0, %c0_i32_0 : i32, i32, i32
  }
  func.func @transform_1(%arg0: i32) -> (i32, i32, i32) {
    %c0_i32 = arith.constant 0 : i32
    %c0_i32_0 = arith.constant 0 : i32
    %c0_i32_1 = arith.constant 0 : i32
    return %c0_i32, %arg0, %c0_i32_0 : i32, i32, i32
  }
  func.func @transform_2(%arg0: i32) -> (i32, i32, i32) {
    %c0_i32 = arith.constant 0 : i32
    %c0_i32_0 = arith.constant 0 : i32
    %c0_i32_1 = arith.constant 0 : i32
    %c0_i32_2 = arith.constant 0 : i32
    return %c0_i32, %c0_i32_0, %c0_i32_1 : i32, i32, i32
  }
  func.func @transform_3(%arg0: i32) -> (i32, i32, i32) {
    %c0_i32 = arith.constant 0 : i32
    %c0_i32_0 = arith.constant 0 : i32
    %c0_i32_1 = arith.constant 0 : i32
    %c0_i32_2 = arith.constant 0 : i32
    return %c0_i32, %c0_i32_0, %c0_i32_1 : i32, i32, i32
  }
  func.func @transform_4(%arg0: i32) -> (i32, i32) {
    %c0_i32 = arith.constant 0 : i32
    %c0_i32_0 = arith.constant 0 : i32
    return %c0_i32, %arg0 : i32, i32
  }
}

</mosaic_0001>

<llo_original>
// kernel: tpu_custom_call.1
$region0: #{tpu_custom_call.1}
  #allocation0 [shape = 'u32[]', space=smem, size = 0x4, offset = 0x4, fixed_abs, tag = 'smem constant byte address 0x4 - core index']
  #allocation1 [shape = 'u32[144,128]{1,0:T(1,128)}', space=vmem, size = 0x12000, scoped, tag = 'internal scratch']
  %s0 = inlined_call_operand.hbm [shape: f32[8,16,32], index: 0, kind: input, shape index: {}]
  %s1 = inlined_call_operand.hbm [shape: f32[8,16,32], index: 1, kind: input, shape index: {}]
  %s2 = inlined_call_operand.hbm [shape: f32[8,32,32], index: 2, kind: input, shape index: {}]
  %s3 = inlined_call_operand.hbm [shape: f32[8,32,64], index: 3, kind: input, shape index: {}]
  %s4 = inlined_call_operand.hbm [shape: f32[8,512], index: 4, kind: output, shape index: {}]
  %s5 = sld [smem:[#allocation0]]
  $region65: #{tpu_custom_call.1} parent=0
    _
  %s7 = ssub.s32 1, %s5
  %s8 = scalar_select 0, %s7, %s5
  $region1: #{tpu_custom_call.1} parent=0
    #allocation2 [shape = 'u8[65536]{0}', space=vmem, size = 0x10000, scoped, tag = 'input window, operand 0']
    #allocation3 [shape = 's32[2]{0}', space=sflag, size = 0x8, scoped, tag = 'scoped memory for tpu_custom_call.1']
    #allocation4 [shape = 's32[2]{0}', space=sflag, size = 0x8, scoped, tag = 'scoped memory for tpu_custom_call.1']
    #allocation5 [shape = 'u8[65536]{0}', space=vmem, size = 0x10000, scoped, tag = 'input window, operand 1']
    #allocation6 [shape = 's32[2]{0}', space=sflag, size = 0x8, scoped, tag = 'scoped memory for tpu_custom_call.1']
    #allocation7 [shape = 'u8[131072]{0}', space=vmem, size = 0x20000, scoped, tag = 'input window, operand 2, single buffered']
    #allocation8 [shape = 'u8[131072]{0}', space=vmem, size = 0x20000, scoped, tag = 'input window, operand 3, single buffered']
    #allocation9 [shape = 's32[1]{0}', space=sflag, size = 0x4, scoped, tag = 'scoped memory for tpu_custom_call.1']
    #allocation10 [shape = 'u8[16384]{0}', space=vmem, size = 0x4000, scoped, tag = 'output window, operand 0']
    %9 = vsyncpa [#allocation3], 0
    %s10 = scalar_lea.sflag [#allocation3], 1
    %11 = vsyncpa %s10, 0
    %12 = vsyncpa [#allocation6], 0
    %s13 = scalar_lea.sflag [#allocation6], 1
    %14 = vsyncpa %s13, 0
    %15 = vsyncpa [#allocation9], 0
    %16 = vsyncpa [#allocation4], 0
    %s17 = scalar_lea.sflag [#allocation4], 1
    %18 = vsyncpa %s17, 0
    loop: start=0, step=1, limit=4
    $region2: #{tpu_custom_call.1} parent=1 // loop_pre_header
      _
    $region3: #{tpu_custom_call.1} parent=1 // loop_header
      %s20 = sphi 0, %s24
      %p21 = scmp.ge.s32.totalorder %s20, 4
      %s30 = sphi 0, %s32
      %s33 = sphi 0, %s30
      %s34 = sphi 0, %s33
      %s50 = sphi 0, %s34
      %s56 = sphi 0, %s58
      %s59 = sphi 0, %s56
      %s60 = sphi 0, %s59
      %s76 = sphi 0, %s60
      %s80 = sphi 0, %s80
      %s82 = sphi 0, %s80
      %s83 = sphi 0, %s82
      %s97 = sphi 0, %s83
      %s101 = sphi 0, %s101
      %s103 = sphi 0, %s101
      %s104 = sphi 0, %s103
      %s118 = sphi 0, %s104
      %s124 = sphi 0, %s126
      %s127 = sphi 0, %s124
      %s128 = sphi 0, %s127
      %s144 = sphi 0, %s128
    $region4: #{tpu_custom_call.1} parent=1 // loop_header_branch
      %23 = sbr.rel (%p21) target = $region8
    $region5: #{tpu_custom_call.1} parent=1 // loop_body
      %s25 = ssub.s32 %s20, 1
      %s26 = ssub.s32 %s20, 2
      %s27 = sadd.s32 %s20, 1
      %s28 = ssub.s32 %s20, %s27
      %p29 = scmp.eq.s32.totalorder %s28, 0
      %s31 = sadd.s32 %s30, 1
      %s32 = scalar_select %p29, %s30, %s31
      %p35 = pneg %p29
      %p36 = scmp.eq.s32.totalorder %s20, 1
      %p37 = por %p35, %p36
      %p38 = scmp.ne.s32.totalorder %s30, %s33
      %p39 = scmp.eq.s32.totalorder %s20, 0
      %p40 = por %p38, %p39
      %p41 = scmp.ne.s32.totalorder %s30, %s33
      %p42 = scmp.eq.s32.totalorder %s25, 1
      %p43 = por %p41, %p42
      %p44 = scmp.ne.s32.totalorder %s33, %s34
      %p45 = scmp.eq.s32.totalorder %s25, 0
      %p46 = por %p44, %p45
      %p47 = scmp.ne.s32.totalorder %s33, %s34
      %p48 = scmp.eq.s32.totalorder %s26, 1
      %p49 = por %p47, %p48
      %p51 = scmp.ne.s32.totalorder %s34, %s50
      %p52 = scmp.eq.s32.totalorder %s26, 0
      %p53 = por %p51, %p52
      %s54 = ssub.s32 %s20, %s27
      %p55 = scmp.eq.s32.totalorder %s54, 0
      %s57 = sadd.s32 %s56, 1
      %s58 = scalar_select %p55, %s56, %s57
      %p61 = pneg %p55
      %p62 = scmp.eq.s32.totalorder %s20, 1
      %p63 = por %p61, %p62
      %p64 = scmp.ne.s32.totalorder %s56, %s59
      %p65 = scmp.eq.s32.totalorder %s20, 0
      %p66 = por %p64, %p65
      %p67 = scmp.ne.s32.totalorder %s56, %s59
      %p68 = scmp.eq.s32.totalorder %s25, 1
      %p69 = por %p67, %p68
      %p70 = scmp.ne.s32.totalorder %s59, %s60
      %p71 = scmp.eq.s32.totalorder %s25, 0
      %p72 = por %p70, %p71
      %p73 = scmp.ne.s32.totalorder %s59, %s60
      %p74 = scmp.eq.s32.totalorder %s26, 1
      %p75 = por %p73, %p74
      %p77 = scmp.ne.s32.totalorder %s60, %s76
      %p78 = scmp.eq.s32.totalorder %s26, 0
      %p79 = por %p77, %p78
      %s81 = sadd.s32 %s80, 1
      %p84 = scmp.eq.s32.totalorder %s20, 1
      %p85 = scmp.ne.s32.totalorder %s80, %s82
      %p86 = scmp.eq.s32.totalorder %s20, 0
      %p87 = por %p85, %p86
      %p88 = scmp.ne.s32.totalorder %s80, %s82
      %p89 = scmp.eq.s32.totalorder %s25, 1
      %p90 = por %p88, %p89
      %p91 = scmp.ne.s32.totalorder %s82, %s83
      %p92 = scmp.eq.s32.totalorder %s25, 0
      %p93 = por %p91, %p92
      %p94 = scmp.ne.s32.totalorder %s82, %s83
      %p95 = scmp.eq.s32.totalorder %s26, 1
      %p96 = por %p94, %p95
      %p98 = scmp.ne.s32.totalorder %s83, %s97
      %p99 = scmp.eq.s32.totalorder %s26, 0
      %p100 = por %p98, %p99
      %s102 = sadd.s32 %s101, 1
      %p105 = scmp.eq.s32.totalorder %s20, 1
      %p106 = scmp.ne.s32.totalorder %s101, %s103
      %p107 = scmp.eq.s32.totalorder %s20, 0
      %p108 = por %p106, %p107
      %p109 = scmp.ne.s32.totalorder %s101, %s103
      %p110 = scmp.eq.s32.totalorder %s25, 1
      %p111 = por %p109, %p110
      %p112 = scmp.ne.s32.totalorder %s103, %s104
      %p113 = scmp.eq.s32.totalorder %s25, 0
      %p114 = por %p112, %p113
      %p115 = scmp.ne.s32.totalorder %s103, %s104
      %p116 = scmp.eq.s32.totalorder %s26, 1
      %p117 = por %p115, %p116
      %p119 = scmp.ne.s32.totalorder %s104, %s118
      %p120 = scmp.eq.s32.totalorder %s26, 0
      %p121 = por %p119, %p120
      %s122 = ssub.s32 %s20, %s27
      %p123 = scmp.eq.s32.totalorder %s122, 0
      %s125 = sadd.s32 %s124, 1
      %s126 = scalar_select %p123, %s124, %s125
      %p129 = pneg %p123
      %p130 = scmp.eq.s32.totalorder %s20, 1
      %p131 = por %p129, %p130
      %p132 = scmp.ne.s32.totalorder %s124, %s127
      %p133 = scmp.eq.s32.totalorder %s20, 0
      %p134 = por %p132, %p133
      %p135 = scmp.ne.s32.totalorder %s124, %s127
      %p136 = scmp.eq.s32.totalorder %s25, 1
      %p137 = por %p135, %p136
      %p138 = scmp.ne.s32.totalorder %s127, %s128
      %p139 = scmp.eq.s32.totalorder %s25, 0
      %p140 = por %p138, %p139
      %p141 = scmp.ne.s32.totalorder %s127, %s128
      %p142 = scmp.eq.s32.totalorder %s26, 1
      %p143 = por %p141, %p142
      %p145 = scmp.ne.s32.totalorder %s128, %s144
      %p146 = scmp.eq.s32.totalorder %s26, 0
      %p147 = por %p145, %p146
      %p148 = scmp.le.s32.totalorder 1, %s20
      %p149 = scmp.lt.s32.totalorder %s20, 3
      %p150 = pnand %p148, %p149
      %p151 = pneg %p150
      // Predicated region
      $region9: #{tpu_custom_call.1} parent=5 // pred_check
        _
      $region10: #{tpu_custom_call.1} parent=5 // pred_check_branch
        %153 = sbr.rel (%p150) target = $region12
      $region11: #{tpu_custom_call.1} parent=5 // pred_region
        %s154 = ssub.s32 %s20, 1
        // Predicated region
        $region13: #{tpu_custom_call.1} parent=11 // pred_check
          %p155 = pneg %p93
        $region14: #{tpu_custom_call.1} parent=11 // pred_check_branch
          %157 = sbr.rel (%p155) target = $region16
        $region15: #{tpu_custom_call.1} parent=11 // pred_region
          %s159 = ssub.s32 4096, 4096
          %160 = vsyncadd [#allocation6], %s159
          %s161 = sshll.u32 [#allocation7], 4
          %s162 = int_to_ptr.vmem [resolvable:$true] %s161
          %167 = dma.hbm_to_vmem [thread:$0]  %s2, 4096, %s162, [#allocation6], 128, 128, 8
        $region16: #{tpu_custom_call.1} parent=11 // pred_fallthru
          _
        // Predicated region
        $region17: #{tpu_custom_call.1} parent=11 // pred_check
          %p168 = pneg %p114
        $region18: #{tpu_custom_call.1} parent=11 // pred_check_branch
          %170 = sbr.rel (%p168) target = $region20
        $region19: #{tpu_custom_call.1} parent=11 // pred_region
          %s172 = ssub.s32 4096, 4096
          %173 = vsyncadd [#allocation9], %s172
          %s174 = sshll.u32 [#allocation8], 4
          %s175 = int_to_ptr.vmem [resolvable:$true] %s174
          %180 = dma.hbm_to_vmem [thread:$0]  %s3, 4096, %s175, [#allocation9], 128, 128, 8
        $region20: #{tpu_custom_call.1} parent=11 // pred_fallthru
          _
      $region12: #{tpu_custom_call.1} parent=5 // pred_fallthru
        _
      %p181 = scmp.lt.s32.totalorder %s20, 2
      // Predicated region
      $region21: #{tpu_custom_call.1} parent=5 // pred_check
        %p182 = pneg %p181
      $region22: #{tpu_custom_call.1} parent=5 // pred_check_branch
        %184 = sbr.rel (%p182) target = $region24
      $region23: #{tpu_custom_call.1} parent=5 // pred_region
        // Predicated region
        $region25: #{tpu_custom_call.1} parent=23 // pred_check
          %p185 = pneg %p40
        $region26: #{tpu_custom_call.1} parent=23 // pred_check_branch
          %187 = sbr.rel (%p185) target = $region28
        $region27: #{tpu_custom_call.1} parent=23 // pred_region
          %s188 = sand.u32 %s30, 1
          %s189 = scalar_lea.sflag [#allocation3], %s188
          %s190 = sand.u32 %s30, 1
          %s191 = smul.addr %s190, 64
          %s192 = scalar_lea.vmem [#allocation2], %s191
          %s194 = ssub.s32 1024, 1024
          %195 = vsyncadd %s189, %s194
          %s196 = smul.addr %s20, 128
          %s197 = scalar_lea.hbm %s0, %s196
          %s198 = sshll.u32 %s192, 4
          %s199 = int_to_ptr.vmem [resolvable:$true] %s198
          %204 = dma.hbm_to_vmem [thread:$0]  %s197, 1024, %s199, %s189, 256, 128, 8
        $region28: #{tpu_custom_call.1} parent=23 // pred_fallthru
          _
        // Predicated region
        $region29: #{tpu_custom_call.1} parent=23 // pred_check
          %p205 = pneg %p66
        $region30: #{tpu_custom_call.1} parent=23 // pred_check_branch
          %207 = sbr.rel (%p205) target = $region32
        $region31: #{tpu_custom_call.1} parent=23 // pred_region
          %s208 = sand.u32 %s20, 1
          %s209 = scalar_lea.sflag [#allocation6], %s208
          %s210 = sand.u32 %s56, 1
          %s211 = smul.addr %s210, 64
          %s212 = scalar_lea.vmem [#allocation5], %s211
          %s214 = ssub.s32 1024, 1024
          %215 = vsyncadd %s209, %s214
          %s216 = smul.addr %s20, 128
          %s217 = scalar_lea.hbm %s1, %s216
          %s218 = sshll.u32 %s212, 4
          %s219 = int_to_ptr.vmem [resolvable:$true] %s218
          %224 = dma.hbm_to_vmem [thread:$0]  %s217, 1024, %s219, %s209, 256, 128, 8
        $region32: #{tpu_custom_call.1} parent=23 // pred_fallthru
          _
      $region24: #{tpu_custom_call.1} parent=5 // pred_fallthru
        _
      %p225 = scmp.le.s32.totalorder 1, %s20
      %p226 = scmp.lt.s32.totalorder %s20, 3
      %p227 = pnand %p225, %p226
      %p228 = pneg %p227
      // Predicated region
      $region33: #{tpu_custom_call.1} parent=5 // pred_check
        _
      $region34: #{tpu_custom_call.1} parent=5 // pred_check_branch
        %230 = sbr.rel (%p227) target = $region36
      $region35: #{tpu_custom_call.1} parent=5 // pred_region
        %s231 = ssub.s32 %s20, 1
        %s232 = sand.u32 %s33, 1
        %s233 = scalar_lea.sflag [#allocation3], %s232
        %s234 = sand.u32 %s33, 1
        %s235 = smul.addr %s234, 64
        %s236 = scalar_lea.vmem [#allocation2], %s235
        // Predicated region
        $region37: #{tpu_custom_call.1} parent=35 // pred_check
          %p237 = pneg %p46
        $region38: #{tpu_custom_call.1} parent=35 // pred_check_branch
          %239 = sbr.rel (%p237) target = $region40
        $region39: #{tpu_custom_call.1} parent=35 // pred_region
          %240 = dma.done %s233, 1024
        $region40: #{tpu_custom_call.1} parent=35 // pred_fallthru
          _
        %s241 = sand.u32 %s25, 1
        %s242 = scalar_lea.sflag [#allocation6], %s241
        %s243 = sand.u32 %s59, 1
        %s244 = smul.addr %s243, 64
        %s245 = scalar_lea.vmem [#allocation5], %s244
        // Predicated region
        $region41: #{tpu_custom_call.1} parent=35 // pred_check
          %p246 = pneg %p72
        $region42: #{tpu_custom_call.1} parent=35 // pred_check_branch
          %248 = sbr.rel (%p246) target = $region44
        $region43: #{tpu_custom_call.1} parent=35 // pred_region
          %249 = dma.done %s242, 1024
        $region44: #{tpu_custom_call.1} parent=35 // pred_fallthru
          _
        // Predicated region
        $region45: #{tpu_custom_call.1} parent=35 // pred_check
          %p250 = pneg %p93
        $region46: #{tpu_custom_call.1} parent=35 // pred_check_branch
          %252 = sbr.rel (%p250) target = $region48
        $region47: #{tpu_custom_call.1} parent=35 // pred_region
          %253 = dma.done [#allocation6], 4096
        $region48: #{tpu_custom_call.1} parent=35 // pred_fallthru
          _
        // Predicated region
        $region49: #{tpu_custom_call.1} parent=35 // pred_check
          %p254 = pneg %p114
        $region50: #{tpu_custom_call.1} parent=35 // pred_check_branch
          %256 = sbr.rel (%p254) target = $region52
        $region51: #{tpu_custom_call.1} parent=35 // pred_region
          %257 = dma.done [#allocation9], 4096
        $region52: #{tpu_custom_call.1} parent=35 // pred_fallthru
          _
        %s258 = sand.u32 %s33, 1
        %s259 = scalar_lea.sflag [#allocation3], %s258
        %s260 = sand.u32 %s33, 1
        %s261 = smul.addr %s260, 64
        %s262 = scalar_lea.vmem [#allocation2], %s261
        %p263 = pneg %p46
        %p264 = pneg %p43
        %s265 = sand.u32 %s25, 1
        %s266 = scalar_lea.sflag [#allocation6], %s265
        %s267 = sand.u32 %s59, 1
        %s268 = smul.addr %s267, 64
        %s269 = scalar_lea.vmem [#allocation5], %s268
        %p270 = pneg %p72
        %p271 = pneg %p69
        %p272 = pneg %p93
        %p273 = pneg %p90
        %p274 = pneg %p114
        %p275 = pneg %p111
        %p276 = pneg %p140
        %p277 = pneg %p137
        %s278 = sand.u32 %s127, 1
        %s279 = scalar_lea.sflag [#allocation4], %s278
        %s280 = sand.u32 %s127, 1
        %s281 = smul.addr %s280, 16
        %s282 = scalar_lea.vmem [#allocation10], %s281
        %s283 = smul.u32 2, %s25
        %v284 = vld [vmem:[%s236] sm:$0xff]
        %v285 = vld [vmem:[%s236 + $0x8] sm:$0xff]
        %v286 = vld [vmem:[%s236 + $0x10] sm:$0xff]
        %v287 = vld [vmem:[%s236 + $0x18] sm:$0xff]
        %v288 = vld [vmem:[%s236 + $0x20] sm:$0xff]
        %v289 = vld [vmem:[%s236 + $0x28] sm:$0xff]
        %v290 = vld [vmem:[%s236 + $0x30] sm:$0xff]
        %v291 = vld [vmem:[%s236 + $0x38] sm:$0xff]
        %v292 = vld [vmem:[#allocation7] sm:$0xff]
        %v293 = vld [vmem:[#allocation7 + $0x8] sm:$0xff]
        %v294 = vld [vmem:[#allocation7 + $0x10] sm:$0xff]
        %v295 = vld [vmem:[#allocation7 + $0x18] sm:$0xff]
        %v296 = vld [vmem:[#allocation7 + $0x20] sm:$0xff]
        %v297 = vld [vmem:[#allocation7 + $0x28] sm:$0xff]
        %v298 = vld [vmem:[#allocation7 + $0x30] sm:$0xff]
        %v299 = vld [vmem:[#allocation7 + $0x38] sm:$0xff]
        %v300 = vld [vmem:[#allocation7 + $0x40] sm:$0xff]
        %v301 = vld [vmem:[#allocation7 + $0x48] sm:$0xff]
        %v302 = vld [vmem:[#allocation7 + $0x50] sm:$0xff]
        %v303 = vld [vmem:[#allocation7 + $0x58] sm:$0xff]
        %v304 = vld [vmem:[#allocation7 + $0x60] sm:$0xff]
        %v305 = vld [vmem:[#allocation7 + $0x68] sm:$0xff]
        %v306 = vld [vmem:[#allocation7 + $0x70] sm:$0xff]
        %v307 = vld [vmem:[#allocation7 + $0x78] sm:$0xff]
        %v308 = vld [vmem:[#allocation7 + $0x80] sm:$0xff]
        %v309 = vld [vmem:[#allocation7 + $0x88] sm:$0xff]
        %v310 = vld [vmem:[#allocation7 + $0x90] sm:$0xff]
        %v311 = vld [vmem:[#allocation7 + $0x98] sm:$0xff]
        %v312 = vld [vmem:[#allocation7 + $0xa0] sm:$0xff]
        %v313 = vld [vmem:[#allocation7 + $0xa8] sm:$0xff]
        %v314 = vld [vmem:[#allocation7 + $0xb0] sm:$0xff]
        %v315 = vld [vmem:[#allocation7 + $0xb8] sm:$0xff]
        %v316 = vld [vmem:[#allocation7 + $0xc0] sm:$0xff]
        %v317 = vld [vmem:[#allocation7 + $0xc8] sm:$0xff]
        %v318 = vld [vmem:[#allocation7 + $0xd0] sm:$0xff]
        %v319 = vld [vmem:[#allocation7 + $0xd8] sm:$0xff]
        %v320 = vld [vmem:[#allocation7 + $0xe0] sm:$0xff]
        %v321 = vld [vmem:[#allocation7 + $0xe8] sm:$0xff]
        %v322 = vld [vmem:[#allocation7 + $0xf0] sm:$0xff]
        %v323 = vld [vmem:[#allocation7 + $0xf8] sm:$0xff]
        %vm324 = vcmask 261120
        %v326 = vsel %vm324, %v284, 0
        %328 = vmatprep.subr.mxu0 0.0
        %329 = vmatpush1.msra.mxu0 0.0
        %330 = vmatprep.subr.mxu0 0.0
        %331 = vmatpush1.msra.mxu0 0.0
        %332 = vmatprep.subr.mxu0 0.0
        %333 = vmatpush1.msra.mxu0 0.0
        %334 = vmatprep.subr.mxu0 0.0
        %335 = vmatpush1.msra.mxu0 0.0
        %336 = vmatprep.subr.mxu0 0.0
        %337 = vmatpush1.msra.mxu0 0.0
        %338 = vmatprep.subr.mxu0 0.0
        %339 = vmatpush1.msra.mxu0 0.0
        %340 = vmatprep.subr.mxu0 0.0
        %341 = vmatpush1.msra.mxu0 0.0
        %342 = vmatprep.subr.mxu0 0.0
        %343 = vmatpush1.msra.mxu0 0.0
        %344 = vmatprep.subr.mxu0 0.0
        %345 = vmatpush1.msra.mxu0 0.0
        %346 = vmatprep.subr.mxu0 0.0
        %347 = vmatpush1.msra.mxu0 0.0
        %348 = vmatprep.subr.mxu0 0.0
        %349 = vmatpush1.msra.mxu0 0.0
        %350 = vmatprep.subr.mxu0 0.0
        %351 = vmatpush1.msra.mxu0 0.0
        %352 = vmatprep.subr.mxu0 0.0
        %353 = vmatpush1.msra.mxu0 %v295
        %354 = vmatprep.subr.mxu0 0.0
        %355 = vmatpush1.msra.mxu0 %v294
        %356 = vmatprep.subr.mxu0 0.0
        %357 = vmatpush1.msra.mxu0 %v293
        %358 = vmatprep.subr.mxu0 0.0
        %359 = vmatpush1.msra.mxu0 %v292
        %360 = vmatprep.subr.mxu0 0.0
        %361 = vmatpush2.msra.mxu0 0.0
        %362 = vmatprep.subr.mxu0 0.0
        %363 = vmatpush2.msra.mxu0 0.0
        %364 = vmatprep.subr.mxu0 0.0
        %365 = vmatpush2.msra.mxu0 0.0
        %366 = vmatprep.subr.mxu0 0.0
        %367 = vmatpush2.msra.mxu0 0.0
        %368 = vmatprep.subr.mxu0 0.0
        %369 = vmatpush2.msra.mxu0 0.0
        %370 = vmatprep.subr.mxu0 0.0
        %371 = vmatpush2.msra.mxu0 0.0
        %372 = vmatprep.subr.mxu0 0.0
        %373 = vmatpush2.msra.mxu0 0.0
        %374 = vmatprep.subr.mxu0 0.0
        %375 = vmatpush2.msra.mxu0 0.0
        %376 = vmatprep.subr.mxu0 0.0
        %377 = vmatpush2.msra.mxu0 0.0
        %378 = vmatprep.subr.mxu0 0.0
        %379 = vmatpush2.msra.mxu0 0.0
        %380 = vmatprep.subr.mxu0 0.0
        %381 = vmatpush2.msra.mxu0 0.0
        %382 = vmatprep.subr.mxu0 0.0
        %383 = vmatpush2.msra.mxu0 0.0
        %384 = vmatprep.subr.mxu0 0.0
        %385 = vmatpush2.msra.mxu0 0.0
        %386 = vmatprep.subr.mxu0 0.0
        %387 = vmatpush2.msra.mxu0 0.0
        %388 = vmatprep.subr.mxu0 0.0
        %389 = vmatpush2.msra.mxu0 0.0
        %390 = vmatprep.subr.mxu0 0.0
        %391 = vmatpush2.msra.mxu0 0.0
        %392 = vmatprep.mubr.f32.mxu0 0.0
        %393 = vmatmul.mubr.f32.gmra.mxu0 %v326
        %v394 = vpop.f32.mrf.mxu0
        %v395 = vadd.f32 0.0, %v394
        %v396 = vpop.f32.mrf.mxu0
        %397 = vdwg.mxu0
        %v399 = vsel %vm324, %v285, 0
        %401 = vmatprep.subr.mxu0 0.0
        %402 = vmatpush1.msra.mxu0 0.0
        %403 = vmatprep.subr.mxu0 0.0
        %404 = vmatpush1.msra.mxu0 0.0
        %405 = vmatprep.subr.mxu0 0.0
        %406 = vmatpush1.msra.mxu0 0.0
        %407 = vmatprep.subr.mxu0 0.0
        %408 = vmatpush1.msra.mxu0 0.0
        %409 = vmatprep.subr.mxu0 0.0
        %410 = vmatpush1.msra.mxu0 0.0
        %411 = vmatprep.subr.mxu0 0.0
        %412 = vmatpush1.msra.mxu0 0.0
        %413 = vmatprep.subr.mxu0 0.0
        %414 = vmatpush1.msra.mxu0 0.0
        %415 = vmatprep.subr.mxu0 0.0
        %416 = vmatpush1.msra.mxu0 0.0
        %417 = vmatprep.subr.mxu0 0.0
        %418 = vmatpush1.msra.mxu0 0.0
        %419 = vmatprep.subr.mxu0 0.0
        %420 = vmatpush1.msra.mxu0 0.0
        %421 = vmatprep.subr.mxu0 0.0
        %422 = vmatpush1.msra.mxu0 0.0
        %423 = vmatprep.subr.mxu0 0.0
        %424 = vmatpush1.msra.mxu0 0.0
        %425 = vmatprep.subr.mxu0 0.0
        %426 = vmatpush1.msra.mxu0 %v299
        %427 = vmatprep.subr.mxu0 0.0
        %428 = vmatpush1.msra.mxu0 %v298
        %429 = vmatprep.subr.mxu0 0.0
        %430 = vmatpush1.msra.mxu0 %v297
        %431 = vmatprep.subr.mxu0 0.0
        %432 = vmatpush1.msra.mxu0 %v296
        %433 = vmatprep.subr.mxu0 0.0
        %434 = vmatpush2.msra.mxu0 0.0
        %435 = vmatprep.subr.mxu0 0.0
        %436 = vmatpush2.msra.mxu0 0.0
        %437 = vmatprep.subr.mxu0 0.0
        %438 = vmatpush2.msra.mxu0 0.0
        %439 = vmatprep.subr.mxu0 0.0
        %440 = vmatpush2.msra.mxu0 0.0
        %441 = vmatprep.subr.mxu0 0.0
        %442 = vmatpush2.msra.mxu0 0.0
        %443 = vmatprep.subr.mxu0 0.0
        %444 = vmatpush2.msra.mxu0 0.0
        %445 = vmatprep.subr.mxu0 0.0
        %446 = vmatpush2.msra.mxu0 0.0
        %447 = vmatprep.subr.mxu0 0.0
        %448 = vmatpush2.msra.mxu0 0.0
        %449 = vmatprep.subr.mxu0 0.0
        %450 = vmatpush2.msra.mxu0 0.0
        %451 = vmatprep.subr.mxu0 0.0
        %452 = vmatpush2.msra.mxu0 0.0
        %453 = vmatprep.subr.mxu0 0.0
        %454 = vmatpush2.msra.mxu0 0.0
        %455 = vmatprep.subr.mxu0 0.0
        %456 = vmatpush2.msra.mxu0 0.0
        %457 = vmatprep.subr.mxu0 0.0
        %458 = vmatpush2.msra.mxu0 0.0
        %459 = vmatprep.subr.mxu0 0.0
        %460 = vmatpush2.msra.mxu0 0.0
        %461 = vmatprep.subr.mxu0 0.0
        %462 = vmatpush2.msra.mxu0 0.0
        %463 = vmatprep.subr.mxu0 0.0
        %464 = vmatpush2.msra.mxu0 0.0
        %465 = vmatprep.mubr.f32.mxu0 0.0
        %466 = vmatmul.mubr.f32.gmra.mxu0 %v399
        %v467 = vpop.f32.mrf.mxu0
        %v468 = vadd.f32 0.0, %v467
        %v469 = vpop.f32.mrf.mxu0
        %470 = vdwg.mxu0
        %v472 = vsel %vm324, %v286, 0
        %474 = vmatprep.subr.mxu0 0.0
        %475 = vmatpush1.msra.mxu0 0.0
        %476 = vmatprep.subr.mxu0 0.0
        %477 = vmatpush1.msra.mxu0 0.0
        %478 = vmatprep.subr.mxu0 0.0
        %479 = vmatpush1.msra.mxu0 0.0
        %480 = vmatprep.subr.mxu0 0.0
        %481 = vmatpush1.msra.mxu0 0.0
        %482 = vmatprep.subr.mxu0 0.0
        %483 = vmatpush1.msra.mxu0 0.0
        %484 = vmatprep.subr.mxu0 0.0
        %485 = vmatpush1.msra.mxu0 0.0
        %486 = vmatprep.subr.mxu0 0.0
        %487 = vmatpush1.msra.mxu0 0.0
        %488 = vmatprep.subr.mxu0 0.0
        %489 = vmatpush1.msra.mxu0 0.0
        %490 = vmatprep.subr.mxu0 0.0
        %491 = vmatpush1.msra.mxu0 0.0
        %492 = vmatprep.subr.mxu0 0.0
        %493 = vmatpush1.msra.mxu0 0.0
        %494 = vmatprep.subr.mxu0 0.0
        %495 = vmatpush1.msra.mxu0 0.0
        %496 = vmatprep.subr.mxu0 0.0
        %497 = vmatpush1.msra.mxu0 0.0
        %498 = vmatprep.subr.mxu0 0.0
        %499 = vmatpush1.msra.mxu0 %v303
        %500 = vmatprep.subr.mxu0 0.0
        %501 = vmatpush1.msra.mxu0 %v302
        %502 = vmatprep.subr.mxu0 0.0
        %503 = vmatpush1.msra.mxu0 %v301
        %504 = vmatprep.subr.mxu0 0.0
        %505 = vmatpush1.msra.mxu0 %v300
        %506 = vmatprep.subr.mxu0 0.0
        %507 = vmatpush2.msra.mxu0 0.0
        %508 = vmatprep.subr.mxu0 0.0
        %509 = vmatpush2.msra.mxu0 0.0
        %510 = vmatprep.subr.mxu0 0.0
        %511 = vmatpush2.msra.mxu0 0.0
        %512 = vmatprep.subr.mxu0 0.0
        %513 = vmatpush2.msra.mxu0 0.0
        %514 = vmatprep.subr.mxu0 0.0
        %515 = vmatpush2.msra.mxu0 0.0
        %516 = vmatprep.subr.mxu0 0.0
        %517 = vmatpush2.msra.mxu0 0.0
        %518 = vmatprep.subr.mxu0 0.0
        %519 = vmatpush2.msra.mxu0 0.0
        %520 = vmatprep.subr.mxu0 0.0
        %521 = vmatpush2.msra.mxu0 0.0
        %522 = vmatprep.subr.mxu0 0.0
        %523 = vmatpush2.msra.mxu0 0.0
        %524 = vmatprep.subr.mxu0 0.0
        %525 = vmatpush2.msra.mxu0 0.0
        %526 = vmatprep.subr.mxu0 0.0
        %527 = vmatpush2.msra.mxu0 0.0
        %528 = vmatprep.subr.mxu0 0.0
        %529 = vmatpush2.msra.mxu0 0.0
        %530 = vmatprep.subr.mxu0 0.0
        %531 = vmatpush2.msra.mxu0 0.0
        %532 = vmatprep.subr.mxu0 0.0
        %533 = vmatpush2.msra.mxu0 0.0
        %534 = vmatprep.subr.mxu0 0.0
        %535 = vmatpush2.msra.mxu0 0.0
        %536 = vmatprep.subr.mxu0 0.0
        %537 = vmatpush2.msra.mxu0 0.0
        %538 = vmatprep.mubr.f32.mxu0 0.0
        %539 = vmatmul.mubr.f32.gmra.mxu0 %v472
        %v540 = vpop.f32.mrf.mxu0
        %v541 = vadd.f32 0.0, %v540
        %v542 = vpop.f32.mrf.mxu0
        %543 = vdwg.mxu0
        %v545 = vsel %vm324, %v287, 0
        %547 = vmatprep.subr.mxu0 0.0
        %548 = vmatpush1.msra.mxu0 0.0
        %549 = vmatprep.subr.mxu0 0.0
        %550 = vmatpush1.msra.mxu0 0.0
        %551 = vmatprep.subr.mxu0 0.0
        %552 = vmatpush1.msra.mxu0 0.0
        %553 = vmatprep.subr.mxu0 0.0
        %554 = vmatpush1.msra.mxu0 0.0
        %555 = vmatprep.subr.mxu0 0.0
        %556 = vmatpush1.msra.mxu0 0.0
        %557 = vmatprep.subr.mxu0 0.0
        %558 = vmatpush1.msra.mxu0 0.0
        %559 = vmatprep.subr.mxu0 0.0
        %560 = vmatpush1.msra.mxu0 0.0
        %561 = vmatprep.subr.mxu0 0.0
        %562 = vmatpush1.msra.mxu0 0.0
        %563 = vmatprep.subr.mxu0 0.0
        %564 = vmatpush1.msra.mxu0 0.0
        %565 = vmatprep.subr.mxu0 0.0
        %566 = vmatpush1.msra.mxu0 0.0
        %567 = vmatprep.subr.mxu0 0.0
        %568 = vmatpush1.msra.mxu0 0.0
        %569 = vmatprep.subr.mxu0 0.0
        %570 = vmatpush1.msra.mxu0 0.0
        %571 = vmatprep.subr.mxu0 0.0
        %572 = vmatpush1.msra.mxu0 %v307
        %573 = vmatprep.subr.mxu0 0.0
        %574 = vmatpush1.msra.mxu0 %v306
        %575 = vmatprep.subr.mxu0 0.0
        %576 = vmatpush1.msra.mxu0 %v305
        %577 = vmatprep.subr.mxu0 0.0
        %578 = vmatpush1.msra.mxu0 %v304
        %579 = vmatprep.subr.mxu0 0.0
        %580 = vmatpush2.msra.mxu0 0.0
        %581 = vmatprep.subr.mxu0 0.0
        %582 = vmatpush2.msra.mxu0 0.0
        %583 = vmatprep.subr.mxu0 0.0
        %584 = vmatpush2.msra.mxu0 0.0
        %585 = vmatprep.subr.mxu0 0.0
        %586 = vmatpush2.msra.mxu0 0.0
        %587 = vmatprep.subr.mxu0 0.0
        %588 = vmatpush2.msra.mxu0 0.0
        %589 = vmatprep.subr.mxu0 0.0
        %590 = vmatpush2.msra.mxu0 0.0
        %591 = vmatprep.subr.mxu0 0.0
        %592 = vmatpush2.msra.mxu0 0.0
        %593 = vmatprep.subr.mxu0 0.0
        %594 = vmatpush2.msra.mxu0 0.0
        %595 = vmatprep.subr.mxu0 0.0
        %596 = vmatpush2.msra.mxu0 0.0
        %597 = vmatprep.subr.mxu0 0.0
        %598 = vmatpush2.msra.mxu0 0.0
        %599 = vmatprep.subr.mxu0 0.0
        %600 = vmatpush2.msra.mxu0 0.0
        %601 = vmatprep.subr.mxu0 0.0
        %602 = vmatpush2.msra.mxu0 0.0
        %603 = vmatprep.subr.mxu0 0.0
        %604 = vmatpush2.msra.mxu0 0.0
        %605 = vmatprep.subr.mxu0 0.0
        %606 = vmatpush2.msra.mxu0 0.0
        %607 = vmatprep.subr.mxu0 0.0
        %608 = vmatpush2.msra.mxu0 0.0
        %609 = vmatprep.subr.mxu0 0.0
        %610 = vmatpush2.msra.mxu0 0.0
        %611 = vmatprep.mubr.f32.mxu0 0.0
        %612 = vmatmul.mubr.f32.gmra.mxu0 %v545
        %v613 = vpop.f32.mrf.mxu0
        %v614 = vadd.f32 0.0, %v613
        %v615 = vpop.f32.mrf.mxu0
        %616 = vdwg.mxu0
        %v618 = vsel %vm324, %v288, 0
        %620 = vmatprep.subr.mxu0 0.0
        %621 = vmatpush1.msra.mxu0 0.0
        %622 = vmatprep.subr.mxu0 0.0
        %623 = vmatpush1.msra.mxu0 0.0
        %624 = vmatprep.subr.mxu0 0.0
        %625 = vmatpush1.msra.mxu0 0.0
        %626 = vmatprep.subr.mxu0 0.0
        %627 = vmatpush1.msra.mxu0 0.0
        %628 = vmatprep.subr.mxu0 0.0
        %629 = vmatpush1.msra.mxu0 0.0
        %630 = vmatprep.subr.mxu0 0.0
        %631 = vmatpush1.msra.mxu0 0.0
        %632 = vmatprep.subr.mxu0 0.0
        %633 = vmatpush1.msra.mxu0 0.0
        %634 = vmatprep.subr.mxu0 0.0
        %635 = vmatpush1.msra.mxu0 0.0
        %636 = vmatprep.subr.mxu0 0.0
        %637 = vmatpush1.msra.mxu0 0.0
        %638 = vmatprep.subr.mxu0 0.0
        %639 = vmatpush1.msra.mxu0 0.0
        %640 = vmatprep.subr.mxu0 0.0
        %641 = vmatpush1.msra.mxu0 0.0
        %642 = vmatprep.subr.mxu0 0.0
        %643 = vmatpush1.msra.mxu0 0.0
        %644 = vmatprep.subr.mxu0 0.0
        %645 = vmatpush1.msra.mxu0 %v311
        %646 = vmatprep.subr.mxu0 0.0
        %647 = vmatpush1.msra.mxu0 %v310
        %648 = vmatprep.subr.mxu0 0.0
        %649 = vmatpush1.msra.mxu0 %v309
        %650 = vmatprep.subr.mxu0 0.0
        %651 = vmatpush1.msra.mxu0 %v308
        %652 = vmatprep.subr.mxu0 0.0
        %653 = vmatpush2.msra.mxu0 0.0
        %654 = vmatprep.subr.mxu0 0.0
        %655 = vmatpush2.msra.mxu0 0.0
        %656 = vmatprep.subr.mxu0 0.0
        %657 = vmatpush2.msra.mxu0 0.0
        %658 = vmatprep.subr.mxu0 0.0
        %659 = vmatpush2.msra.mxu0 0.0
        %660 = vmatprep.subr.mxu0 0.0
        %661 = vmatpush2.msra.mxu0 0.0
        %662 = vmatprep.subr.mxu0 0.0
        %663 = vmatpush2.msra.mxu0 0.0
        %664 = vmatprep.subr.mxu0 0.0
        %665 = vmatpush2.msra.mxu0 0.0
        %666 = vmatprep.subr.mxu0 0.0
        %667 = vmatpush2.msra.mxu0 0.0
        %668 = vmatprep.subr.mxu0 0.0
        %669 = vmatpush2.msra.mxu0 0.0
        %670 = vmatprep.subr.mxu0 0.0
        %671 = vmatpush2.msra.mxu0 0.0
        %672 = vmatprep.subr.mxu0 0.0
        %673 = vmatpush2.msra.mxu0 0.0
        %674 = vmatprep.subr.mxu0 0.0
        %675 = vmatpush2.msra.mxu0 0.0
        %676 = vmatprep.subr.mxu0 0.0
        %677 = vmatpush2.msra.mxu0 0.0
        %678 = vmatprep.subr.mxu0 0.0
        %679 = vmatpush2.msra.mxu0 0.0
        %680 = vmatprep.subr.mxu0 0.0
        %681 = vmatpush2.msra.mxu0 0.0
        %682 = vmatprep.subr.mxu0 0.0
        %683 = vmatpush2.msra.mxu0 0.0
        %684 = vmatprep.mubr.f32.mxu0 0.0
        %685 = vmatmul.mubr.f32.gmra.mxu0 %v618
        %v686 = vpop.f32.mrf.mxu0
        %v687 = vadd.f32 0.0, %v686
        %v688 = vpop.f32.mrf.mxu0
        %689 = vdwg.mxu0
        %v691 = vsel %vm324, %v289, 0
        %693 = vmatprep.subr.mxu0 0.0
        %694 = vmatpush1.msra.mxu0 0.0
        %695 = vmatprep.subr.mxu0 0.0
        %696 = vmatpush1.msra.mxu0 0.0
        %697 = vmatprep.subr.mxu0 0.0
        %698 = vmatpush1.msra.mxu0 0.0
        %699 = vmatprep.subr.mxu0 0.0
        %700 = vmatpush1.msra.mxu0 0.0
        %701 = vmatprep.subr.mxu0 0.0
        %702 = vmatpush1.msra.mxu0 0.0
        %703 = vmatprep.subr.mxu0 0.0
        %704 = vmatpush1.msra.mxu0 0.0
        %705 = vmatprep.subr.mxu0 0.0
        %706 = vmatpush1.msra.mxu0 0.0
        %707 = vmatprep.subr.mxu0 0.0
        %708 = vmatpush1.msra.mxu0 0.0
        %709 = vmatprep.subr.mxu0 0.0
        %710 = vmatpush1.msra.mxu0 0.0
        %711 = vmatprep.subr.mxu0 0.0
        %712 = vmatpush1.msra.mxu0 0.0
        %713 = vmatprep.subr.mxu0 0.0
        %714 = vmatpush1.msra.mxu0 0.0
        %715 = vmatprep.subr.mxu0 0.0
        %716 = vmatpush1.msra.mxu0 0.0
        %717 = vmatprep.subr.mxu0 0.0
        %718 = vmatpush1.msra.mxu0 %v315
        %719 = vmatprep.subr.mxu0 0.0
        %720 = vmatpush1.msra.mxu0 %v314
        %721 = vmatprep.subr.mxu0 0.0
        %722 = vmatpush1.msra.mxu0 %v313
        %723 = vmatprep.subr.mxu0 0.0
        %724 = vmatpush1.msra.mxu0 %v312
        %725 = vmatprep.subr.mxu0 0.0
        %726 = vmatpush2.msra.mxu0 0.0
        %727 = vmatprep.subr.mxu0 0.0
        %728 = vmatpush2.msra.mxu0 0.0
        %729 = vmatprep.subr.mxu0 0.0
        %730 = vmatpush2.msra.mxu0 0.0
        %731 = vmatprep.subr.mxu0 0.0
        %732 = vmatpush2.msra.mxu0 0.0
        %733 = vmatprep.subr.mxu0 0.0
        %734 = vmatpush2.msra.mxu0 0.0
        %735 = vmatprep.subr.mxu0 0.0
        %736 = vmatpush2.msra.mxu0 0.0
        %737 = vmatprep.subr.mxu0 0.0
        %738 = vmatpush2.msra.mxu0 0.0
        %739 = vmatprep.subr.mxu0 0.0
        %740 = vmatpush2.msra.mxu0 0.0
        %741 = vmatprep.subr.mxu0 0.0
        %742 = vmatpush2.msra.mxu0 0.0
        %743 = vmatprep.subr.mxu0 0.0
        %744 = vmatpush2.msra.mxu0 0.0
        %745 = vmatprep.subr.mxu0 0.0
        %746 = vmatpush2.msra.mxu0 0.0
        %747 = vmatprep.subr.mxu0 0.0
        %748 = vmatpush2.msra.mxu0 0.0
        %749 = vmatprep.subr.mxu0 0.0
        %750 = vmatpush2.msra.mxu0 0.0
        %751 = vmatprep.subr.mxu0 0.0
        %752 = vmatpush2.msra.mxu0 0.0
        %753 = vmatprep.subr.mxu0 0.0
        %754 = vmatpush2.msra.mxu0 0.0
        %755 = vmatprep.subr.mxu0 0.0
        %756 = vmatpush2.msra.mxu0 0.0
        %757 = vmatprep.mubr.f32.mxu0 0.0
        %758 = vmatmul.mubr.f32.gmra.mxu0 %v691
        %v759 = vpop.f32.mrf.mxu0
        %v760 = vadd.f32 0.0, %v759
        %v761 = vpop.f32.mrf.mxu0
        %762 = vdwg.mxu0
        %v764 = vsel %vm324, %v290, 0
        %766 = vmatprep.subr.mxu0 0.0
        %767 = vmatpush1.msra.mxu0 0.0
        %768 = vmatprep.subr.mxu0 0.0
        %769 = vmatpush1.msra.mxu0 0.0
        %770 = vmatprep.subr.mxu0 0.0
        %771 = vmatpush1.msra.mxu0 0.0
        %772 = vmatprep.subr.mxu0 0.0
        %773 = vmatpush1.msra.mxu0 0.0
        %774 = vmatprep.subr.mxu0 0.0
        %775 = vmatpush1.msra.mxu0 0.0
        %776 = vmatprep.subr.mxu0 0.0
        %777 = vmatpush1.msra.mxu0 0.0
        %778 = vmatprep.subr.mxu0 0.0
        %779 = vmatpush1.msra.mxu0 0.0
        %780 = vmatprep.subr.mxu0 0.0
        %781 = vmatpush1.msra.mxu0 0.0
        %782 = vmatprep.subr.mxu0 0.0
        %783 = vmatpush1.msra.mxu0 0.0
        %784 = vmatprep.subr.mxu0 0.0
        %785 = vmatpush1.msra.mxu0 0.0
        %786 = vmatprep.subr.mxu0 0.0
        %787 = vmatpush1.msra.mxu0 0.0
        %788 = vmatprep.subr.mxu0 0.0
        %789 = vmatpush1.msra.mxu0 0.0
        %790 = vmatprep.subr.mxu0 0.0
        %791 = vmatpush1.msra.mxu0 %v319
        %792 = vmatprep.subr.mxu0 0.0
        %793 = vmatpush1.msra.mxu0 %v318
        %794 = vmatprep.subr.mxu0 0.0
        %795 = vmatpush1.msra.mxu0 %v317
        %796 = vmatprep.subr.mxu0 0.0
        %797 = vmatpush1.msra.mxu0 %v316
        %798 = vmatprep.subr.mxu0 0.0
        %799 = vmatpush2.msra.mxu0 0.0
        %800 = vmatprep.subr.mxu0 0.0
        %801 = vmatpush2.msra.mxu0 0.0
        %802 = vmatprep.subr.mxu0 0.0
        %803 = vmatpush2.msra.mxu0 0.0
        %804 = vmatprep.subr.mxu0 0.0
        %805 = vmatpush2.msra.mxu0 0.0
        %806 = vmatprep.subr.mxu0 0.0
        %807 = vmatpush2.msra.mxu0 0.0
        %808 = vmatprep.subr.mxu0 0.0
        %809 = vmatpush2.msra.mxu0 0.0
        %810 = vmatprep.subr.mxu0 0.0
        %811 = vmatpush2.msra.mxu0 0.0
        %812 = vmatprep.subr.mxu0 0.0
        %813 = vmatpush2.msra.mxu0 0.0
        %814 = vmatprep.subr.mxu0 0.0
        %815 = vmatpush2.msra.mxu0 0.0
        %816 = vmatprep.subr.mxu0 0.0
        %817 = vmatpush2.msra.mxu0 0.0
        %818 = vmatprep.subr.mxu0 0.0
        %819 = vmatpush2.msra.mxu0 0.0
        %820 = vmatprep.subr.mxu0 0.0
        %821 = vmatpush2.msra.mxu0 0.0
        %822 = vmatprep.subr.mxu0 0.0
        %823 = vmatpush2.msra.mxu0 0.0
        %824 = vmatprep.subr.mxu0 0.0
        %825 = vmatpush2.msra.mxu0 0.0
        %826 = vmatprep.subr.mxu0 0.0
        %827 = vmatpush2.msra.mxu0 0.0
        %828 = vmatprep.subr.mxu0 0.0
        %829 = vmatpush2.msra.mxu0 0.0
        %830 = vmatprep.mubr.f32.mxu0 0.0
        %831 = vmatmul.mubr.f32.gmra.mxu0 %v764
        %v832 = vpop.f32.mrf.mxu0
        %v833 = vadd.f32 0.0, %v832
        %v834 = vpop.f32.mrf.mxu0
        %835 = vdwg.mxu0
        %v837 = vsel %vm324, %v291, 0
        %839 = vmatprep.subr.mxu0 0.0
        %840 = vmatpush1.msra.mxu0 0.0
        %841 = vmatprep.subr.mxu0 0.0
        %842 = vmatpush1.msra.mxu0 0.0
        %843 = vmatprep.subr.mxu0 0.0
        %844 = vmatpush1.msra.mxu0 0.0
        %845 = vmatprep.subr.mxu0 0.0
        %846 = vmatpush1.msra.mxu0 0.0
        %847 = vmatprep.subr.mxu0 0.0
        %848 = vmatpush1.msra.mxu0 0.0
        %849 = vmatprep.subr.mxu0 0.0
        %850 = vmatpush1.msra.mxu0 0.0
        %851 = vmatprep.subr.mxu0 0.0
        %852 = vmatpush1.msra.mxu0 0.0
        %853 = vmatprep.subr.mxu0 0.0
        %854 = vmatpush1.msra.mxu0 0.0
        %855 = vmatprep.subr.mxu0 0.0
        %856 = vmatpush1.msra.mxu0 0.0
        %857 = vmatprep.subr.mxu0 0.0
        %858 = vmatpush1.msra.mxu0 0.0
        %859 = vmatprep.subr.mxu0 0.0
        %860 = vmatpush1.msra.mxu0 0.0
        %861 = vmatprep.subr.mxu0 0.0
        %862 = vmatpush1.msra.mxu0 0.0
        %863 = vmatprep.subr.mxu0 0.0
        %864 = vmatpush1.msra.mxu0 %v323
        %865 = vmatprep.subr.mxu0 0.0
        %866 = vmatpush1.msra.mxu0 %v322
        %867 = vmatprep.subr.mxu0 0.0
        %868 = vmatpush1.msra.mxu0 %v321
        %869 = vmatprep.subr.mxu0 0.0
        %870 = vmatpush1.msra.mxu0 %v320
        %871 = vmatprep.subr.mxu0 0.0
        %872 = vmatpush2.msra.mxu0 0.0
        %873 = vmatprep.subr.mxu0 0.0
        %874 = vmatpush2.msra.mxu0 0.0
        %875 = vmatprep.subr.mxu0 0.0
        %876 = vmatpush2.msra.mxu0 0.0
        %877 = vmatprep.subr.mxu0 0.0
        %878 = vmatpush2.msra.mxu0 0.0
        %879 = vmatprep.subr.mxu0 0.0
        %880 = vmatpush2.msra.mxu0 0.0
        %881 = vmatprep.subr.mxu0 0.0
        %882 = vmatpush2.msra.mxu0 0.0
        %883 = vmatprep.subr.mxu0 0.0
        %884 = vmatpush2.msra.mxu0 0.0
        %885 = vmatprep.subr.mxu0 0.0
        %886 = vmatpush2.msra.mxu0 0.0
        %887 = vmatprep.subr.mxu0 0.0
        %888 = vmatpush2.msra.mxu0 0.0
        %889 = vmatprep.subr.mxu0 0.0
        %890 = vmatpush2.msra.mxu0 0.0
        %891 = vmatprep.subr.mxu0 0.0
        %892 = vmatpush2.msra.mxu0 0.0
        %893 = vmatprep.subr.mxu0 0.0
        %894 = vmatpush2.msra.mxu0 0.0
        %895 = vmatprep.subr.mxu0 0.0
        %896 = vmatpush2.msra.mxu0 0.0
        %897 = vmatprep.subr.mxu0 0.0
        %898 = vmatpush2.msra.mxu0 0.0
        %899 = vmatprep.subr.mxu0 0.0
        %900 = vmatpush2.msra.mxu0 0.0
        %901 = vmatprep.subr.mxu0 0.0
        %902 = vmatpush2.msra.mxu0 0.0
        %903 = vmatprep.mubr.f32.mxu0 0.0
        %904 = vmatmul.mubr.f32.gmra.mxu0 %v837
        %v905 = vpop.f32.mrf.mxu0
        %v906 = vadd.f32 0.0, %v905
        %v907 = vpop.f32.mrf.mxu0
        %908 = vdwg.mxu0
        %v909 = vld [vmem:[%s245] sm:$0xff]
        %v910 = vld [vmem:[%s245 + $0x8] sm:$0xff]
        %v911 = vld [vmem:[%s245 + $0x10] sm:$0xff]
        %v912 = vld [vmem:[%s245 + $0x18] sm:$0xff]
        %v913 = vld [vmem:[%s245 + $0x20] sm:$0xff]
        %v914 = vld [vmem:[%s245 + $0x28] sm:$0xff]
        %v915 = vld [vmem:[%s245 + $0x30] sm:$0xff]
        %v916 = vld [vmem:[%s245 + $0x38] sm:$0xff]
        %v917 = vld [vmem:[#allocation8] sm:$0xff]
        %v918 = vld [vmem:[#allocation8 + $0x8] sm:$0xff]
        %v919 = vld [vmem:[#allocation8 + $0x10] sm:$0xff]
        %v920 = vld [vmem:[#allocation8 + $0x18] sm:$0xff]
        %v921 = vld [vmem:[#allocation8 + $0x20] sm:$0xff]
        %v922 = vld [vmem:[#allocation8 + $0x28] sm:$0xff]
        %v923 = vld [vmem:[#allocation8 + $0x30] sm:$0xff]
        %v924 = vld [vmem:[#allocation8 + $0x38] sm:$0xff]
        %v925 = vld [vmem:[#allocation8 + $0x40] sm:$0xff]
        %v926 = vld [vmem:[#allocation8 + $0x48] sm:$0xff]
        %v927 = vld [vmem:[#allocation8 + $0x50] sm:$0xff]
        %v928 = vld [vmem:[#allocation8 + $0x58] sm:$0xff]
        %v929 = vld [vmem:[#allocation8 + $0x60] sm:$0xff]
        %v930 = vld [vmem:[#allocation8 + $0x68] sm:$0xff]
        %v931 = vld [vmem:[#allocation8 + $0x70] sm:$0xff]
        %v932 = vld [vmem:[#allocation8 + $0x78] sm:$0xff]
        %v933 = vld [vmem:[#allocation8 + $0x80] sm:$0xff]
        %v934 = vld [vmem:[#allocation8 + $0x88] sm:$0xff]
        %v935 = vld [vmem:[#allocation8 + $0x90] sm:$0xff]
        %v936 = vld [vmem:[#allocation8 + $0x98] sm:$0xff]
        %v937 = vld [vmem:[#allocation8 + $0xa0] sm:$0xff]
        %v938 = vld [vmem:[#allocation8 + $0xa8] sm:$0xff]
        %v939 = vld [vmem:[#allocation8 + $0xb0] sm:$0xff]
        %v940 = vld [vmem:[#allocation8 + $0xb8] sm:$0xff]
        %v941 = vld [vmem:[#allocation8 + $0xc0] sm:$0xff]
        %v942 = vld [vmem:[#allocation8 + $0xc8] sm:$0xff]
        %v943 = vld [vmem:[#allocation8 + $0xd0] sm:$0xff]
        %v944 = vld [vmem:[#allocation8 + $0xd8] sm:$0xff]
        %v945 = vld [vmem:[#allocation8 + $0xe0] sm:$0xff]
        %v946 = vld [vmem:[#allocation8 + $0xe8] sm:$0xff]
        %v947 = vld [vmem:[#allocation8 + $0xf0] sm:$0xff]
        %v948 = vld [vmem:[#allocation8 + $0xf8] sm:$0xff]
        %v950 = vsel %vm324, %v909, 0
        %952 = vmatprep.subr.mxu0 0.0
        %953 = vmatpush1.msra.mxu0 0.0
        %954 = vmatprep.subr.mxu0 0.0
        %955 = vmatpush1.msra.mxu0 0.0
        %956 = vmatprep.subr.mxu0 0.0
        %957 = vmatpush1.msra.mxu0 0.0
        %958 = vmatprep.subr.mxu0 0.0
        %959 = vmatpush1.msra.mxu0 0.0
        %960 = vmatprep.subr.mxu0 0.0
        %961 = vmatpush1.msra.mxu0 0.0
        %962 = vmatprep.subr.mxu0 0.0
        %963 = vmatpush1.msra.mxu0 0.0
        %964 = vmatprep.subr.mxu0 0.0
        %965 = vmatpush1.msra.mxu0 0.0
        %966 = vmatprep.subr.mxu0 0.0
        %967 = vmatpush1.msra.mxu0 0.0
        %968 = vmatprep.subr.mxu0 0.0
        %969 = vmatpush1.msra.mxu0 0.0
        %970 = vmatprep.subr.mxu0 0.0
        %971 = vmatpush1.msra.mxu0 0.0
        %972 = vmatprep.subr.mxu0 0.0
        %973 = vmatpush1.msra.mxu0 0.0
        %974 = vmatprep.subr.mxu0 0.0
        %975 = vmatpush1.msra.mxu0 0.0
        %976 = vmatprep.subr.mxu0 0.0
        %977 = vmatpush1.msra.mxu0 %v920
        %978 = vmatprep.subr.mxu0 0.0
        %979 = vmatpush1.msra.mxu0 %v919
        %980 = vmatprep.subr.mxu0 0.0
        %981 = vmatpush1.msra.mxu0 %v918
        %982 = vmatprep.subr.mxu0 0.0
        %983 = vmatpush1.msra.mxu0 %v917
        %984 = vmatprep.subr.mxu0 0.0
        %985 = vmatpush2.msra.mxu0 0.0
        %986 = vmatprep.subr.mxu0 0.0
        %987 = vmatpush2.msra.mxu0 0.0
        %988 = vmatprep.subr.mxu0 0.0
        %989 = vmatpush2.msra.mxu0 0.0
        %990 = vmatprep.subr.mxu0 0.0
        %991 = vmatpush2.msra.mxu0 0.0
        %992 = vmatprep.subr.mxu0 0.0
        %993 = vmatpush2.msra.mxu0 0.0
        %994 = vmatprep.subr.mxu0 0.0
        %995 = vmatpush2.msra.mxu0 0.0
        %996 = vmatprep.subr.mxu0 0.0
        %997 = vmatpush2.msra.mxu0 0.0
        %998 = vmatprep.subr.mxu0 0.0
        %999 = vmatpush2.msra.mxu0 0.0
        %1000 = vmatprep.subr.mxu0 0.0
        %1001 = vmatpush2.msra.mxu0 0.0
        %1002 = vmatprep.subr.mxu0 0.0
        %1003 = vmatpush2.msra.mxu0 0.0
        %1004 = vmatprep.subr.mxu0 0.0
        %1005 = vmatpush2.msra.mxu0 0.0
        %1006 = vmatprep.subr.mxu0 0.0
        %1007 = vmatpush2.msra.mxu0 0.0
        %1008 = vmatprep.subr.mxu0 0.0
        %1009 = vmatpush2.msra.mxu0 0.0
        %1010 = vmatprep.subr.mxu0 0.0
        %1011 = vmatpush2.msra.mxu0 0.0
        %1012 = vmatprep.subr.mxu0 0.0
        %1013 = vmatpush2.msra.mxu0 0.0
        %1014 = vmatprep.subr.mxu0 0.0
        %1015 = vmatpush2.msra.mxu0 0.0
        %1016 = vmatprep.mubr.f32.mxu0 0.0
        %1017 = vmatmul.mubr.f32.gmra.mxu0 %v950
        %v1018 = vpop.f32.mrf.mxu0
        %v1019 = vadd.f32 0.0, %v1018
        %v1020 = vpop.f32.mrf.mxu0
        %1021 = vdwg.mxu0
        %v1023 = vsel %vm324, %v910, 0
        %1025 = vmatprep.subr.mxu0 0.0
        %1026 = vmatpush1.msra.mxu0 0.0
        %1027 = vmatprep.subr.mxu0 0.0
        %1028 = vmatpush1.msra.mxu0 0.0
        %1029 = vmatprep.subr.mxu0 0.0
        %1030 = vmatpush1.msra.mxu0 0.0
        %1031 = vmatprep.subr.mxu0 0.0
        %1032 = vmatpush1.msra.mxu0 0.0
        %1033 = vmatprep.subr.mxu0 0.0
        %1034 = vmatpush1.msra.mxu0 0.0
        %1035 = vmatprep.subr.mxu0 0.0
        %1036 = vmatpush1.msra.mxu0 0.0
        %1037 = vmatprep.subr.mxu0 0.0
        %1038 = vmatpush1.msra.mxu0 0.0
        %1039 = vmatprep.subr.mxu0 0.0
        %1040 = vmatpush1.msra.mxu0 0.0
        %1041 = vmatprep.subr.mxu0 0.0
        %1042 = vmatpush1.msra.mxu0 0.0
        %1043 = vmatprep.subr.mxu0 0.0
        %1044 = vmatpush1.msra.mxu0 0.0
        %1045 = vmatprep.subr.mxu0 0.0
        %1046 = vmatpush1.msra.mxu0 0.0
        %1047 = vmatprep.subr.mxu0 0.0
        %1048 = vmatpush1.msra.mxu0 0.0
        %1049 = vmatprep.subr.mxu0 0.0
        %1050 = vmatpush1.msra.mxu0 %v924
        %1051 = vmatprep.subr.mxu0 0.0
        %1052 = vmatpush1.msra.mxu0 %v923
        %1053 = vmatprep.subr.mxu0 0.0
        %1054 = vmatpush1.msra.mxu0 %v922
        %1055 = vmatprep.subr.mxu0 0.0
        %1056 = vmatpush1.msra.mxu0 %v921
        %1057 = vmatprep.subr.mxu0 0.0
        %1058 = vmatpush2.msra.mxu0 0.0
        %1059 = vmatprep.subr.mxu0 0.0
        %1060 = vmatpush2.msra.mxu0 0.0
        %1061 = vmatprep.subr.mxu0 0.0
        %1062 = vmatpush2.msra.mxu0 0.0
        %1063 = vmatprep.subr.mxu0 0.0
        %1064 = vmatpush2.msra.mxu0 0.0
        %1065 = vmatprep.subr.mxu0 0.0
        %1066 = vmatpush2.msra.mxu0 0.0
        %1067 = vmatprep.subr.mxu0 0.0
        %1068 = vmatpush2.msra.mxu0 0.0
        %1069 = vmatprep.subr.mxu0 0.0
        %1070 = vmatpush2.msra.mxu0 0.0
        %1071 = vmatprep.subr.mxu0 0.0
        %1072 = vmatpush2.msra.mxu0 0.0
        %1073 = vmatprep.subr.mxu0 0.0
        %1074 = vmatpush2.msra.mxu0 0.0
        %1075 = vmatprep.subr.mxu0 0.0
        %1076 = vmatpush2.msra.mxu0 0.0
        %1077 = vmatprep.subr.mxu0 0.0
        %1078 = vmatpush2.msra.mxu0 0.0
        %1079 = vmatprep.subr.mxu0 0.0
        %1080 = vmatpush2.msra.mxu0 0.0
        %1081 = vmatprep.subr.mxu0 0.0
        %1082 = vmatpush2.msra.mxu0 0.0
        %1083 = vmatprep.subr.mxu0 0.0
        %1084 = vmatpush2.msra.mxu0 0.0
        %1085 = vmatprep.subr.mxu0 0.0
        %1086 = vmatpush2.msra.mxu0 0.0
        %1087 = vmatprep.subr.mxu0 0.0
        %1088 = vmatpush2.msra.mxu0 0.0
        %1089 = vmatprep.mubr.f32.mxu0 0.0
        %1090 = vmatmul.mubr.f32.gmra.mxu0 %v1023
        %v1091 = vpop.f32.mrf.mxu0
        %v1092 = vadd.f32 0.0, %v1091
        %v1093 = vpop.f32.mrf.mxu0
        %1094 = vdwg.mxu0
        %v1096 = vsel %vm324, %v911, 0
        %1098 = vmatprep.subr.mxu0 0.0
        %1099 = vmatpush1.msra.mxu0 0.0
        %1100 = vmatprep.subr.mxu0 0.0
        %1101 = vmatpush1.msra.mxu0 0.0
        %1102 = vmatprep.subr.mxu0 0.0
        %1103 = vmatpush1.msra.mxu0 0.0
        %1104 = vmatprep.subr.mxu0 0.0
        %1105 = vmatpush1.msra.mxu0 0.0
        %1106 = vmatprep.subr.mxu0 0.0
        %1107 = vmatpush1.msra.mxu0 0.0
        %1108 = vmatprep.subr.mxu0 0.0
        %1109 = vmatpush1.msra.mxu0 0.0
        %1110 = vmatprep.subr.mxu0 0.0
        %1111 = vmatpush1.msra.mxu0 0.0
        %1112 = vmatprep.subr.mxu0 0.0
        %1113 = vmatpush1.msra.mxu0 0.0
        %1114 = vmatprep.subr.mxu0 0.0
        %1115 = vmatpush1.msra.mxu0 0.0
        %1116 = vmatprep.subr.mxu0 0.0
        %1117 = vmatpush1.msra.mxu0 0.0
        %1118 = vmatprep.subr.mxu0 0.0
        %1119 = vmatpush1.msra.mxu0 0.0
        %1120 = vmatprep.subr.mxu0 0.0
        %1121 = vmatpush1.msra.mxu0 0.0
        %1122 = vmatprep.subr.mxu0 0.0
        %1123 = vmatpush1.msra.mxu0 %v928
        %1124 = vmatprep.subr.mxu0 0.0
        %1125 = vmatpush1.msra.mxu0 %v927
        %1126 = vmatprep.subr.mxu0 0.0
        %1127 = vmatpush1.msra.mxu0 %v926
        %1128 = vmatprep.subr.mxu0 0.0
        %1129 = vmatpush1.msra.mxu0 %v925
        %1130 = vmatprep.subr.mxu0 0.0
        %1131 = vmatpush2.msra.mxu0 0.0
        %1132 = vmatprep.subr.mxu0 0.0
        %1133 = vmatpush2.msra.mxu0 0.0
        %1134 = vmatprep.subr.mxu0 0.0
        %1135 = vmatpush2.msra.mxu0 0.0
        %1136 = vmatprep.subr.mxu0 0.0
        %1137 = vmatpush2.msra.mxu0 0.0
        %1138 = vmatprep.subr.mxu0 0.0
        %1139 = vmatpush2.msra.mxu0 0.0
        %1140 = vmatprep.subr.mxu0 0.0
        %1141 = vmatpush2.msra.mxu0 0.0
        %1142 = vmatprep.subr.mxu0 0.0
        %1143 = vmatpush2.msra.mxu0 0.0
        %1144 = vmatprep.subr.mxu0 0.0
        %1145 = vmatpush2.msra.mxu0 0.0
        %1146 = vmatprep.subr.mxu0 0.0
        %1147 = vmatpush2.msra.mxu0 0.0
        %1148 = vmatprep.subr.mxu0 0.0
        %1149 = vmatpush2.msra.mxu0 0.0
        %1150 = vmatprep.subr.mxu0 0.0
        %1151 = vmatpush2.msra.mxu0 0.0
        %1152 = vmatprep.subr.mxu0 0.0
        %1153 = vmatpush2.msra.mxu0 0.0
        %1154 = vmatprep.subr.mxu0 0.0
        %1155 = vmatpush2.msra.mxu0 0.0
        %1156 = vmatprep.subr.mxu0 0.0
        %1157 = vmatpush2.msra.mxu0 0.0
        %1158 = vmatprep.subr.mxu0 0.0
        %1159 = vmatpush2.msra.mxu0 0.0
        %1160 = vmatprep.subr.mxu0 0.0
        %1161 = vmatpush2.msra.mxu0 0.0
        %1162 = vmatprep.mubr.f32.mxu0 0.0
        %1163 = vmatmul.mubr.f32.gmra.mxu0 %v1096
        %v1164 = vpop.f32.mrf.mxu0
        %v1165 = vadd.f32 0.0, %v1164
        %v1166 = vpop.f32.mrf.mxu0
        %1167 = vdwg.mxu0
        %v1169 = vsel %vm324, %v912, 0
        %1171 = vmatprep.subr.mxu0 0.0
        %1172 = vmatpush1.msra.mxu0 0.0
        %1173 = vmatprep.subr.mxu0 0.0
        %1174 = vmatpush1.msra.mxu0 0.0
        %1175 = vmatprep.subr.mxu0 0.0
        %1176 = vmatpush1.msra.mxu0 0.0
        %1177 = vmatprep.subr.mxu0 0.0
        %1178 = vmatpush1.msra.mxu0 0.0
        %1179 = vmatprep.subr.mxu0 0.0
        %1180 = vmatpush1.msra.mxu0 0.0
        %1181 = vmatprep.subr.mxu0 0.0
        %1182 = vmatpush1.msra.mxu0 0.0
        %1183 = vmatprep.subr.mxu0 0.0
        %1184 = vmatpush1.msra.mxu0 0.0
        %1185 = vmatprep.subr.mxu0 0.0
        %1186 = vmatpush1.msra.mxu0 0.0
        %1187 = vmatprep.subr.mxu0 0.0
        %1188 = vmatpush1.msra.mxu0 0.0
        %1189 = vmatprep.subr.mxu0 0.0
        %1190 = vmatpush1.msra.mxu0 0.0
        %1191 = vmatprep.subr.mxu0 0.0
        %1192 = vmatpush1.msra.mxu0 0.0
        %1193 = vmatprep.subr.mxu0 0.0
        %1194 = vmatpush1.msra.mxu0 0.0
        %1195 = vmatprep.subr.mxu0 0.0
        %1196 = vmatpush1.msra.mxu0 %v932
        %1197 = vmatprep.subr.mxu0 0.0
        %1198 = vmatpush1.msra.mxu0 %v931
        %1199 = vmatprep.subr.mxu0 0.0
        %1200 = vmatpush1.msra.mxu0 %v930
        %1201 = vmatprep.subr.mxu0 0.0
        %1202 = vmatpush1.msra.mxu0 %v929
        %1203 = vmatprep.subr.mxu0 0.0
        %1204 = vmatpush2.msra.mxu0 0.0
        %1205 = vmatprep.subr.mxu0 0.0
        %1206 = vmatpush2.msra.mxu0 0.0
        %1207 = vmatprep.subr.mxu0 0.0
        %1208 = vmatpush2.msra.mxu0 0.0
        %1209 = vmatprep.subr.mxu0 0.0
        %1210 = vmatpush2.msra.mxu0 0.0
        %1211 = vmatprep.subr.mxu0 0.0
        %1212 = vmatpush2.msra.mxu0 0.0
        %1213 = vmatprep.subr.mxu0 0.0
        %1214 = vmatpush2.msra.mxu0 0.0
        %1215 = vmatprep.subr.mxu0 0.0
        %1216 = vmatpush2.msra.mxu0 0.0
        %1217 = vmatprep.subr.mxu0 0.0
        %1218 = vmatpush2.msra.mxu0 0.0
        %1219 = vmatprep.subr.mxu0 0.0
        %1220 = vmatpush2.msra.mxu0 0.0
        %1221 = vmatprep.subr.mxu0 0.0
        %1222 = vmatpush2.msra.mxu0 0.0
        %1223 = vmatprep.subr.mxu0 0.0
        %1224 = vmatpush2.msra.mxu0 0.0
        %1225 = vmatprep.subr.mxu0 0.0
        %1226 = vmatpush2.msra.mxu0 0.0
        %1227 = vmatprep.subr.mxu0 0.0
        %1228 = vmatpush2.msra.mxu0 0.0
        %1229 = vmatprep.subr.mxu0 0.0
        %1230 = vmatpush2.msra.mxu0 0.0
        %1231 = vmatprep.subr.mxu0 0.0
        %1232 = vmatpush2.msra.mxu0 0.0
        %1233 = vmatprep.subr.mxu0 0.0
        %1234 = vmatpush2.msra.mxu0 0.0
        %1235 = vmatprep.mubr.f32.mxu0 0.0
        %1236 = vmatmul.mubr.f32.gmra.mxu0 %v1169
        %v1237 = vpop.f32.mrf.mxu0
        %v1238 = vadd.f32 0.0, %v1237
        %v1239 = vpop.f32.mrf.mxu0
        %1240 = vdwg.mxu0
        %v1242 = vsel %vm324, %v913, 0
        %1244 = vmatprep.subr.mxu0 0.0
        %1245 = vmatpush1.msra.mxu0 0.0
        %1246 = vmatprep.subr.mxu0 0.0
        %1247 = vmatpush1.msra.mxu0 0.0
        %1248 = vmatprep.subr.mxu0 0.0
        %1249 = vmatpush1.msra.mxu0 0.0
        %1250 = vmatprep.subr.mxu0 0.0
        %1251 = vmatpush1.msra.mxu0 0.0
        %1252 = vmatprep.subr.mxu0 0.0
        %1253 = vmatpush1.msra.mxu0 0.0
        %1254 = vmatprep.subr.mxu0 0.0
        %1255 = vmatpush1.msra.mxu0 0.0
        %1256 = vmatprep.subr.mxu0 0.0
        %1257 = vmatpush1.msra.mxu0 0.0
        %1258 = vmatprep.subr.mxu0 0.0
        %1259 = vmatpush1.msra.mxu0 0.0
        %1260 = vmatprep.subr.mxu0 0.0
        %1261 = vmatpush1.msra.mxu0 0.0
        %1262 = vmatprep.subr.mxu0 0.0
        %1263 = vmatpush1.msra.mxu0 0.0
        %1264 = vmatprep.subr.mxu0 0.0
        %1265 = vmatpush1.msra.mxu0 0.0
        %1266 = vmatprep.subr.mxu0 0.0
        %1267 = vmatpush1.msra.mxu0 0.0
        %1268 = vmatprep.subr.mxu0 0.0
        %1269 = vmatpush1.msra.mxu0 %v936
        %1270 = vmatprep.subr.mxu0 0.0
        %1271 = vmatpush1.msra.mxu0 %v935
        %1272 = vmatprep.subr.mxu0 0.0
        %1273 = vmatpush1.msra.mxu0 %v934
        %1274 = vmatprep.subr.mxu0 0.0
        %1275 = vmatpush1.msra.mxu0 %v933
        %1276 = vmatprep.subr.mxu0 0.0
        %1277 = vmatpush2.msra.mxu0 0.0
        %1278 = vmatprep.subr.mxu0 0.0
        %1279 = vmatpush2.msra.mxu0 0.0
        %1280 = vmatprep.subr.mxu0 0.0
        %1281 = vmatpush2.msra.mxu0 0.0
        %1282 = vmatprep.subr.mxu0 0.0
        %1283 = vmatpush2.msra.mxu0 0.0
        %1284 = vmatprep.subr.mxu0 0.0
        %1285 = vmatpush2.msra.mxu0 0.0
        %1286 = vmatprep.subr.mxu0 0.0
        %1287 = vmatpush2.msra.mxu0 0.0
        %1288 = vmatprep.subr.mxu0 0.0
        %1289 = vmatpush2.msra.mxu0 0.0
        %1290 = vmatprep.subr.mxu0 0.0
        %1291 = vmatpush2.msra.mxu0 0.0
        %1292 = vmatprep.subr.mxu0 0.0
        %1293 = vmatpush2.msra.mxu0 0.0
        %1294 = vmatprep.subr.mxu0 0.0
        %1295 = vmatpush2.msra.mxu0 0.0
        %1296 = vmatprep.subr.mxu0 0.0
        %1297 = vmatpush2.msra.mxu0 0.0
        %1298 = vmatprep.subr.mxu0 0.0
        %1299 = vmatpush2.msra.mxu0 0.0
        %1300 = vmatprep.subr.mxu0 0.0
        %1301 = vmatpush2.msra.mxu0 0.0
        %1302 = vmatprep.subr.mxu0 0.0
        %1303 = vmatpush2.msra.mxu0 0.0
        %1304 = vmatprep.subr.mxu0 0.0
        %1305 = vmatpush2.msra.mxu0 0.0
        %1306 = vmatprep.subr.mxu0 0.0
        %1307 = vmatpush2.msra.mxu0 0.0
        %1308 = vmatprep.mubr.f32.mxu0 0.0
        %1309 = vmatmul.mubr.f32.gmra.mxu0 %v1242
        %v1310 = vpop.f32.mrf.mxu0
        %v1311 = vadd.f32 0.0, %v1310
        %v1312 = vpop.f32.mrf.mxu0
        %1313 = vdwg.mxu0
        %v1315 = vsel %vm324, %v914, 0
        %1317 = vmatprep.subr.mxu0 0.0
        %1318 = vmatpush1.msra.mxu0 0.0
        %1319 = vmatprep.subr.mxu0 0.0
        %1320 = vmatpush1.msra.mxu0 0.0
        %1321 = vmatprep.subr.mxu0 0.0
        %1322 = vmatpush1.msra.mxu0 0.0
        %1323 = vmatprep.subr.mxu0 0.0
        %1324 = vmatpush1.msra.mxu0 0.0
        %1325 = vmatprep.subr.mxu0 0.0
        %1326 = vmatpush1.msra.mxu0 0.0
        %1327 = vmatprep.subr.mxu0 0.0
        %1328 = vmatpush1.msra.mxu0 0.0
        %1329 = vmatprep.subr.mxu0 0.0
        %1330 = vmatpush1.msra.mxu0 0.0
        %1331 = vmatprep.subr.mxu0 0.0
        %1332 = vmatpush1.msra.mxu0 0.0
        %1333 = vmatprep.subr.mxu0 0.0
        %1334 = vmatpush1.msra.mxu0 0.0
        %1335 = vmatprep.subr.mxu0 0.0
        %1336 = vmatpush1.msra.mxu0 0.0
        %1337 = vmatprep.subr.mxu0 0.0
        %1338 = vmatpush1.msra.mxu0 0.0
        %1339 = vmatprep.subr.mxu0 0.0
        %1340 = vmatpush1.msra.mxu0 0.0
        %1341 = vmatprep.subr.mxu0 0.0
        %1342 = vmatpush1.msra.mxu0 %v940
        %1343 = vmatprep.subr.mxu0 0.0
        %1344 = vmatpush1.msra.mxu0 %v939
        %1345 = vmatprep.subr.mxu0 0.0
        %1346 = vmatpush1.msra.mxu0 %v938
        %1347 = vmatprep.subr.mxu0 0.0
        %1348 = vmatpush1.msra.mxu0 %v937
        %1349 = vmatprep.subr.mxu0 0.0
        %1350 = vmatpush2.msra.mxu0 0.0
        %1351 = vmatprep.subr.mxu0 0.0
        %1352 = vmatpush2.msra.mxu0 0.0
        %1353 = vmatprep.subr.mxu0 0.0
        %1354 = vmatpush2.msra.mxu0 0.0
        %1355 = vmatprep.subr.mxu0 0.0
        %1356 = vmatpush2.msra.mxu0 0.0
        %1357 = vmatprep.subr.mxu0 0.0
        %1358 = vmatpush2.msra.mxu0 0.0
        %1359 = vmatprep.subr.mxu0 0.0
        %1360 = vmatpush2.msra.mxu0 0.0
        %1361 = vmatprep.subr.mxu0 0.0
        %1362 = vmatpush2.msra.mxu0 0.0
        %1363 = vmatprep.subr.mxu0 0.0
        %1364 = vmatpush2.msra.mxu0 0.0
        %1365 = vmatprep.subr.mxu0 0.0
        %1366 = vmatpush2.msra.mxu0 0.0
        %1367 = vmatprep.subr.mxu0 0.0
        %1368 = vmatpush2.msra.mxu0 0.0
        %1369 = vmatprep.subr.mxu0 0.0
        %1370 = vmatpush2.msra.mxu0 0.0
        %1371 = vmatprep.subr.mxu0 0.0
        %1372 = vmatpush2.msra.mxu0 0.0
        %1373 = vmatprep.subr.mxu0 0.0
        %1374 = vmatpush2.msra.mxu0 0.0
        %1375 = vmatprep.subr.mxu0 0.0
        %1376 = vmatpush2.msra.mxu0 0.0
        %1377 = vmatprep.subr.mxu0 0.0
        %1378 = vmatpush2.msra.mxu0 0.0
        %1379 = vmatprep.subr.mxu0 0.0
        %1380 = vmatpush2.msra.mxu0 0.0
        %1381 = vmatprep.mubr.f32.mxu0 0.0
        %1382 = vmatmul.mubr.f32.gmra.mxu0 %v1315
        %v1383 = vpop.f32.mrf.mxu0
        %v1384 = vadd.f32 0.0, %v1383
        %v1385 = vpop.f32.mrf.mxu0
        %1386 = vdwg.mxu0
        %v1388 = vsel %vm324, %v915, 0
        %1390 = vmatprep.subr.mxu0 0.0
        %1391 = vmatpush1.msra.mxu0 0.0
        %1392 = vmatprep.subr.mxu0 0.0
        %1393 = vmatpush1.msra.mxu0 0.0
        %1394 = vmatprep.subr.mxu0 0.0
        %1395 = vmatpush1.msra.mxu0 0.0
        %1396 = vmatprep.subr.mxu0 0.0
        %1397 = vmatpush1.msra.mxu0 0.0
        %1398 = vmatprep.subr.mxu0 0.0
        %1399 = vmatpush1.msra.mxu0 0.0
        %1400 = vmatprep.subr.mxu0 0.0
        %1401 = vmatpush1.msra.mxu0 0.0
        %1402 = vmatprep.subr.mxu0 0.0
        %1403 = vmatpush1.msra.mxu0 0.0
        %1404 = vmatprep.subr.mxu0 0.0
        %1405 = vmatpush1.msra.mxu0 0.0
        %1406 = vmatprep.subr.mxu0 0.0
        %1407 = vmatpush1.msra.mxu0 0.0
        %1408 = vmatprep.subr.mxu0 0.0
        %1409 = vmatpush1.msra.mxu0 0.0
        %1410 = vmatprep.subr.mxu0 0.0
        %1411 = vmatpush1.msra.mxu0 0.0
        %1412 = vmatprep.subr.mxu0 0.0
        %1413 = vmatpush1.msra.mxu0 0.0
        %1414 = vmatprep.subr.mxu0 0.0
        %1415 = vmatpush1.msra.mxu0 %v944
        %1416 = vmatprep.subr.mxu0 0.0
        %1417 = vmatpush1.msra.mxu0 %v943
        %1418 = vmatprep.subr.mxu0 0.0
        %1419 = vmatpush1.msra.mxu0 %v942
        %1420 = vmatprep.subr.mxu0 0.0
        %1421 = vmatpush1.msra.mxu0 %v941
        %1422 = vmatprep.subr.mxu0 0.0
        %1423 = vmatpush2.msra.mxu0 0.0
        %1424 = vmatprep.subr.mxu0 0.0
        %1425 = vmatpush2.msra.mxu0 0.0
        %1426 = vmatprep.subr.mxu0 0.0
        %1427 = vmatpush2.msra.mxu0 0.0
        %1428 = vmatprep.subr.mxu0 0.0
        %1429 = vmatpush2.msra.mxu0 0.0
        %1430 = vmatprep.subr.mxu0 0.0
        %1431 = vmatpush2.msra.mxu0 0.0
        %1432 = vmatprep.subr.mxu0 0.0
        %1433 = vmatpush2.msra.mxu0 0.0
        %1434 = vmatprep.subr.mxu0 0.0
        %1435 = vmatpush2.msra.mxu0 0.0
        %1436 = vmatprep.subr.mxu0 0.0
        %1437 = vmatpush2.msra.mxu0 0.0
        %1438 = vmatprep.subr.mxu0 0.0
        %1439 = vmatpush2.msra.mxu0 0.0
        %1440 = vmatprep.subr.mxu0 0.0
        %1441 = vmatpush2.msra.mxu0 0.0
        %1442 = vmatprep.subr.mxu0 0.0
        %1443 = vmatpush2.msra.mxu0 0.0
        %1444 = vmatprep.subr.mxu0 0.0
        %1445 = vmatpush2.msra.mxu0 0.0
        %1446 = vmatprep.subr.mxu0 0.0
        %1447 = vmatpush2.msra.mxu0 0.0
        %1448 = vmatprep.subr.mxu0 0.0
        %1449 = vmatpush2.msra.mxu0 0.0
        %1450 = vmatprep.subr.mxu0 0.0
        %1451 = vmatpush2.msra.mxu0 0.0
        %1452 = vmatprep.subr.mxu0 0.0
        %1453 = vmatpush2.msra.mxu0 0.0
        %1454 = vmatprep.mubr.f32.mxu0 0.0
        %1455 = vmatmul.mubr.f32.gmra.mxu0 %v1388
        %v1456 = vpop.f32.mrf.mxu0
        %v1457 = vadd.f32 0.0, %v1456
        %v1458 = vpop.f32.mrf.mxu0
        %1459 = vdwg.mxu0
        %v1461 = vsel %vm324, %v916, 0
        %1463 = vmatprep.subr.mxu0 0.0
        %1464 = vmatpush1.msra.mxu0 0.0
        %1465 = vmatprep.subr.mxu0 0.0
        %1466 = vmatpush1.msra.mxu0 0.0
        %1467 = vmatprep.subr.mxu0 0.0
        %1468 = vmatpush1.msra.mxu0 0.0
        %1469 = vmatprep.subr.mxu0 0.0
        %1470 = vmatpush1.msra.mxu0 0.0
        %1471 = vmatprep.subr.mxu0 0.0
        %1472 = vmatpush1.msra.mxu0 0.0
        %1473 = vmatprep.subr.mxu0 0.0
        %1474 = vmatpush1.msra.mxu0 0.0
        %1475 = vmatprep.subr.mxu0 0.0
        %1476 = vmatpush1.msra.mxu0 0.0
        %1477 = vmatprep.subr.mxu0 0.0
        %1478 = vmatpush1.msra.mxu0 0.0
        %1479 = vmatprep.subr.mxu0 0.0
        %1480 = vmatpush1.msra.mxu0 0.0
        %1481 = vmatprep.subr.mxu0 0.0
        %1482 = vmatpush1.msra.mxu0 0.0
        %1483 = vmatprep.subr.mxu0 0.0
        %1484 = vmatpush1.msra.mxu0 0.0
        %1485 = vmatprep.subr.mxu0 0.0
        %1486 = vmatpush1.msra.mxu0 0.0
        %1487 = vmatprep.subr.mxu0 0.0
        %1488 = vmatpush1.msra.mxu0 %v948
        %1489 = vmatprep.subr.mxu0 0.0
        %1490 = vmatpush1.msra.mxu0 %v947
        %1491 = vmatprep.subr.mxu0 0.0
        %1492 = vmatpush1.msra.mxu0 %v946
        %1493 = vmatprep.subr.mxu0 0.0
        %1494 = vmatpush1.msra.mxu0 %v945
        %1495 = vmatprep.subr.mxu0 0.0
        %1496 = vmatpush2.msra.mxu0 0.0
        %1497 = vmatprep.subr.mxu0 0.0
        %1498 = vmatpush2.msra.mxu0 0.0
        %1499 = vmatprep.subr.mxu0 0.0
        %1500 = vmatpush2.msra.mxu0 0.0
        %1501 = vmatprep.subr.mxu0 0.0
        %1502 = vmatpush2.msra.mxu0 0.0
        %1503 = vmatprep.subr.mxu0 0.0
        %1504 = vmatpush2.msra.mxu0 0.0
        %1505 = vmatprep.subr.mxu0 0.0
        %1506 = vmatpush2.msra.mxu0 0.0
        %1507 = vmatprep.subr.mxu0 0.0
        %1508 = vmatpush2.msra.mxu0 0.0
        %1509 = vmatprep.subr.mxu0 0.0
        %1510 = vmatpush2.msra.mxu0 0.0
        %1511 = vmatprep.subr.mxu0 0.0
        %1512 = vmatpush2.msra.mxu0 0.0
        %1513 = vmatprep.subr.mxu0 0.0
        %1514 = vmatpush2.msra.mxu0 0.0
        %1515 = vmatprep.subr.mxu0 0.0
        %1516 = vmatpush2.msra.mxu0 0.0
        %1517 = vmatprep.subr.mxu0 0.0
        %1518 = vmatpush2.msra.mxu0 0.0
        %1519 = vmatprep.subr.mxu0 0.0
        %1520 = vmatpush2.msra.mxu0 0.0
        %1521 = vmatprep.subr.mxu0 0.0
        %1522 = vmatpush2.msra.mxu0 0.0
        %1523 = vmatprep.subr.mxu0 0.0
        %1524 = vmatpush2.msra.mxu0 0.0
        %1525 = vmatprep.subr.mxu0 0.0
        %1526 = vmatpush2.msra.mxu0 0.0
        %1527 = vmatprep.mubr.f32.mxu0 0.0
        %1528 = vmatmul.mubr.f32.gmra.mxu0 %v1461
        %v1529 = vpop.f32.mrf.mxu0
        %v1530 = vadd.f32 0.0, %v1529
        %v1531 = vpop.f32.mrf.mxu0
        %1532 = vdwg.mxu0
        %v1533 = vcombine.low %v395, %v541
        %v1534 = vcombine.high %v395, %v541
        %v1536 = vunpack.c.l.s4 1983009808
        %v1537 = vunpack.c.0.s8 %v1536
        %v1538 = vlaneseq
        %v1539 = vshrl.u32 %v1538, 7
        %v1540 = vsub.s32 %v1537, %v1539
        %v1541 = vrot.slane %v1533, %v1540
        %v1543 = vunpack.c.l.s4 1983009808
        %v1544 = vunpack.c.0.s8 %v1543
        %v1545 = vlaneseq
        %v1546 = vshrl.u32 %v1545, 7
        %v1547 = vsub.s32 %v1544, %v1546
        %v1548 = vrot.slane %v1534, %v1547
        %v1549 = vcombine.low %v468, %v614
        %v1550 = vcombine.high %v468, %v614
        %v1552 = vunpack.c.l.s4 1983009808
        %v1553 = vunpack.c.0.s8 %v1552
        %v1554 = vlaneseq
        %v1555 = vshrl.u32 %v1554, 7
        %v1556 = vsub.s32 %v1553, %v1555
        %v1557 = vrot.slane %v1549, %v1556
        %v1559 = vunpack.c.l.s4 1983009808
        %v1560 = vunpack.c.0.s8 %v1559
        %v1561 = vlaneseq
        %v1562 = vshrl.u32 %v1561, 7
        %v1563 = vsub.s32 %v1560, %v1562
        %v1564 = vrot.slane %v1550, %v1563
        %v1565 = vcombine.low %v687, %v833
        %v1566 = vcombine.high %v687, %v833
        %v1568 = vunpack.c.l.s4 1983009808
        %v1569 = vunpack.c.0.s8 %v1568
        %v1570 = vlaneseq
        %v1571 = vshrl.u32 %v1570, 7
        %v1572 = vsub.s32 %v1569, %v1571
        %v1573 = vrot.slane %v1565, %v1572
        %v1575 = vunpack.c.l.s4 1983009808
        %v1576 = vunpack.c.0.s8 %v1575
        %v1577 = vlaneseq
        %v1578 = vshrl.u32 %v1577, 7
        %v1579 = vsub.s32 %v1576, %v1578
        %v1580 = vrot.slane %v1566, %v1579
        %v1581 = vcombine.low %v760, %v906
        %v1582 = vcombine.high %v760, %v906
        %v1584 = vunpack.c.l.s4 1983009808
        %v1585 = vunpack.c.0.s8 %v1584
        %v1586 = vlaneseq
        %v1587 = vshrl.u32 %v1586, 7
        %v1588 = vsub.s32 %v1585, %v1587
        %v1589 = vrot.slane %v1581, %v1588
        %v1591 = vunpack.c.l.s4 1983009808
        %v1592 = vunpack.c.0.s8 %v1591
        %v1593 = vlaneseq
        %v1594 = vshrl.u32 %v1593, 7
        %v1595 = vsub.s32 %v1592, %v1594
        %v1596 = vrot.slane %v1582, %v1595
        %v1597 = vcombine.low %v1541, %v1557
        %v1598 = vcombine.high %v1541, %v1557
        %v1600 = vunpack.c.l.s4 1934713408
        %v1601 = vunpack.c.0.s8 %v1600
        %v1602 = vlaneseq
        %v1603 = vshrl.u32 %v1602, 7
        %v1604 = vsub.s32 %v1601, %v1603
        %v1605 = vrot.slane %v1597, %v1604
        %v1607 = vunpack.c.l.s4 1934713408
        %v1608 = vunpack.c.0.s8 %v1607
        %v1609 = vlaneseq
        %v1610 = vshrl.u32 %v1609, 7
        %v1611 = vsub.s32 %v1608, %v1610
        %v1612 = vrot.slane %v1598, %v1611
        %v1613 = vcombine.low %v1548, %v1564
        %v1614 = vcombine.high %v1548, %v1564
        %v1616 = vunpack.c.l.s4 1934713408
        %v1617 = vunpack.c.0.s8 %v1616
        %v1618 = vlaneseq
        %v1619 = vshrl.u32 %v1618, 7
        %v1620 = vsub.s32 %v1617, %v1619
        %v1621 = vrot.slane %v1613, %v1620
        %v1623 = vunpack.c.l.s4 1934713408
        %v1624 = vunpack.c.0.s8 %v1623
        %v1625 = vlaneseq
        %v1626 = vshrl.u32 %v1625, 7
        %v1627 = vsub.s32 %v1624, %v1626
        %v1628 = vrot.slane %v1614, %v1627
        %v1629 = vcombine.low %v1573, %v1589
        %v1630 = vcombine.high %v1573, %v1589
        %v1632 = vunpack.c.l.s4 1934713408
        %v1633 = vunpack.c.0.s8 %v1632
        %v1634 = vlaneseq
        %v1635 = vshrl.u32 %v1634, 7
        %v1636 = vsub.s32 %v1633, %v1635
        %v1637 = vrot.slane %v1629, %v1636
        %v1639 = vunpack.c.l.s4 1934713408
        %v1640 = vunpack.c.0.s8 %v1639
        %v1641 = vlaneseq
        %v1642 = vshrl.u32 %v1641, 7
        %v1643 = vsub.s32 %v1640, %v1642
        %v1644 = vrot.slane %v1630, %v1643
        %v1645 = vcombine.low %v1580, %v1596
        %v1646 = vcombine.high %v1580, %v1596
        %v1648 = vunpack.c.l.s4 1934713408
        %v1649 = vunpack.c.0.s8 %v1648
        %v1650 = vlaneseq
        %v1651 = vshrl.u32 %v1650, 7
        %v1652 = vsub.s32 %v1649, %v1651
        %v1653 = vrot.slane %v1645, %v1652
        %v1655 = vunpack.c.l.s4 1934713408
        %v1656 = vunpack.c.0.s8 %v1655
        %v1657 = vlaneseq
        %v1658 = vshrl.u32 %v1657, 7
        %v1659 = vsub.s32 %v1656, %v1658
        %v1660 = vrot.slane %v1646, %v1659
        %v1661 = vcombine.low %v1605, %v1637
        %v1662 = vcombine.high %v1605, %v1637
        %v1663 = vcombine.low %v1612, %v1644
        %v1664 = vcombine.high %v1612, %v1644
        %v1665 = vcombine.low %v1621, %v1653
        %v1666 = vcombine.high %v1621, %v1653
        %v1667 = vcombine.low %v1628, %v1660
        %v1668 = vcombine.high %v1628, %v1660
        %v1669 = vcombine.low %v1019, %v1165
        %v1670 = vcombine.high %v1019, %v1165
        %v1672 = vunpack.c.l.s4 1983009808
        %v1673 = vunpack.c.0.s8 %v1672
        %v1674 = vlaneseq
        %v1675 = vshrl.u32 %v1674, 7
        %v1676 = vsub.s32 %v1673, %v1675
        %v1677 = vrot.slane %v1669, %v1676
        %v1679 = vunpack.c.l.s4 1983009808
        %v1680 = vunpack.c.0.s8 %v1679
        %v1681 = vlaneseq
        %v1682 = vshrl.u32 %v1681, 7
        %v1683 = vsub.s32 %v1680, %v1682
        %v1684 = vrot.slane %v1670, %v1683
        %v1685 = vcombine.low %v1092, %v1238
        %v1686 = vcombine.high %v1092, %v1238
        %v1688 = vunpack.c.l.s4 1983009808
        %v1689 = vunpack.c.0.s8 %v1688
        %v1690 = vlaneseq
        %v1691 = vshrl.u32 %v1690, 7
        %v1692 = vsub.s32 %v1689, %v1691
        %v1693 = vrot.slane %v1685, %v1692
        %v1695 = vunpack.c.l.s4 1983009808
        %v1696 = vunpack.c.0.s8 %v1695
        %v1697 = vlaneseq
        %v1698 = vshrl.u32 %v1697, 7
        %v1699 = vsub.s32 %v1696, %v1698
        %v1700 = vrot.slane %v1686, %v1699
        %v1701 = vcombine.low %v1311, %v1457
        %v1702 = vcombine.high %v1311, %v1457
        %v1704 = vunpack.c.l.s4 1983009808
        %v1705 = vunpack.c.0.s8 %v1704
        %v1706 = vlaneseq
        %v1707 = vshrl.u32 %v1706, 7
        %v1708 = vsub.s32 %v1705, %v1707
        %v1709 = vrot.slane %v1701, %v1708
        %v1711 = vunpack.c.l.s4 1983009808
        %v1712 = vunpack.c.0.s8 %v1711
        %v1713 = vlaneseq
        %v1714 = vshrl.u32 %v1713, 7
        %v1715 = vsub.s32 %v1712, %v1714
        %v1716 = vrot.slane %v1702, %v1715
        %v1717 = vcombine.low %v1384, %v1530
        %v1718 = vcombine.high %v1384, %v1530
        %v1720 = vunpack.c.l.s4 1983009808
        %v1721 = vunpack.c.0.s8 %v1720
        %v1722 = vlaneseq
        %v1723 = vshrl.u32 %v1722, 7
        %v1724 = vsub.s32 %v1721, %v1723
        %v1725 = vrot.slane %v1717, %v1724
        %v1727 = vunpack.c.l.s4 1983009808
        %v1728 = vunpack.c.0.s8 %v1727
        %v1729 = vlaneseq
        %v1730 = vshrl.u32 %v1729, 7
        %v1731 = vsub.s32 %v1728, %v1730
        %v1732 = vrot.slane %v1718, %v1731
        %v1733 = vcombine.low %v1677, %v1693
        %v1734 = vcombine.high %v1677, %v1693
        %v1736 = vunpack.c.l.s4 1934713408
        %v1737 = vunpack.c.0.s8 %v1736
        %v1738 = vlaneseq
        %v1739 = vshrl.u32 %v1738, 7
        %v1740 = vsub.s32 %v1737, %v1739
        %v1741 = vrot.slane %v1733, %v1740
        %v1743 = vunpack.c.l.s4 1934713408
        %v1744 = vunpack.c.0.s8 %v1743
        %v1745 = vlaneseq
        %v1746 = vshrl.u32 %v1745, 7
        %v1747 = vsub.s32 %v1744, %v1746
        %v1748 = vrot.slane %v1734, %v1747
        %v1749 = vcombine.low %v1684, %v1700
        %v1750 = vcombine.high %v1684, %v1700
        %v1752 = vunpack.c.l.s4 1934713408
        %v1753 = vunpack.c.0.s8 %v1752
        %v1754 = vlaneseq
        %v1755 = vshrl.u32 %v1754, 7
        %v1756 = vsub.s32 %v1753, %v1755
        %v1757 = vrot.slane %v1749, %v1756
        %v1759 = vunpack.c.l.s4 1934713408
        %v1760 = vunpack.c.0.s8 %v1759
        %v1761 = vlaneseq
        %v1762 = vshrl.u32 %v1761, 7
        %v1763 = vsub.s32 %v1760, %v1762
        %v1764 = vrot.slane %v1750, %v1763
        %v1765 = vcombine.low %v1709, %v1725
        %v1766 = vcombine.high %v1709, %v1725
        %v1768 = vunpack.c.l.s4 1934713408
        %v1769 = vunpack.c.0.s8 %v1768
        %v1770 = vlaneseq
        %v1771 = vshrl.u32 %v1770, 7
        %v1772 = vsub.s32 %v1769, %v1771
        %v1773 = vrot.slane %v1765, %v1772
        %v1775 = vunpack.c.l.s4 1934713408
        %v1776 = vunpack.c.0.s8 %v1775
        %v1777 = vlaneseq
        %v1778 = vshrl.u32 %v1777, 7
        %v1779 = vsub.s32 %v1776, %v1778
        %v1780 = vrot.slane %v1766, %v1779
        %v1781 = vcombine.low %v1716, %v1732
        %v1782 = vcombine.high %v1716, %v1732
        %v1784 = vunpack.c.l.s4 1934713408
        %v1785 = vunpack.c.0.s8 %v1784
        %v1786 = vlaneseq
        %v1787 = vshrl.u32 %v1786, 7
        %v1788 = vsub.s32 %v1785, %v1787
        %v1789 = vrot.slane %v1781, %v1788
        %v1791 = vunpack.c.l.s4 1934713408
        %v1792 = vunpack.c.0.s8 %v1791
        %v1793 = vlaneseq
        %v1794 = vshrl.u32 %v1793, 7
        %v1795 = vsub.s32 %v1792, %v1794
        %v1796 = vrot.slane %v1782, %v1795
        %v1797 = vcombine.low %v1741, %v1773
        %v1798 = vcombine.high %v1741, %v1773
        %v1799 = vcombine.low %v1748, %v1780
        %v1800 = vcombine.high %v1748, %v1780
        %v1801 = vcombine.low %v1757, %v1789
        %v1802 = vcombine.high %v1757, %v1789
        %v1803 = vcombine.low %v1764, %v1796
        %v1804 = vcombine.high %v1764, %v1796
        %v1806 = vsel %vm324, %v1661, 0
        %v1809 = vsel %vm324, %v1797, 0
        %1811 = vmatprep.subr.mxu0 0.0
        %1812 = vmatpush1.xpose.msra.mxu0 0.0
        %1813 = vmatprep.subr.mxu0 0.0
        %1814 = vmatpush1.xpose.msra.mxu0 0.0
        %1815 = vmatprep.subr.mxu0 0.0
        %1816 = vmatpush1.xpose.msra.mxu0 0.0
        %1817 = vmatprep.subr.mxu0 0.0
        %1818 = vmatpush1.xpose.msra.mxu0 0.0
        %1819 = vmatprep.subr.mxu0 0.0
        %1820 = vmatpush1.xpose.msra.mxu0 0.0
        %1821 = vmatprep.subr.mxu0 0.0
        %1822 = vmatpush1.xpose.msra.mxu0 0.0
        %1823 = vmatprep.subr.mxu0 0.0
        %1824 = vmatpush1.xpose.msra.mxu0 0.0
        %1825 = vmatprep.subr.mxu0 0.0
        %1826 = vmatpush1.xpose.msra.mxu0 0.0
        %1827 = vmatprep.subr.mxu0 0.0
        %1828 = vmatpush1.xpose.msra.mxu0 0.0
        %1829 = vmatprep.subr.mxu0 0.0
        %1830 = vmatpush1.xpose.msra.mxu0 0.0
        %1831 = vmatprep.subr.mxu0 0.0
        %1832 = vmatpush1.xpose.msra.mxu0 0.0
        %1833 = vmatprep.subr.mxu0 0.0
        %1834 = vmatpush1.xpose.msra.mxu0 0.0
        %1835 = vmatprep.subr.mxu0 0.0
        %1836 = vmatpush1.xpose.msra.mxu0 0.0
        %1837 = vmatprep.subr.mxu0 0.0
        %1838 = vmatpush1.xpose.msra.mxu0 0.0
        %1839 = vmatprep.subr.mxu0 0.0
        %1840 = vmatpush1.xpose.msra.mxu0 0.0
        %1841 = vmatprep.subr.mxu0 0.0
        %1842 = vmatpush1.xpose.msra.mxu0 %v1809
        %1843 = vmatprep.subr.mxu0 0.0
        %1844 = vmatpush2.xpose.msra.mxu0 0.0
        %1845 = vmatprep.subr.mxu0 0.0
        %1846 = vmatpush2.xpose.msra.mxu0 0.0
        %1847 = vmatprep.subr.mxu0 0.0
        %1848 = vmatpush2.xpose.msra.mxu0 0.0
        %1849 = vmatprep.subr.mxu0 0.0
        %1850 = vmatpush2.xpose.msra.mxu0 0.0
        %1851 = vmatprep.subr.mxu0 0.0
        %1852 = vmatpush2.xpose.msra.mxu0 0.0
        %1853 = vmatprep.subr.mxu0 0.0
        %1854 = vmatpush2.xpose.msra.mxu0 0.0
        %1855 = vmatprep.subr.mxu0 0.0
        %1856 = vmatpush2.xpose.msra.mxu0 0.0
        %1857 = vmatprep.subr.mxu0 0.0
        %1858 = vmatpush2.xpose.msra.mxu0 0.0
        %1859 = vmatprep.subr.mxu0 0.0
        %1860 = vmatpush2.xpose.msra.mxu0 0.0
        %1861 = vmatprep.subr.mxu0 0.0
        %1862 = vmatpush2.xpose.msra.mxu0 0.0
        %1863 = vmatprep.subr.mxu0 0.0
        %1864 = vmatpush2.xpose.msra.mxu0 0.0
        %1865 = vmatprep.subr.mxu0 0.0
        %1866 = vmatpush2.xpose.msra.mxu0 0.0
        %1867 = vmatprep.subr.mxu0 0.0
        %1868 = vmatpush2.xpose.msra.mxu0 0.0
        %1869 = vmatprep.subr.mxu0 0.0
        %1870 = vmatpush2.xpose.msra.mxu0 0.0
        %1871 = vmatprep.subr.mxu0 0.0
        %1872 = vmatpush2.xpose.msra.mxu0 0.0
        %1873 = vmatprep.subr.mxu0 0.0
        %1874 = vmatpush2.xpose.msra.mxu0 0.0
        %1875 = vmatprep.mubr.f32.mxu0 0.0
        %1876 = vmatmul.mubr.f32.gmra.mxu0 %v1806
        %v1877 = vpop.f32.mrf.mxu0
        %v1878 = vadd.f32 0.0, %v1877
        %v1879 = vpop.f32.mrf.mxu0
        %1880 = vdwg.mxu0
        %v1882 = vsel %vm324, %v1662, 0
        %v1885 = vsel %vm324, %v1798, 0
        %1887 = vmatprep.subr.mxu0 0.0
        %1888 = vmatpush1.xpose.msra.mxu0 0.0
        %1889 = vmatprep.subr.mxu0 0.0
        %1890 = vmatpush1.xpose.msra.mxu0 0.0
        %1891 = vmatprep.subr.mxu0 0.0
        %1892 = vmatpush1.xpose.msra.mxu0 0.0
        %1893 = vmatprep.subr.mxu0 0.0
        %1894 = vmatpush1.xpose.msra.mxu0 0.0
        %1895 = vmatprep.subr.mxu0 0.0
        %1896 = vmatpush1.xpose.msra.mxu0 0.0
        %1897 = vmatprep.subr.mxu0 0.0
        %1898 = vmatpush1.xpose.msra.mxu0 0.0
        %1899 = vmatprep.subr.mxu0 0.0
        %1900 = vmatpush1.xpose.msra.mxu0 0.0
        %1901 = vmatprep.subr.mxu0 0.0
        %1902 = vmatpush1.xpose.msra.mxu0 0.0
        %1903 = vmatprep.subr.mxu0 0.0
        %1904 = vmatpush1.xpose.msra.mxu0 0.0
        %1905 = vmatprep.subr.mxu0 0.0
        %1906 = vmatpush1.xpose.msra.mxu0 0.0
        %1907 = vmatprep.subr.mxu0 0.0
        %1908 = vmatpush1.xpose.msra.mxu0 0.0
        %1909 = vmatprep.subr.mxu0 0.0
        %1910 = vmatpush1.xpose.msra.mxu0 0.0
        %1911 = vmatprep.subr.mxu0 0.0
        %1912 = vmatpush1.xpose.msra.mxu0 0.0
        %1913 = vmatprep.subr.mxu0 0.0
        %1914 = vmatpush1.xpose.msra.mxu0 0.0
        %1915 = vmatprep.subr.mxu0 0.0
        %1916 = vmatpush1.xpose.msra.mxu0 0.0
        %1917 = vmatprep.subr.mxu0 0.0
        %1918 = vmatpush1.xpose.msra.mxu0 %v1885
        %1919 = vmatprep.subr.mxu0 0.0
        %1920 = vmatpush2.xpose.msra.mxu0 0.0
        %1921 = vmatprep.subr.mxu0 0.0
        %1922 = vmatpush2.xpose.msra.mxu0 0.0
        %1923 = vmatprep.subr.mxu0 0.0
        %1924 = vmatpush2.xpose.msra.mxu0 0.0
        %1925 = vmatprep.subr.mxu0 0.0
        %1926 = vmatpush2.xpose.msra.mxu0 0.0
        %1927 = vmatprep.subr.mxu0 0.0
        %1928 = vmatpush2.xpose.msra.mxu0 0.0
        %1929 = vmatprep.subr.mxu0 0.0
        %1930 = vmatpush2.xpose.msra.mxu0 0.0
        %1931 = vmatprep.subr.mxu0 0.0
        %1932 = vmatpush2.xpose.msra.mxu0 0.0
        %1933 = vmatprep.subr.mxu0 0.0
        %1934 = vmatpush2.xpose.msra.mxu0 0.0
        %1935 = vmatprep.subr.mxu0 0.0
        %1936 = vmatpush2.xpose.msra.mxu0 0.0
        %1937 = vmatprep.subr.mxu0 0.0
        %1938 = vmatpush2.xpose.msra.mxu0 0.0
        %1939 = vmatprep.subr.mxu0 0.0
        %1940 = vmatpush2.xpose.msra.mxu0 0.0
        %1941 = vmatprep.subr.mxu0 0.0
        %1942 = vmatpush2.xpose.msra.mxu0 0.0
        %1943 = vmatprep.subr.mxu0 0.0
        %1944 = vmatpush2.xpose.msra.mxu0 0.0
        %1945 = vmatprep.subr.mxu0 0.0
        %1946 = vmatpush2.xpose.msra.mxu0 0.0
        %1947 = vmatprep.subr.mxu0 0.0
        %1948 = vmatpush2.xpose.msra.mxu0 0.0
        %1949 = vmatprep.subr.mxu0 0.0
        %1950 = vmatpush2.xpose.msra.mxu0 0.0
        %1951 = vmatprep.mubr.f32.mxu0 0.0
        %1952 = vmatmul.mubr.f32.gmra.mxu0 %v1882
        %v1953 = vpop.f32.mrf.mxu0
        %v1954 = vadd.f32 0.0, %v1953
        %v1955 = vpop.f32.mrf.mxu0
        %1956 = vdwg.mxu0
        %v1958 = vsel %vm324, %v1663, 0
        %v1961 = vsel %vm324, %v1799, 0
        %1963 = vmatprep.subr.mxu0 0.0
        %1964 = vmatpush1.xpose.msra.mxu0 0.0
        %1965 = vmatprep.subr.mxu0 0.0
        %1966 = vmatpush1.xpose.msra.mxu0 0.0
        %1967 = vmatprep.subr.mxu0 0.0
        %1968 = vmatpush1.xpose.msra.mxu0 0.0
        %1969 = vmatprep.subr.mxu0 0.0
        %1970 = vmatpush1.xpose.msra.mxu0 0.0
        %1971 = vmatprep.subr.mxu0 0.0
        %1972 = vmatpush1.xpose.msra.mxu0 0.0
        %1973 = vmatprep.subr.mxu0 0.0
        %1974 = vmatpush1.xpose.msra.mxu0 0.0
        %1975 = vmatprep.subr.mxu0 0.0
        %1976 = vmatpush1.xpose.msra.mxu0 0.0
        %1977 = vmatprep.subr.mxu0 0.0
        %1978 = vmatpush1.xpose.msra.mxu0 0.0
        %1979 = vmatprep.subr.mxu0 0.0
        %1980 = vmatpush1.xpose.msra.mxu0 0.0
        %1981 = vmatprep.subr.mxu0 0.0
        %1982 = vmatpush1.xpose.msra.mxu0 0.0
        %1983 = vmatprep.subr.mxu0 0.0
        %1984 = vmatpush1.xpose.msra.mxu0 0.0
        %1985 = vmatprep.subr.mxu0 0.0
        %1986 = vmatpush1.xpose.msra.mxu0 0.0
        %1987 = vmatprep.subr.mxu0 0.0
        %1988 = vmatpush1.xpose.msra.mxu0 0.0
        %1989 = vmatprep.subr.mxu0 0.0
        %1990 = vmatpush1.xpose.msra.mxu0 0.0
        %1991 = vmatprep.subr.mxu0 0.0
        %1992 = vmatpush1.xpose.msra.mxu0 0.0
        %1993 = vmatprep.subr.mxu0 0.0
        %1994 = vmatpush1.xpose.msra.mxu0 %v1961
        %1995 = vmatprep.subr.mxu0 0.0
        %1996 = vmatpush2.xpose.msra.mxu0 0.0
        %1997 = vmatprep.subr.mxu0 0.0
        %1998 = vmatpush2.xpose.msra.mxu0 0.0
        %1999 = vmatprep.subr.mxu0 0.0
        %2000 = vmatpush2.xpose.msra.mxu0 0.0
        %2001 = vmatprep.subr.mxu0 0.0
        %2002 = vmatpush2.xpose.msra.mxu0 0.0
        %2003 = vmatprep.subr.mxu0 0.0
        %2004 = vmatpush2.xpose.msra.mxu0 0.0
        %2005 = vmatprep.subr.mxu0 0.0
        %2006 = vmatpush2.xpose.msra.mxu0 0.0
        %2007 = vmatprep.subr.mxu0 0.0
        %2008 = vmatpush2.xpose.msra.mxu0 0.0
        %2009 = vmatprep.subr.mxu0 0.0
        %2010 = vmatpush2.xpose.msra.mxu0 0.0
        %2011 = vmatprep.subr.mxu0 0.0
        %2012 = vmatpush2.xpose.msra.mxu0 0.0
        %2013 = vmatprep.subr.mxu0 0.0
        %2014 = vmatpush2.xpose.msra.mxu0 0.0
        %2015 = vmatprep.subr.mxu0 0.0
        %2016 = vmatpush2.xpose.msra.mxu0 0.0
        %2017 = vmatprep.subr.mxu0 0.0
        %2018 = vmatpush2.xpose.msra.mxu0 0.0
        %2019 = vmatprep.subr.mxu0 0.0
        %2020 = vmatpush2.xpose.msra.mxu0 0.0
        %2021 = vmatprep.subr.mxu0 0.0
        %2022 = vmatpush2.xpose.msra.mxu0 0.0
        %2023 = vmatprep.subr.mxu0 0.0
        %2024 = vmatpush2.xpose.msra.mxu0 0.0
        %2025 = vmatprep.subr.mxu0 0.0
        %2026 = vmatpush2.xpose.msra.mxu0 0.0
        %2027 = vmatprep.mubr.f32.mxu0 0.0
        %2028 = vmatmul.mubr.f32.gmra.mxu0 %v1958
        %v2029 = vpop.f32.mrf.mxu0
        %v2030 = vadd.f32 0.0, %v2029
        %v2031 = vpop.f32.mrf.mxu0
        %2032 = vdwg.mxu0
        %v2034 = vsel %vm324, %v1664, 0
        %v2037 = vsel %vm324, %v1800, 0
        %2039 = vmatprep.subr.mxu0 0.0
        %2040 = vmatpush1.xpose.msra.mxu0 0.0
        %2041 = vmatprep.subr.mxu0 0.0
        %2042 = vmatpush1.xpose.msra.mxu0 0.0
        %2043 = vmatprep.subr.mxu0 0.0
        %2044 = vmatpush1.xpose.msra.mxu0 0.0
        %2045 = vmatprep.subr.mxu0 0.0
        %2046 = vmatpush1.xpose.msra.mxu0 0.0
        %2047 = vmatprep.subr.mxu0 0.0
        %2048 = vmatpush1.xpose.msra.mxu0 0.0
        %2049 = vmatprep.subr.mxu0 0.0
        %2050 = vmatpush1.xpose.msra.mxu0 0.0
        %2051 = vmatprep.subr.mxu0 0.0
        %2052 = vmatpush1.xpose.msra.mxu0 0.0
        %2053 = vmatprep.subr.mxu0 0.0
        %2054 = vmatpush1.xpose.msra.mxu0 0.0
        %2055 = vmatprep.subr.mxu0 0.0
        %2056 = vmatpush1.xpose.msra.mxu0 0.0
        %2057 = vmatprep.subr.mxu0 0.0
        %2058 = vmatpush1.xpose.msra.mxu0 0.0
        %2059 = vmatprep.subr.mxu0 0.0
        %2060 = vmatpush1.xpose.msra.mxu0 0.0
        %2061 = vmatprep.subr.mxu0 0.0
        %2062 = vmatpush1.xpose.msra.mxu0 0.0
        %2063 = vmatprep.subr.mxu0 0.0
        %2064 = vmatpush1.xpose.msra.mxu0 0.0
        %2065 = vmatprep.subr.mxu0 0.0
        %2066 = vmatpush1.xpose.msra.mxu0 0.0
        %2067 = vmatprep.subr.mxu0 0.0
        %2068 = vmatpush1.xpose.msra.mxu0 0.0
        %2069 = vmatprep.subr.mxu0 0.0
        %2070 = vmatpush1.xpose.msra.mxu0 %v2037
        %2071 = vmatprep.subr.mxu0 0.0
        %2072 = vmatpush2.xpose.msra.mxu0 0.0
        %2073 = vmatprep.subr.mxu0 0.0
        %2074 = vmatpush2.xpose.msra.mxu0 0.0
        %2075 = vmatprep.subr.mxu0 0.0
        %2076 = vmatpush2.xpose.msra.mxu0 0.0
        %2077 = vmatprep.subr.mxu0 0.0
        %2078 = vmatpush2.xpose.msra.mxu0 0.0
        %2079 = vmatprep.subr.mxu0 0.0
        %2080 = vmatpush2.xpose.msra.mxu0 0.0
        %2081 = vmatprep.subr.mxu0 0.0
        %2082 = vmatpush2.xpose.msra.mxu0 0.0
        %2083 = vmatprep.subr.mxu0 0.0
        %2084 = vmatpush2.xpose.msra.mxu0 0.0
        %2085 = vmatprep.subr.mxu0 0.0
        %2086 = vmatpush2.xpose.msra.mxu0 0.0
        %2087 = vmatprep.subr.mxu0 0.0
        %2088 = vmatpush2.xpose.msra.mxu0 0.0
        %2089 = vmatprep.subr.mxu0 0.0
        %2090 = vmatpush2.xpose.msra.mxu0 0.0
        %2091 = vmatprep.subr.mxu0 0.0
        %2092 = vmatpush2.xpose.msra.mxu0 0.0
        %2093 = vmatprep.subr.mxu0 0.0
        %2094 = vmatpush2.xpose.msra.mxu0 0.0
        %2095 = vmatprep.subr.mxu0 0.0
        %2096 = vmatpush2.xpose.msra.mxu0 0.0
        %2097 = vmatprep.subr.mxu0 0.0
        %2098 = vmatpush2.xpose.msra.mxu0 0.0
        %2099 = vmatprep.subr.mxu0 0.0
        %2100 = vmatpush2.xpose.msra.mxu0 0.0
        %2101 = vmatprep.subr.mxu0 0.0
        %2102 = vmatpush2.xpose.msra.mxu0 0.0
        %2103 = vmatprep.mubr.f32.mxu0 0.0
        %2104 = vmatmul.mubr.f32.gmra.mxu0 %v2034
        %v2105 = vpop.f32.mrf.mxu0
        %v2106 = vadd.f32 0.0, %v2105
        %v2107 = vpop.f32.mrf.mxu0
        %2108 = vdwg.mxu0
        %v2110 = vsel %vm324, %v1665, 0
        %v2113 = vsel %vm324, %v1801, 0
        %2115 = vmatprep.subr.mxu0 0.0
        %2116 = vmatpush1.xpose.msra.mxu0 0.0
        %2117 = vmatprep.subr.mxu0 0.0
        %2118 = vmatpush1.xpose.msra.mxu0 0.0
        %2119 = vmatprep.subr.mxu0 0.0
        %2120 = vmatpush1.xpose.msra.mxu0 0.0
        %2121 = vmatprep.subr.mxu0 0.0
        %2122 = vmatpush1.xpose.msra.mxu0 0.0
        %2123 = vmatprep.subr.mxu0 0.0
        %2124 = vmatpush1.xpose.msra.mxu0 0.0
        %2125 = vmatprep.subr.mxu0 0.0
        %2126 = vmatpush1.xpose.msra.mxu0 0.0
        %2127 = vmatprep.subr.mxu0 0.0
        %2128 = vmatpush1.xpose.msra.mxu0 0.0
        %2129 = vmatprep.subr.mxu0 0.0
        %2130 = vmatpush1.xpose.msra.mxu0 0.0
        %2131 = vmatprep.subr.mxu0 0.0
        %2132 = vmatpush1.xpose.msra.mxu0 0.0
        %2133 = vmatprep.subr.mxu0 0.0
        %2134 = vmatpush1.xpose.msra.mxu0 0.0
        %2135 = vmatprep.subr.mxu0 0.0
        %2136 = vmatpush1.xpose.msra.mxu0 0.0
        %2137 = vmatprep.subr.mxu0 0.0
        %2138 = vmatpush1.xpose.msra.mxu0 0.0
        %2139 = vmatprep.subr.mxu0 0.0
        %2140 = vmatpush1.xpose.msra.mxu0 0.0
        %2141 = vmatprep.subr.mxu0 0.0
        %2142 = vmatpush1.xpose.msra.mxu0 0.0
        %2143 = vmatprep.subr.mxu0 0.0
        %2144 = vmatpush1.xpose.msra.mxu0 0.0
        %2145 = vmatprep.subr.mxu0 0.0
        %2146 = vmatpush1.xpose.msra.mxu0 %v2113
        %2147 = vmatprep.subr.mxu0 0.0
        %2148 = vmatpush2.xpose.msra.mxu0 0.0
        %2149 = vmatprep.subr.mxu0 0.0
        %2150 = vmatpush2.xpose.msra.mxu0 0.0
        %2151 = vmatprep.subr.mxu0 0.0
        %2152 = vmatpush2.xpose.msra.mxu0 0.0
        %2153 = vmatprep.subr.mxu0 0.0
        %2154 = vmatpush2.xpose.msra.mxu0 0.0
        %2155 = vmatprep.subr.mxu0 0.0
        %2156 = vmatpush2.xpose.msra.mxu0 0.0
        %2157 = vmatprep.subr.mxu0 0.0
        %2158 = vmatpush2.xpose.msra.mxu0 0.0
        %2159 = vmatprep.subr.mxu0 0.0
        %2160 = vmatpush2.xpose.msra.mxu0 0.0
        %2161 = vmatprep.subr.mxu0 0.0
        %2162 = vmatpush2.xpose.msra.mxu0 0.0
        %2163 = vmatprep.subr.mxu0 0.0
        %2164 = vmatpush2.xpose.msra.mxu0 0.0
        %2165 = vmatprep.subr.mxu0 0.0
        %2166 = vmatpush2.xpose.msra.mxu0 0.0
        %2167 = vmatprep.subr.mxu0 0.0
        %2168 = vmatpush2.xpose.msra.mxu0 0.0
        %2169 = vmatprep.subr.mxu0 0.0
        %2170 = vmatpush2.xpose.msra.mxu0 0.0
        %2171 = vmatprep.subr.mxu0 0.0
        %2172 = vmatpush2.xpose.msra.mxu0 0.0
        %2173 = vmatprep.subr.mxu0 0.0
        %2174 = vmatpush2.xpose.msra.mxu0 0.0
        %2175 = vmatprep.subr.mxu0 0.0
        %2176 = vmatpush2.xpose.msra.mxu0 0.0
        %2177 = vmatprep.subr.mxu0 0.0
        %2178 = vmatpush2.xpose.msra.mxu0 0.0
        %2179 = vmatprep.mubr.f32.mxu0 0.0
        %2180 = vmatmul.mubr.f32.gmra.mxu0 %v2110
        %v2181 = vpop.f32.mrf.mxu0
        %v2182 = vadd.f32 0.0, %v2181
        %v2183 = vpop.f32.mrf.mxu0
        %2184 = vdwg.mxu0
        %v2186 = vsel %vm324, %v1666, 0
        %v2189 = vsel %vm324, %v1802, 0
        %2191 = vmatprep.subr.mxu0 0.0
        %2192 = vmatpush1.xpose.msra.mxu0 0.0
        %2193 = vmatprep.subr.mxu0 0.0
        %2194 = vmatpush1.xpose.msra.mxu0 0.0
        %2195 = vmatprep.subr.mxu0 0.0
        %2196 = vmatpush1.xpose.msra.mxu0 0.0
        %2197 = vmatprep.subr.mxu0 0.0
        %2198 = vmatpush1.xpose.msra.mxu0 0.0
        %2199 = vmatprep.subr.mxu0 0.0
        %2200 = vmatpush1.xpose.msra.mxu0 0.0
        %2201 = vmatprep.subr.mxu0 0.0
        %2202 = vmatpush1.xpose.msra.mxu0 0.0
        %2203 = vmatprep.subr.mxu0 0.0
        %2204 = vmatpush1.xpose.msra.mxu0 0.0
        %2205 = vmatprep.subr.mxu0 0.0
        %2206 = vmatpush1.xpose.msra.mxu0 0.0
        %2207 = vmatprep.subr.mxu0 0.0
        %2208 = vmatpush1.xpose.msra.mxu0 0.0
        %2209 = vmatprep.subr.mxu0 0.0
        %2210 = vmatpush1.xpose.msra.mxu0 0.0
        %2211 = vmatprep.subr.mxu0 0.0
        %2212 = vmatpush1.xpose.msra.mxu0 0.0
        %2213 = vmatprep.subr.mxu0 0.0
        %2214 = vmatpush1.xpose.msra.mxu0 0.0
        %2215 = vmatprep.subr.mxu0 0.0
        %2216 = vmatpush1.xpose.msra.mxu0 0.0
        %2217 = vmatprep.subr.mxu0 0.0
        %2218 = vmatpush1.xpose.msra.mxu0 0.0
        %2219 = vmatprep.subr.mxu0 0.0
        %2220 = vmatpush1.xpose.msra.mxu0 0.0
        %2221 = vmatprep.subr.mxu0 0.0
        %2222 = vmatpush1.xpose.msra.mxu0 %v2189
        %2223 = vmatprep.subr.mxu0 0.0
        %2224 = vmatpush2.xpose.msra.mxu0 0.0
        %2225 = vmatprep.subr.mxu0 0.0
        %2226 = vmatpush2.xpose.msra.mxu0 0.0
        %2227 = vmatprep.subr.mxu0 0.0
        %2228 = vmatpush2.xpose.msra.mxu0 0.0
        %2229 = vmatprep.subr.mxu0 0.0
        %2230 = vmatpush2.xpose.msra.mxu0 0.0
        %2231 = vmatprep.subr.mxu0 0.0
        %2232 = vmatpush2.xpose.msra.mxu0 0.0
        %2233 = vmatprep.subr.mxu0 0.0
        %2234 = vmatpush2.xpose.msra.mxu0 0.0
        %2235 = vmatprep.subr.mxu0 0.0
        %2236 = vmatpush2.xpose.msra.mxu0 0.0
        %2237 = vmatprep.subr.mxu0 0.0
        %2238 = vmatpush2.xpose.msra.mxu0 0.0
        %2239 = vmatprep.subr.mxu0 0.0
        %2240 = vmatpush2.xpose.msra.mxu0 0.0
        %2241 = vmatprep.subr.mxu0 0.0
        %2242 = vmatpush2.xpose.msra.mxu0 0.0
        %2243 = vmatprep.subr.mxu0 0.0
        %2244 = vmatpush2.xpose.msra.mxu0 0.0
        %2245 = vmatprep.subr.mxu0 0.0
        %2246 = vmatpush2.xpose.msra.mxu0 0.0
        %2247 = vmatprep.subr.mxu0 0.0
        %2248 = vmatpush2.xpose.msra.mxu0 0.0
        %2249 = vmatprep.subr.mxu0 0.0
        %2250 = vmatpush2.xpose.msra.mxu0 0.0
        %2251 = vmatprep.subr.mxu0 0.0
        %2252 = vmatpush2.xpose.msra.mxu0 0.0
        %2253 = vmatprep.subr.mxu0 0.0
        %2254 = vmatpush2.xpose.msra.mxu0 0.0
        %2255 = vmatprep.mubr.f32.mxu0 0.0
        %2256 = vmatmul.mubr.f32.gmra.mxu0 %v2186
        %v2257 = vpop.f32.mrf.mxu0
        %v2258 = vadd.f32 0.0, %v2257
        %v2259 = vpop.f32.mrf.mxu0
        %2260 = vdwg.mxu0
        %v2262 = vsel %vm324, %v1667, 0
        %v2265 = vsel %vm324, %v1803, 0
        %2267 = vmatprep.subr.mxu0 0.0
        %2268 = vmatpush1.xpose.msra.mxu0 0.0
        %2269 = vmatprep.subr.mxu0 0.0
        %2270 = vmatpush1.xpose.msra.mxu0 0.0
        %2271 = vmatprep.subr.mxu0 0.0
        %2272 = vmatpush1.xpose.msra.mxu0 0.0
        %2273 = vmatprep.subr.mxu0 0.0
        %2274 = vmatpush1.xpose.msra.mxu0 0.0
        %2275 = vmatprep.subr.mxu0 0.0
        %2276 = vmatpush1.xpose.msra.mxu0 0.0
        %2277 = vmatprep.subr.mxu0 0.0
        %2278 = vmatpush1.xpose.msra.mxu0 0.0
        %2279 = vmatprep.subr.mxu0 0.0
        %2280 = vmatpush1.xpose.msra.mxu0 0.0
        %2281 = vmatprep.subr.mxu0 0.0
        %2282 = vmatpush1.xpose.msra.mxu0 0.0
        %2283 = vmatprep.subr.mxu0 0.0
        %2284 = vmatpush1.xpose.msra.mxu0 0.0
        %2285 = vmatprep.subr.mxu0 0.0
        %2286 = vmatpush1.xpose.msra.mxu0 0.0
        %2287 = vmatprep.subr.mxu0 0.0
        %2288 = vmatpush1.xpose.msra.mxu0 0.0
        %2289 = vmatprep.subr.mxu0 0.0
        %2290 = vmatpush1.xpose.msra.mxu0 0.0
        %2291 = vmatprep.subr.mxu0 0.0
        %2292 = vmatpush1.xpose.msra.mxu0 0.0
        %2293 = vmatprep.subr.mxu0 0.0
        %2294 = vmatpush1.xpose.msra.mxu0 0.0
        %2295 = vmatprep.subr.mxu0 0.0
        %2296 = vmatpush1.xpose.msra.mxu0 0.0
        %2297 = vmatprep.subr.mxu0 0.0
        %2298 = vmatpush1.xpose.msra.mxu0 %v2265
        %2299 = vmatprep.subr.mxu0 0.0
        %2300 = vmatpush2.xpose.msra.mxu0 0.0
        %2301 = vmatprep.subr.mxu0 0.0
        %2302 = vmatpush2.xpose.msra.mxu0 0.0
        %2303 = vmatprep.subr.mxu0 0.0
        %2304 = vmatpush2.xpose.msra.mxu0 0.0
        %2305 = vmatprep.subr.mxu0 0.0
        %2306 = vmatpush2.xpose.msra.mxu0 0.0
        %2307 = vmatprep.subr.mxu0 0.0
        %2308 = vmatpush2.xpose.msra.mxu0 0.0
        %2309 = vmatprep.subr.mxu0 0.0
        %2310 = vmatpush2.xpose.msra.mxu0 0.0
        %2311 = vmatprep.subr.mxu0 0.0
        %2312 = vmatpush2.xpose.msra.mxu0 0.0
        %2313 = vmatprep.subr.mxu0 0.0
        %2314 = vmatpush2.xpose.msra.mxu0 0.0
        %2315 = vmatprep.subr.mxu0 0.0
        %2316 = vmatpush2.xpose.msra.mxu0 0.0
        %2317 = vmatprep.subr.mxu0 0.0
        %2318 = vmatpush2.xpose.msra.mxu0 0.0
        %2319 = vmatprep.subr.mxu0 0.0
        %2320 = vmatpush2.xpose.msra.mxu0 0.0
        %2321 = vmatprep.subr.mxu0 0.0
        %2322 = vmatpush2.xpose.msra.mxu0 0.0
        %2323 = vmatprep.subr.mxu0 0.0
        %2324 = vmatpush2.xpose.msra.mxu0 0.0
        %2325 = vmatprep.subr.mxu0 0.0
        %2326 = vmatpush2.xpose.msra.mxu0 0.0
        %2327 = vmatprep.subr.mxu0 0.0
        %2328 = vmatpush2.xpose.msra.mxu0 0.0
        %2329 = vmatprep.subr.mxu0 0.0
        %2330 = vmatpush2.xpose.msra.mxu0 0.0
        %2331 = vmatprep.mubr.f32.mxu0 0.0
        %2332 = vmatmul.mubr.f32.gmra.mxu0 %v2262
        %v2333 = vpop.f32.mrf.mxu0
        %v2334 = vadd.f32 0.0, %v2333
        %v2335 = vpop.f32.mrf.mxu0
        %2336 = vdwg.mxu0
        %v2338 = vsel %vm324, %v1668, 0
        %v2341 = vsel %vm324, %v1804, 0
        %2343 = vmatprep.subr.mxu0 0.0
        %2344 = vmatpush1.xpose.msra.mxu0 0.0
        %2345 = vmatprep.subr.mxu0 0.0
        %2346 = vmatpush1.xpose.msra.mxu0 0.0
        %2347 = vmatprep.subr.mxu0 0.0
        %2348 = vmatpush1.xpose.msra.mxu0 0.0
        %2349 = vmatprep.subr.mxu0 0.0
        %2350 = vmatpush1.xpose.msra.mxu0 0.0
        %2351 = vmatprep.subr.mxu0 0.0
        %2352 = vmatpush1.xpose.msra.mxu0 0.0
        %2353 = vmatprep.subr.mxu0 0.0
        %2354 = vmatpush1.xpose.msra.mxu0 0.0
        %2355 = vmatprep.subr.mxu0 0.0
        %2356 = vmatpush1.xpose.msra.mxu0 0.0
        %2357 = vmatprep.subr.mxu0 0.0
        %2358 = vmatpush1.xpose.msra.mxu0 0.0
        %2359 = vmatprep.subr.mxu0 0.0
        %2360 = vmatpush1.xpose.msra.mxu0 0.0
        %2361 = vmatprep.subr.mxu0 0.0
        %2362 = vmatpush1.xpose.msra.mxu0 0.0
        %2363 = vmatprep.subr.mxu0 0.0
        %2364 = vmatpush1.xpose.msra.mxu0 0.0
        %2365 = vmatprep.subr.mxu0 0.0
        %2366 = vmatpush1.xpose.msra.mxu0 0.0
        %2367 = vmatprep.subr.mxu0 0.0
        %2368 = vmatpush1.xpose.msra.mxu0 0.0
        %2369 = vmatprep.subr.mxu0 0.0
        %2370 = vmatpush1.xpose.msra.mxu0 0.0
        %2371 = vmatprep.subr.mxu0 0.0
        %2372 = vmatpush1.xpose.msra.mxu0 0.0
        %2373 = vmatprep.subr.mxu0 0.0
        %2374 = vmatpush1.xpose.msra.mxu0 %v2341
        %2375 = vmatprep.subr.mxu0 0.0
        %2376 = vmatpush2.xpose.msra.mxu0 0.0
        %2377 = vmatprep.subr.mxu0 0.0
        %2378 = vmatpush2.xpose.msra.mxu0 0.0
        %2379 = vmatprep.subr.mxu0 0.0
        %2380 = vmatpush2.xpose.msra.mxu0 0.0
        %2381 = vmatprep.subr.mxu0 0.0
        %2382 = vmatpush2.xpose.msra.mxu0 0.0
        %2383 = vmatprep.subr.mxu0 0.0
        %2384 = vmatpush2.xpose.msra.mxu0 0.0
        %2385 = vmatprep.subr.mxu0 0.0
        %2386 = vmatpush2.xpose.msra.mxu0 0.0
        %2387 = vmatprep.subr.mxu0 0.0
        %2388 = vmatpush2.xpose.msra.mxu0 0.0
        %2389 = vmatprep.subr.mxu0 0.0
        %2390 = vmatpush2.xpose.msra.mxu0 0.0
        %2391 = vmatprep.subr.mxu0 0.0
        %2392 = vmatpush2.xpose.msra.mxu0 0.0
        %2393 = vmatprep.subr.mxu0 0.0
        %2394 = vmatpush2.xpose.msra.mxu0 0.0
        %2395 = vmatprep.subr.mxu0 0.0
        %2396 = vmatpush2.xpose.msra.mxu0 0.0
        %2397 = vmatprep.subr.mxu0 0.0
        %2398 = vmatpush2.xpose.msra.mxu0 0.0
        %2399 = vmatprep.subr.mxu0 0.0
        %2400 = vmatpush2.xpose.msra.mxu0 0.0
        %2401 = vmatprep.subr.mxu0 0.0
        %2402 = vmatpush2.xpose.msra.mxu0 0.0
        %2403 = vmatprep.subr.mxu0 0.0
        %2404 = vmatpush2.xpose.msra.mxu0 0.0
        %2405 = vmatprep.subr.mxu0 0.0
        %2406 = vmatpush2.xpose.msra.mxu0 0.0
        %2407 = vmatprep.mubr.f32.mxu0 0.0
        %2408 = vmatmul.mubr.f32.gmra.mxu0 %v2338
        %v2409 = vpop.f32.mrf.mxu0
        %v2410 = vadd.f32 0.0, %v2409
        %v2411 = vpop.f32.mrf.mxu0
        %2412 = vdwg.mxu0
        %v2413 = vmul.f32 %v1878, 0.17677669
        %v2414 = vmul.f32 %v1954, 0.17677669
        %v2415 = vmul.f32 %v2030, 0.17677669
        %v2416 = vmul.f32 %v2106, 0.17677669
        %v2417 = vmul.f32 %v2182, 0.17677669
        %v2418 = vmul.f32 %v2258, 0.17677669
        %v2419 = vmul.f32 %v2334, 0.17677669
        %v2420 = vmul.f32 %v2410, 0.17677669
        %vm2421 = vcmask 64512
        %v2422 = vsel %vm2421, %v2413, -inf
        %2423 = vmax.xlane.f32.xlu0 %v2422
        %v2424 = vpop.xlane.xlu0 %2423
        %v2425 = vsel %vm2421, %v2414, -inf
        %2426 = vmax.xlane.f32.xlu0 %v2425
        %v2427 = vpop.xlane.xlu0 %2426
        %v2428 = vsel %vm2421, %v2415, -inf
        %2429 = vmax.xlane.f32.xlu0 %v2428
        %v2430 = vpop.xlane.xlu0 %2429
        %v2431 = vsel %vm2421, %v2416, -inf
        %2432 = vmax.xlane.f32.xlu0 %v2431
        %v2433 = vpop.xlane.xlu0 %2432
        %v2434 = vsel %vm2421, %v2417, -inf
        %2435 = vmax.xlane.f32.xlu0 %v2434
        %v2436 = vpop.xlane.xlu0 %2435
        %v2437 = vsel %vm2421, %v2418, -inf
        %2438 = vmax.xlane.f32.xlu0 %v2437
        %v2439 = vpop.xlane.xlu0 %2438
        %v2440 = vsel %vm2421, %v2419, -inf
        %2441 = vmax.xlane.f32.xlu0 %v2440
        %v2442 = vpop.xlane.xlu0 %2441
        %v2443 = vsel %vm2421, %v2420, -inf
        %2444 = vmax.xlane.f32.xlu0 %v2443
        %v2445 = vpop.xlane.xlu0 %2444
        %v2446 = vsub.f32 %v2413, %v2424
        %v2447 = vsub.f32 %v2414, %v2427
        %v2448 = vsub.f32 %v2415, %v2430
        %v2449 = vsub.f32 %v2416, %v2433
        %v2450 = vsub.f32 %v2417, %v2436
        %v2451 = vsub.f32 %v2418, %v2439
        %v2452 = vsub.f32 %v2419, %v2442
        %v2453 = vsub.f32 %v2420, %v2445
        %v2454 = vmul.f32 %v2446, 1.442695
        %v2455 = vpow.pop %v2454
        %v2456 = vmul.f32 %v2447, 1.442695
        %v2457 = vpow.pop %v2456
        %v2458 = vmul.f32 %v2448, 1.442695
        %v2459 = vpow.pop %v2458
        %v2460 = vmul.f32 %v2449, 1.442695
        %v2461 = vpow.pop %v2460
        %v2462 = vmul.f32 %v2450, 1.442695
        %v2463 = vpow.pop %v2462
        %v2464 = vmul.f32 %v2451, 1.442695
        %v2465 = vpow.pop %v2464
        %v2466 = vmul.f32 %v2452, 1.442695
        %v2467 = vpow.pop %v2466
        %v2468 = vmul.f32 %v2453, 1.442695
        %v2469 = vpow.pop %v2468
        %v2470 = vsel %vm2421, %v2455, 0.0
        %2471 = vadd.xlane.f32.xlu0 %v2470
        %v2472 = vpop.xlane.xlu0 %2471
        %v2473 = vsel %vm2421, %v2457, 0.0
        %2474 = vadd.xlane.f32.xlu0 %v2473
        %v2475 = vpop.xlane.xlu0 %2474
        %v2476 = vsel %vm2421, %v2459, 0.0
        %2477 = vadd.xlane.f32.xlu0 %v2476
        %v2478 = vpop.xlane.xlu0 %2477
        %v2479 = vsel %vm2421, %v2461, 0.0
        %2480 = vadd.xlane.f32.xlu0 %v2479
        %v2481 = vpop.xlane.xlu0 %2480
        %v2482 = vsel %vm2421, %v2463, 0.0
        %2483 = vadd.xlane.f32.xlu0 %v2482
        %v2484 = vpop.xlane.xlu0 %2483
        %v2485 = vsel %vm2421, %v2465, 0.0
        %2486 = vadd.xlane.f32.xlu0 %v2485
        %v2487 = vpop.xlane.xlu0 %2486
        %v2488 = vsel %vm2421, %v2467, 0.0
        %2489 = vadd.xlane.f32.xlu0 %v2488
        %v2490 = vpop.xlane.xlu0 %2489
        %v2491 = vsel %vm2421, %v2469, 0.0
        %2492 = vadd.xlane.f32.xlu0 %v2491
        %v2493 = vpop.xlane.xlu0 %2492
        %v2494 = vrcp.pop %v2472
        %v2495 = vrcp.pop %v2475
        %v2496 = vrcp.pop %v2478
        %v2497 = vrcp.pop %v2481
        %v2498 = vrcp.pop %v2484
        %v2499 = vrcp.pop %v2487
        %v2500 = vrcp.pop %v2490
        %v2501 = vrcp.pop %v2493
        %v2502 = vmul.f32 %v2455, %v2494
        %v2503 = vmul.f32 %v2457, %v2495
        %v2504 = vmul.f32 %v2459, %v2496
        %v2505 = vmul.f32 %v2461, %v2497
        %v2506 = vmul.f32 %v2463, %v2498
        %v2507 = vmul.f32 %v2465, %v2499
        %v2508 = vmul.f32 %v2467, %v2500
        %v2509 = vmul.f32 %v2469, %v2501
        %2510 = vrot.lane.b32.xlu0 %v1797, 96
        %v2511 = vpop.permute.xlu0 %2510
        %v2514 = vsel %vm2421, %v2502, 0
        %2516 = vmatprep.subr.mxu0 0.0
        %2517 = vmatpush1.msra.mxu0 0.0
        %2518 = vmatprep.subr.mxu0 0.0
        %2519 = vmatpush1.msra.mxu0 0.0
        %2520 = vmatprep.subr.mxu0 0.0
        %2521 = vmatpush1.msra.mxu0 0.0
        %2522 = vmatprep.subr.mxu0 0.0
        %2523 = vmatpush1.msra.mxu0 0.0
        %2524 = vmatprep.subr.mxu0 0.0
        %2525 = vmatpush1.msra.mxu0 0.0
        %2526 = vmatprep.subr.mxu0 0.0
        %2527 = vmatpush1.msra.mxu0 0.0
        %2528 = vmatprep.subr.mxu0 0.0
        %2529 = vmatpush1.msra.mxu0 0.0
        %2530 = vmatprep.subr.mxu0 0.0
        %2531 = vmatpush1.msra.mxu0 0.0
        %2532 = vmatprep.subr.mxu0 0.0
        %2533 = vmatpush1.msra.mxu0 0.0
        %2534 = vmatprep.subr.mxu0 0.0
        %2535 = vmatpush1.msra.mxu0 0.0
        %2536 = vmatprep.subr.mxu0 0.0
        %2537 = vmatpush1.msra.mxu0 0.0
        %2538 = vmatprep.subr.mxu0 0.0
        %2539 = vmatpush1.msra.mxu0 0.0
        %2540 = vmatprep.subr.mxu0 0.0
        %2541 = vmatpush1.msra.mxu0 0.0
        %2542 = vmatprep.subr.mxu0 0.0
        %2543 = vmatpush1.msra.mxu0 0.0
        %2544 = vmatprep.subr.mxu0 0.0
        %2545 = vmatpush1.msra.mxu0 0.0
        %2546 = vmatprep.subr.mxu0 0.0
        %2547 = vmatpush1.msra.mxu0 %v2511
        %2548 = vmatprep.subr.mxu0 0.0
        %2549 = vmatpush2.msra.mxu0 0.0
        %2550 = vmatprep.subr.mxu0 0.0
        %2551 = vmatpush2.msra.mxu0 0.0
        %2552 = vmatprep.subr.mxu0 0.0
        %2553 = vmatpush2.msra.mxu0 0.0
        %2554 = vmatprep.subr.mxu0 0.0
        %2555 = vmatpush2.msra.mxu0 0.0
        %2556 = vmatprep.subr.mxu0 0.0
        %2557 = vmatpush2.msra.mxu0 0.0
        %2558 = vmatprep.subr.mxu0 0.0
        %2559 = vmatpush2.msra.mxu0 0.0
        %2560 = vmatprep.subr.mxu0 0.0
        %2561 = vmatpush2.msra.mxu0 0.0
        %2562 = vmatprep.subr.mxu0 0.0
        %2563 = vmatpush2.msra.mxu0 0.0
        %2564 = vmatprep.subr.mxu0 0.0
        %2565 = vmatpush2.msra.mxu0 0.0
        %2566 = vmatprep.subr.mxu0 0.0
        %2567 = vmatpush2.msra.mxu0 0.0
        %2568 = vmatprep.subr.mxu0 0.0
        %2569 = vmatpush2.msra.mxu0 0.0
        %2570 = vmatprep.subr.mxu0 0.0
        %2571 = vmatpush2.msra.mxu0 0.0
        %2572 = vmatprep.subr.mxu0 0.0
        %2573 = vmatpush2.msra.mxu0 0.0
        %2574 = vmatprep.subr.mxu0 0.0
        %2575 = vmatpush2.msra.mxu0 0.0
        %2576 = vmatprep.subr.mxu0 0.0
        %2577 = vmatpush2.msra.mxu0 0.0
        %2578 = vmatprep.subr.mxu0 0.0
        %2579 = vmatpush2.msra.mxu0 0.0
        %2580 = vmatprep.mubr.f32.mxu0 0.0
        %2581 = vmatmul.mubr.f32.gmra.mxu0 %v2514
        %v2582 = vpop.f32.mrf.mxu0
        %v2583 = vadd.f32 0.0, %v2582
        %v2584 = vpop.f32.mrf.mxu0
        %2585 = vdwg.mxu0
        %2586 = vrot.lane.b32.xlu0 %v1798, 96
        %v2587 = vpop.permute.xlu0 %2586
        %v2590 = vsel %vm2421, %v2503, 0
        %2592 = vmatprep.subr.mxu0 0.0
        %2593 = vmatpush1.msra.mxu0 0.0
        %2594 = vmatprep.subr.mxu0 0.0
        %2595 = vmatpush1.msra.mxu0 0.0
        %2596 = vmatprep.subr.mxu0 0.0
        %2597 = vmatpush1.msra.mxu0 0.0
        %2598 = vmatprep.subr.mxu0 0.0
        %2599 = vmatpush1.msra.mxu0 0.0
        %2600 = vmatprep.subr.mxu0 0.0
        %2601 = vmatpush1.msra.mxu0 0.0
        %2602 = vmatprep.subr.mxu0 0.0
        %2603 = vmatpush1.msra.mxu0 0.0
        %2604 = vmatprep.subr.mxu0 0.0
        %2605 = vmatpush1.msra.mxu0 0.0
        %2606 = vmatprep.subr.mxu0 0.0
        %2607 = vmatpush1.msra.mxu0 0.0
        %2608 = vmatprep.subr.mxu0 0.0
        %2609 = vmatpush1.msra.mxu0 0.0
        %2610 = vmatprep.subr.mxu0 0.0
        %2611 = vmatpush1.msra.mxu0 0.0
        %2612 = vmatprep.subr.mxu0 0.0
        %2613 = vmatpush1.msra.mxu0 0.0
        %2614 = vmatprep.subr.mxu0 0.0
        %2615 = vmatpush1.msra.mxu0 0.0
        %2616 = vmatprep.subr.mxu0 0.0
        %2617 = vmatpush1.msra.mxu0 0.0
        %2618 = vmatprep.subr.mxu0 0.0
        %2619 = vmatpush1.msra.mxu0 0.0
        %2620 = vmatprep.subr.mxu0 0.0
        %2621 = vmatpush1.msra.mxu0 0.0
        %2622 = vmatprep.subr.mxu0 0.0
        %2623 = vmatpush1.msra.mxu0 %v2587
        %2624 = vmatprep.subr.mxu0 0.0
        %2625 = vmatpush2.msra.mxu0 0.0
        %2626 = vmatprep.subr.mxu0 0.0
        %2627 = vmatpush2.msra.mxu0 0.0
        %2628 = vmatprep.subr.mxu0 0.0
        %2629 = vmatpush2.msra.mxu0 0.0
        %2630 = vmatprep.subr.mxu0 0.0
        %2631 = vmatpush2.msra.mxu0 0.0
        %2632 = vmatprep.subr.mxu0 0.0
        %2633 = vmatpush2.msra.mxu0 0.0
        %2634 = vmatprep.subr.mxu0 0.0
        %2635 = vmatpush2.msra.mxu0 0.0
        %2636 = vmatprep.subr.mxu0 0.0
        %2637 = vmatpush2.msra.mxu0 0.0
        %2638 = vmatprep.subr.mxu0 0.0
        %2639 = vmatpush2.msra.mxu0 0.0
        %2640 = vmatprep.subr.mxu0 0.0
        %2641 = vmatpush2.msra.mxu0 0.0
        %2642 = vmatprep.subr.mxu0 0.0
        %2643 = vmatpush2.msra.mxu0 0.0
        %2644 = vmatprep.subr.mxu0 0.0
        %2645 = vmatpush2.msra.mxu0 0.0
        %2646 = vmatprep.subr.mxu0 0.0
        %2647 = vmatpush2.msra.mxu0 0.0
        %2648 = vmatprep.subr.mxu0 0.0
        %2649 = vmatpush2.msra.mxu0 0.0
        %2650 = vmatprep.subr.mxu0 0.0
        %2651 = vmatpush2.msra.mxu0 0.0
        %2652 = vmatprep.subr.mxu0 0.0
        %2653 = vmatpush2.msra.mxu0 0.0
        %2654 = vmatprep.subr.mxu0 0.0
        %2655 = vmatpush2.msra.mxu0 0.0
        %2656 = vmatprep.mubr.f32.mxu0 0.0
        %2657 = vmatmul.mubr.f32.gmra.mxu0 %v2590
        %v2658 = vpop.f32.mrf.mxu0
        %v2659 = vadd.f32 0.0, %v2658
        %v2660 = vpop.f32.mrf.mxu0
        %2661 = vdwg.mxu0
        %2662 = vrot.lane.b32.xlu0 %v1799, 96
        %v2663 = vpop.permute.xlu0 %2662
        %v2666 = vsel %vm2421, %v2504, 0
        %2668 = vmatprep.subr.mxu0 0.0
        %2669 = vmatpush1.msra.mxu0 0.0
        %2670 = vmatprep.subr.mxu0 0.0
        %2671 = vmatpush1.msra.mxu0 0.0
        %2672 = vmatprep.subr.mxu0 0.0
        %2673 = vmatpush1.msra.mxu0 0.0
        %2674 = vmatprep.subr.mxu0 0.0
        %2675 = vmatpush1.msra.mxu0 0.0
        %2676 = vmatprep.subr.mxu0 0.0
        %2677 = vmatpush1.msra.mxu0 0.0
        %2678 = vmatprep.subr.mxu0 0.0
        %2679 = vmatpush1.msra.mxu0 0.0
        %2680 = vmatprep.subr.mxu0 0.0
        %2681 = vmatpush1.msra.mxu0 0.0
        %2682 = vmatprep.subr.mxu0 0.0
        %2683 = vmatpush1.msra.mxu0 0.0
        %2684 = vmatprep.subr.mxu0 0.0
        %2685 = vmatpush1.msra.mxu0 0.0
        %2686 = vmatprep.subr.mxu0 0.0
        %2687 = vmatpush1.msra.mxu0 0.0
        %2688 = vmatprep.subr.mxu0 0.0
        %2689 = vmatpush1.msra.mxu0 0.0
        %2690 = vmatprep.subr.mxu0 0.0
        %2691 = vmatpush1.msra.mxu0 0.0
        %2692 = vmatprep.subr.mxu0 0.0
        %2693 = vmatpush1.msra.mxu0 0.0
        %2694 = vmatprep.subr.mxu0 0.0
        %2695 = vmatpush1.msra.mxu0 0.0
        %2696 = vmatprep.subr.mxu0 0.0
        %2697 = vmatpush1.msra.mxu0 0.0
        %2698 = vmatprep.subr.mxu0 0.0
        %2699 = vmatpush1.msra.mxu0 %v2663
        %2700 = vmatprep.subr.mxu0 0.0
        %2701 = vmatpush2.msra.mxu0 0.0
        %2702 = vmatprep.subr.mxu0 0.0
        %2703 = vmatpush2.msra.mxu0 0.0
        %2704 = vmatprep.subr.mxu0 0.0
        %2705 = vmatpush2.msra.mxu0 0.0
        %2706 = vmatprep.subr.mxu0 0.0
        %2707 = vmatpush2.msra.mxu0 0.0
        %2708 = vmatprep.subr.mxu0 0.0
        %2709 = vmatpush2.msra.mxu0 0.0
        %2710 = vmatprep.subr.mxu0 0.0
        %2711 = vmatpush2.msra.mxu0 0.0
        %2712 = vmatprep.subr.mxu0 0.0
        %2713 = vmatpush2.msra.mxu0 0.0
        %2714 = vmatprep.subr.mxu0 0.0
        %2715 = vmatpush2.msra.mxu0 0.0
        %2716 = vmatprep.subr.mxu0 0.0
        %2717 = vmatpush2.msra.mxu0 0.0
        %2718 = vmatprep.subr.mxu0 0.0
        %2719 = vmatpush2.msra.mxu0 0.0
        %2720 = vmatprep.subr.mxu0 0.0
        %2721 = vmatpush2.msra.mxu0 0.0
        %2722 = vmatprep.subr.mxu0 0.0
        %2723 = vmatpush2.msra.mxu0 0.0
        %2724 = vmatprep.subr.mxu0 0.0
        %2725 = vmatpush2.msra.mxu0 0.0
        %2726 = vmatprep.subr.mxu0 0.0
        %2727 = vmatpush2.msra.mxu0 0.0
        %2728 = vmatprep.subr.mxu0 0.0
        %2729 = vmatpush2.msra.mxu0 0.0
        %2730 = vmatprep.subr.mxu0 0.0
        %2731 = vmatpush2.msra.mxu0 0.0
        %2732 = vmatprep.mubr.f32.mxu0 0.0
        %2733 = vmatmul.mubr.f32.gmra.mxu0 %v2666
        %v2734 = vpop.f32.mrf.mxu0
        %v2735 = vadd.f32 0.0, %v2734
        %v2736 = vpop.f32.mrf.mxu0
        %2737 = vdwg.mxu0
        %2738 = vrot.lane.b32.xlu0 %v1800, 96
        %v2739 = vpop.permute.xlu0 %2738
        %v2742 = vsel %vm2421, %v2505, 0
        %2744 = vmatprep.subr.mxu0 0.0
        %2745 = vmatpush1.msra.mxu0 0.0
        %2746 = vmatprep.subr.mxu0 0.0
        %2747 = vmatpush1.msra.mxu0 0.0
        %2748 = vmatprep.subr.mxu0 0.0
        %2749 = vmatpush1.msra.mxu0 0.0
        %2750 = vmatprep.subr.mxu0 0.0
        %2751 = vmatpush1.msra.mxu0 0.0
        %2752 = vmatprep.subr.mxu0 0.0
        %2753 = vmatpush1.msra.mxu0 0.0
        %2754 = vmatprep.subr.mxu0 0.0
        %2755 = vmatpush1.msra.mxu0 0.0
        %2756 = vmatprep.subr.mxu0 0.0
        %2757 = vmatpush1.msra.mxu0 0.0
        %2758 = vmatprep.subr.mxu0 0.0
        %2759 = vmatpush1.msra.mxu0 0.0
        %2760 = vmatprep.subr.mxu0 0.0
        %2761 = vmatpush1.msra.mxu0 0.0
        %2762 = vmatprep.subr.mxu0 0.0
        %2763 = vmatpush1.msra.mxu0 0.0
        %2764 = vmatprep.subr.mxu0 0.0
        %2765 = vmatpush1.msra.mxu0 0.0
        %2766 = vmatprep.subr.mxu0 0.0
        %2767 = vmatpush1.msra.mxu0 0.0
        %2768 = vmatprep.subr.mxu0 0.0
        %2769 = vmatpush1.msra.mxu0 0.0
        %2770 = vmatprep.subr.mxu0 0.0
        %2771 = vmatpush1.msra.mxu0 0.0
        %2772 = vmatprep.subr.mxu0 0.0
        %2773 = vmatpush1.msra.mxu0 0.0
        %2774 = vmatprep.subr.mxu0 0.0
        %2775 = vmatpush1.msra.mxu0 %v2739
        %2776 = vmatprep.subr.mxu0 0.0
        %2777 = vmatpush2.msra.mxu0 0.0
        %2778 = vmatprep.subr.mxu0 0.0
        %2779 = vmatpush2.msra.mxu0 0.0
        %2780 = vmatprep.subr.mxu0 0.0
        %2781 = vmatpush2.msra.mxu0 0.0
        %2782 = vmatprep.subr.mxu0 0.0
        %2783 = vmatpush2.msra.mxu0 0.0
        %2784 = vmatprep.subr.mxu0 0.0
        %2785 = vmatpush2.msra.mxu0 0.0
        %2786 = vmatprep.subr.mxu0 0.0
        %2787 = vmatpush2.msra.mxu0 0.0
        %2788 = vmatprep.subr.mxu0 0.0
        %2789 = vmatpush2.msra.mxu0 0.0
        %2790 = vmatprep.subr.mxu0 0.0
        %2791 = vmatpush2.msra.mxu0 0.0
        %2792 = vmatprep.subr.mxu0 0.0
        %2793 = vmatpush2.msra.mxu0 0.0
        %2794 = vmatprep.subr.mxu0 0.0
        %2795 = vmatpush2.msra.mxu0 0.0
        %2796 = vmatprep.subr.mxu0 0.0
        %2797 = vmatpush2.msra.mxu0 0.0
        %2798 = vmatprep.subr.mxu0 0.0
        %2799 = vmatpush2.msra.mxu0 0.0
        %2800 = vmatprep.subr.mxu0 0.0
        %2801 = vmatpush2.msra.mxu0 0.0
        %2802 = vmatprep.subr.mxu0 0.0
        %2803 = vmatpush2.msra.mxu0 0.0
        %2804 = vmatprep.subr.mxu0 0.0
        %2805 = vmatpush2.msra.mxu0 0.0
        %2806 = vmatprep.subr.mxu0 0.0
        %2807 = vmatpush2.msra.mxu0 0.0
        %2808 = vmatprep.mubr.f32.mxu0 0.0
        %2809 = vmatmul.mubr.f32.gmra.mxu0 %v2742
        %v2810 = vpop.f32.mrf.mxu0
        %v2811 = vadd.f32 0.0, %v2810
        %v2812 = vpop.f32.mrf.mxu0
        %2813 = vdwg.mxu0
        %2814 = vrot.lane.b32.xlu0 %v1801, 96
        %v2815 = vpop.permute.xlu0 %2814
        %v2818 = vsel %vm2421, %v2506, 0
        %2820 = vmatprep.subr.mxu0 0.0
        %2821 = vmatpush1.msra.mxu0 0.0
        %2822 = vmatprep.subr.mxu0 0.0
        %2823 = vmatpush1.msra.mxu0 0.0
        %2824 = vmatprep.subr.mxu0 0.0
        %2825 = vmatpush1.msra.mxu0 0.0
        %2826 = vmatprep.subr.mxu0 0.0
        %2827 = vmatpush1.msra.mxu0 0.0
        %2828 = vmatprep.subr.mxu0 0.0
        %2829 = vmatpush1.msra.mxu0 0.0
        %2830 = vmatprep.subr.mxu0 0.0
        %2831 = vmatpush1.msra.mxu0 0.0
        %2832 = vmatprep.subr.mxu0 0.0
        %2833 = vmatpush1.msra.mxu0 0.0
        %2834 = vmatprep.subr.mxu0 0.0
        %2835 = vmatpush1.msra.mxu0 0.0
        %2836 = vmatprep.subr.mxu0 0.0
        %2837 = vmatpush1.msra.mxu0 0.0
        %2838 = vmatprep.subr.mxu0 0.0
        %2839 = vmatpush1.msra.mxu0 0.0
        %2840 = vmatprep.subr.mxu0 0.0
        %2841 = vmatpush1.msra.mxu0 0.0
        %2842 = vmatprep.subr.mxu0 0.0
        %2843 = vmatpush1.msra.mxu0 0.0
        %2844 = vmatprep.subr.mxu0 0.0
        %2845 = vmatpush1.msra.mxu0 0.0
        %2846 = vmatprep.subr.mxu0 0.0
        %2847 = vmatpush1.msra.mxu0 0.0
        %2848 = vmatprep.subr.mxu0 0.0
        %2849 = vmatpush1.msra.mxu0 0.0
        %2850 = vmatprep.subr.mxu0 0.0
        %2851 = vmatpush1.msra.mxu0 %v2815
        %2852 = vmatprep.subr.mxu0 0.0
        %2853 = vmatpush2.msra.mxu0 0.0
        %2854 = vmatprep.subr.mxu0 0.0
        %2855 = vmatpush2.msra.mxu0 0.0
        %2856 = vmatprep.subr.mxu0 0.0
        %2857 = vmatpush2.msra.mxu0 0.0
        %2858 = vmatprep.subr.mxu0 0.0
        %2859 = vmatpush2.msra.mxu0 0.0
        %2860 = vmatprep.subr.mxu0 0.0
        %2861 = vmatpush2.msra.mxu0 0.0
        %2862 = vmatprep.subr.mxu0 0.0
        %2863 = vmatpush2.msra.mxu0 0.0
        %2864 = vmatprep.subr.mxu0 0.0
        %2865 = vmatpush2.msra.mxu0 0.0
        %2866 = vmatprep.subr.mxu0 0.0
        %2867 = vmatpush2.msra.mxu0 0.0
        %2868 = vmatprep.subr.mxu0 0.0
        %2869 = vmatpush2.msra.mxu0 0.0
        %2870 = vmatprep.subr.mxu0 0.0
        %2871 = vmatpush2.msra.mxu0 0.0
        %2872 = vmatprep.subr.mxu0 0.0
        %2873 = vmatpush2.msra.mxu0 0.0
        %2874 = vmatprep.subr.mxu0 0.0
        %2875 = vmatpush2.msra.mxu0 0.0
        %2876 = vmatprep.subr.mxu0 0.0
        %2877 = vmatpush2.msra.mxu0 0.0
        %2878 = vmatprep.subr.mxu0 0.0
        %2879 = vmatpush2.msra.mxu0 0.0
        %2880 = vmatprep.subr.mxu0 0.0
        %2881 = vmatpush2.msra.mxu0 0.0
        %2882 = vmatprep.subr.mxu0 0.0
        %2883 = vmatpush2.msra.mxu0 0.0
        %2884 = vmatprep.mubr.f32.mxu0 0.0
        %2885 = vmatmul.mubr.f32.gmra.mxu0 %v2818
        %v2886 = vpop.f32.mrf.mxu0
        %v2887 = vadd.f32 0.0, %v2886
        %v2888 = vpop.f32.mrf.mxu0
        %2889 = vdwg.mxu0
        %2890 = vrot.lane.b32.xlu0 %v1802, 96
        %v2891 = vpop.permute.xlu0 %2890
        %v2894 = vsel %vm2421, %v2507, 0
        %2896 = vmatprep.subr.mxu0 0.0
        %2897 = vmatpush1.msra.mxu0 0.0
        %2898 = vmatprep.subr.mxu0 0.0
        %2899 = vmatpush1.msra.mxu0 0.0
        %2900 = vmatprep.subr.mxu0 0.0
        %2901 = vmatpush1.msra.mxu0 0.0
        %2902 = vmatprep.subr.mxu0 0.0
        %2903 = vmatpush1.msra.mxu0 0.0
        %2904 = vmatprep.subr.mxu0 0.0
        %2905 = vmatpush1.msra.mxu0 0.0
        %2906 = vmatprep.subr.mxu0 0.0
        %2907 = vmatpush1.msra.mxu0 0.0
        %2908 = vmatprep.subr.mxu0 0.0
        %2909 = vmatpush1.msra.mxu0 0.0
        %2910 = vmatprep.subr.mxu0 0.0
        %2911 = vmatpush1.msra.mxu0 0.0
        %2912 = vmatprep.subr.mxu0 0.0
        %2913 = vmatpush1.msra.mxu0 0.0
        %2914 = vmatprep.subr.mxu0 0.0
        %2915 = vmatpush1.msra.mxu0 0.0
        %2916 = vmatprep.subr.mxu0 0.0
        %2917 = vmatpush1.msra.mxu0 0.0
        %2918 = vmatprep.subr.mxu0 0.0
        %2919 = vmatpush1.msra.mxu0 0.0
        %2920 = vmatprep.subr.mxu0 0.0
        %2921 = vmatpush1.msra.mxu0 0.0
        %2922 = vmatprep.subr.mxu0 0.0
        %2923 = vmatpush1.msra.mxu0 0.0
        %2924 = vmatprep.subr.mxu0 0.0
        %2925 = vmatpush1.msra.mxu0 0.0
        %2926 = vmatprep.subr.mxu0 0.0
        %2927 = vmatpush1.msra.mxu0 %v2891
        %2928 = vmatprep.subr.mxu0 0.0
        %2929 = vmatpush2.msra.mxu0 0.0
        %2930 = vmatprep.subr.mxu0 0.0
        %2931 = vmatpush2.msra.mxu0 0.0
        %2932 = vmatprep.subr.mxu0 0.0
        %2933 = vmatpush2.msra.mxu0 0.0
        %2934 = vmatprep.subr.mxu0 0.0
        %2935 = vmatpush2.msra.mxu0 0.0
        %2936 = vmatprep.subr.mxu0 0.0
        %2937 = vmatpush2.msra.mxu0 0.0
        %2938 = vmatprep.subr.mxu0 0.0
        %2939 = vmatpush2.msra.mxu0 0.0
        %2940 = vmatprep.subr.mxu0 0.0
        %2941 = vmatpush2.msra.mxu0 0.0
        %2942 = vmatprep.subr.mxu0 0.0
        %2943 = vmatpush2.msra.mxu0 0.0
        %2944 = vmatprep.subr.mxu0 0.0
        %2945 = vmatpush2.msra.mxu0 0.0
        %2946 = vmatprep.subr.mxu0 0.0
        %2947 = vmatpush2.msra.mxu0 0.0
        %2948 = vmatprep.subr.mxu0 0.0
        %2949 = vmatpush2.msra.mxu0 0.0
        %2950 = vmatprep.subr.mxu0 0.0
        %2951 = vmatpush2.msra.mxu0 0.0
        %2952 = vmatprep.subr.mxu0 0.0
        %2953 = vmatpush2.msra.mxu0 0.0
        %2954 = vmatprep.subr.mxu0 0.0
        %2955 = vmatpush2.msra.mxu0 0.0
        %2956 = vmatprep.subr.mxu0 0.0
        %2957 = vmatpush2.msra.mxu0 0.0
        %2958 = vmatprep.subr.mxu0 0.0
        %2959 = vmatpush2.msra.mxu0 0.0
        %2960 = vmatprep.mubr.f32.mxu0 0.0
        %2961 = vmatmul.mubr.f32.gmra.mxu0 %v2894
        %v2962 = vpop.f32.mrf.mxu0
        %v2963 = vadd.f32 0.0, %v2962
        %v2964 = vpop.f32.mrf.mxu0
        %2965 = vdwg.mxu0
        %2966 = vrot.lane.b32.xlu0 %v1803, 96
        %v2967 = vpop.permute.xlu0 %2966
        %v2970 = vsel %vm2421, %v2508, 0
        %2972 = vmatprep.subr.mxu0 0.0
        %2973 = vmatpush1.msra.mxu0 0.0
        %2974 = vmatprep.subr.mxu0 0.0
        %2975 = vmatpush1.msra.mxu0 0.0
        %2976 = vmatprep.subr.mxu0 0.0
        %2977 = vmatpush1.msra.mxu0 0.0
        %2978 = vmatprep.subr.mxu0 0.0
        %2979 = vmatpush1.msra.mxu0 0.0
        %2980 = vmatprep.subr.mxu0 0.0
        %2981 = vmatpush1.msra.mxu0 0.0
        %2982 = vmatprep.subr.mxu0 0.0
        %2983 = vmatpush1.msra.mxu0 0.0
        %2984 = vmatprep.subr.mxu0 0.0
        %2985 = vmatpush1.msra.mxu0 0.0
        %2986 = vmatprep.subr.mxu0 0.0
        %2987 = vmatpush1.msra.mxu0 0.0
        %2988 = vmatprep.subr.mxu0 0.0
        %2989 = vmatpush1.msra.mxu0 0.0
        %2990 = vmatprep.subr.mxu0 0.0
        %2991 = vmatpush1.msra.mxu0 0.0
        %2992 = vmatprep.subr.mxu0 0.0
        %2993 = vmatpush1.msra.mxu0 0.0
        %2994 = vmatprep.subr.mxu0 0.0
        %2995 = vmatpush1.msra.mxu0 0.0
        %2996 = vmatprep.subr.mxu0 0.0
        %2997 = vmatpush1.msra.mxu0 0.0
        %2998 = vmatprep.subr.mxu0 0.0
        %2999 = vmatpush1.msra.mxu0 0.0
        %3000 = vmatprep.subr.mxu0 0.0
        %3001 = vmatpush1.msra.mxu0 0.0
        %3002 = vmatprep.subr.mxu0 0.0
        %3003 = vmatpush1.msra.mxu0 %v2967
        %3004 = vmatprep.subr.mxu0 0.0
        %3005 = vmatpush2.msra.mxu0 0.0
        %3006 = vmatprep.subr.mxu0 0.0
        %3007 = vmatpush2.msra.mxu0 0.0
        %3008 = vmatprep.subr.mxu0 0.0
        %3009 = vmatpush2.msra.mxu0 0.0
        %3010 = vmatprep.subr.mxu0 0.0
        %3011 = vmatpush2.msra.mxu0 0.0
        %3012 = vmatprep.subr.mxu0 0.0
        %3013 = vmatpush2.msra.mxu0 0.0
        %3014 = vmatprep.subr.mxu0 0.0
        %3015 = vmatpush2.msra.mxu0 0.0
        %3016 = vmatprep.subr.mxu0 0.0
        %3017 = vmatpush2.msra.mxu0 0.0
        %3018 = vmatprep.subr.mxu0 0.0
        %3019 = vmatpush2.msra.mxu0 0.0
        %3020 = vmatprep.subr.mxu0 0.0
        %3021 = vmatpush2.msra.mxu0 0.0
        %3022 = vmatprep.subr.mxu0 0.0
        %3023 = vmatpush2.msra.mxu0 0.0
        %3024 = vmatprep.subr.mxu0 0.0
        %3025 = vmatpush2.msra.mxu0 0.0
        %3026 = vmatprep.subr.mxu0 0.0
        %3027 = vmatpush2.msra.mxu0 0.0
        %3028 = vmatprep.subr.mxu0 0.0
        %3029 = vmatpush2.msra.mxu0 0.0
        %3030 = vmatprep.subr.mxu0 0.0
        %3031 = vmatpush2.msra.mxu0 0.0
        %3032 = vmatprep.subr.mxu0 0.0
        %3033 = vmatpush2.msra.mxu0 0.0
        %3034 = vmatprep.subr.mxu0 0.0
        %3035 = vmatpush2.msra.mxu0 0.0
        %3036 = vmatprep.mubr.f32.mxu0 0.0
        %3037 = vmatmul.mubr.f32.gmra.mxu0 %v2970
        %v3038 = vpop.f32.mrf.mxu0
        %v3039 = vadd.f32 0.0, %v3038
        %v3040 = vpop.f32.mrf.mxu0
        %3041 = vdwg.mxu0
        %3042 = vrot.lane.b32.xlu0 %v1804, 96
        %v3043 = vpop.permute.xlu0 %3042
        %v3046 = vsel %vm2421, %v2509, 0
        %3048 = vmatprep.subr.mxu0 0.0
        %3049 = vmatpush1.msra.mxu0 0.0
        %3050 = vmatprep.subr.mxu0 0.0
        %3051 = vmatpush1.msra.mxu0 0.0
        %3052 = vmatprep.subr.mxu0 0.0
        %3053 = vmatpush1.msra.mxu0 0.0
        %3054 = vmatprep.subr.mxu0 0.0
        %3055 = vmatpush1.msra.mxu0 0.0
        %3056 = vmatprep.subr.mxu0 0.0
        %3057 = vmatpush1.msra.mxu0 0.0
        %3058 = vmatprep.subr.mxu0 0.0
        %3059 = vmatpush1.msra.mxu0 0.0
        %3060 = vmatprep.subr.mxu0 0.0
        %3061 = vmatpush1.msra.mxu0 0.0
        %3062 = vmatprep.subr.mxu0 0.0
        %3063 = vmatpush1.msra.mxu0 0.0
        %3064 = vmatprep.subr.mxu0 0.0
        %3065 = vmatpush1.msra.mxu0 0.0
        %3066 = vmatprep.subr.mxu0 0.0
        %3067 = vmatpush1.msra.mxu0 0.0
        %3068 = vmatprep.subr.mxu0 0.0
        %3069 = vmatpush1.msra.mxu0 0.0
        %3070 = vmatprep.subr.mxu0 0.0
        %3071 = vmatpush1.msra.mxu0 0.0
        %3072 = vmatprep.subr.mxu0 0.0
        %3073 = vmatpush1.msra.mxu0 0.0
        %3074 = vmatprep.subr.mxu0 0.0
        %3075 = vmatpush1.msra.mxu0 0.0
        %3076 = vmatprep.subr.mxu0 0.0
        %3077 = vmatpush1.msra.mxu0 0.0
        %3078 = vmatprep.subr.mxu0 0.0
        %3079 = vmatpush1.msra.mxu0 %v3043
        %3080 = vmatprep.subr.mxu0 0.0
        %3081 = vmatpush2.msra.mxu0 0.0
        %3082 = vmatprep.subr.mxu0 0.0
        %3083 = vmatpush2.msra.mxu0 0.0
        %3084 = vmatprep.subr.mxu0 0.0
        %3085 = vmatpush2.msra.mxu0 0.0
        %3086 = vmatprep.subr.mxu0 0.0
        %3087 = vmatpush2.msra.mxu0 0.0
        %3088 = vmatprep.subr.mxu0 0.0
        %3089 = vmatpush2.msra.mxu0 0.0
        %3090 = vmatprep.subr.mxu0 0.0
        %3091 = vmatpush2.msra.mxu0 0.0
        %3092 = vmatprep.subr.mxu0 0.0
        %3093 = vmatpush2.msra.mxu0 0.0
        %3094 = vmatprep.subr.mxu0 0.0
        %3095 = vmatpush2.msra.mxu0 0.0
        %3096 = vmatprep.subr.mxu0 0.0
        %3097 = vmatpush2.msra.mxu0 0.0
        %3098 = vmatprep.subr.mxu0 0.0
        %3099 = vmatpush2.msra.mxu0 0.0
        %3100 = vmatprep.subr.mxu0 0.0
        %3101 = vmatpush2.msra.mxu0 0.0
        %3102 = vmatprep.subr.mxu0 0.0
        %3103 = vmatpush2.msra.mxu0 0.0
        %3104 = vmatprep.subr.mxu0 0.0
        %3105 = vmatpush2.msra.mxu0 0.0
        %3106 = vmatprep.subr.mxu0 0.0
        %3107 = vmatpush2.msra.mxu0 0.0
        %3108 = vmatprep.subr.mxu0 0.0
        %3109 = vmatpush2.msra.mxu0 0.0
        %3110 = vmatprep.subr.mxu0 0.0
        %3111 = vmatpush2.msra.mxu0 0.0
        %3112 = vmatprep.mubr.f32.mxu0 0.0
        %3113 = vmatmul.mubr.f32.gmra.mxu0 %v3046
        %v3114 = vpop.f32.mrf.mxu0
        %v3115 = vadd.f32 0.0, %v3114
        %v3116 = vpop.f32.mrf.mxu0
        %3117 = vdwg.mxu0
        %3119 = vrot.lane.b32.xlu0 %v2659, 32
        %v3120 = vpop.permute.xlu0 %3119
        %3123 = vrot.lane.b32.xlu0 %v2735, 64
        %v3124 = vpop.permute.xlu0 %3123
        %3127 = vrot.lane.b32.xlu0 %v2811, 96
        %v3128 = vpop.permute.xlu0 %3127
        %3131 = vrot.lane.b32.xlu0 %v2963, 32
        %v3132 = vpop.permute.xlu0 %3131
        %3135 = vrot.lane.b32.xlu0 %v3039, 64
        %v3136 = vpop.permute.xlu0 %3135
        %3139 = vrot.lane.b32.xlu0 %v3115, 96
        %v3140 = vpop.permute.xlu0 %3139
        %v3142 = vsel %vm324, %v2583, %v3120
        %vm3143 = vcmask 523264
        %v3144 = vsel %vm3143, %v3142, %v3124
        %vm3145 = vcmask 785408
        %v3146 = vsel %vm3145, %v3144, %v3128
        %v3147 = vsel %vm324, %v2887, %v3132
        %v3148 = vsel %vm3143, %v3147, %v3136
        %v3149 = vsel %vm3145, %v3148, %v3140
        %3150 = vst [vmem:[%s282] sm:$0xff] %v3146
        %3151 = vst [vmem:[%s282 + $0x8] sm:$0xff] %v3149
        %s3152 = sand.u32 %s127, 1
        %s3153 = scalar_lea.sflag [#allocation4], %s3152
        %s3154 = sand.u32 %s127, 1
        %s3155 = smul.addr %s3154, 16
        %s3156 = scalar_lea.vmem [#allocation10], %s3155
        // Predicated region
        $region53: #{tpu_custom_call.1} parent=35 // pred_check
          %p3157 = pneg %p137
        $region54: #{tpu_custom_call.1} parent=35 // pred_check_branch
          %3159 = sbr.rel (%p3157) target = $region56
        $region55: #{tpu_custom_call.1} parent=35 // pred_region
          %s3160 = smul.u32 2, %s25
          %s3162 = ssub.s32 256, 256
          %3163 = vsyncadd %s3153, %s3162
          %s3164 = smul.addr %s3160, 128
          %s3165 = scalar_lea.hbm %s4, %s3164
          %s3167 = sshll.u32 %s3156, 4
          %s3168 = int_to_ptr.vmem [resolvable:$true] %s3167
          %3170 = dma.vmem_to_hbm [thread:$0]  %s3168, 256, %s3165, %s3153
        $region56: #{tpu_custom_call.1} parent=35 // pred_fallthru
          _
      $region36: #{tpu_custom_call.1} parent=5 // pred_fallthru
        _
      %p3171 = scmp.le.s32.totalorder 2, %s20
      // Predicated region
      $region57: #{tpu_custom_call.1} parent=5 // pred_check
        %p3172 = pneg %p3171
      $region58: #{tpu_custom_call.1} parent=5 // pred_check_branch
        %3174 = sbr.rel (%p3172) target = $region60
      $region59: #{tpu_custom_call.1} parent=5 // pred_region
        %s3175 = ssub.s32 %s20, 2
        // Predicated region
        $region61: #{tpu_custom_call.1} parent=59 // pred_check
          %p3176 = pneg %p143
        $region62: #{tpu_custom_call.1} parent=59 // pred_check_branch
          %3178 = sbr.rel (%p3176) target = $region64
        $region63: #{tpu_custom_call.1} parent=59 // pred_region
          %s3179 = sand.u32 %s128, 1
          %s3180 = scalar_lea.sflag [#allocation4], %s3179
          %s3181 = sand.u32 %s128, 1
          %s3182 = smul.addr %s3181, 16
          %s3183 = scalar_lea.vmem [#allocation10], %s3182
          %3184 = dma.done %s3180, 256
        $region64: #{tpu_custom_call.1} parent=59 // pred_fallthru
          _
      $region60: #{tpu_custom_call.1} parent=5 // pred_fallthru
        _
    $region6: #{tpu_custom_call.1} parent=1 // loop_footer
      %s24 = sadd.s32 1, %s20
    $region7: #{tpu_custom_call.1} parent=1 // loop_footer_branch
      %19 = sbr.rel target = $region3
    $region8: #{tpu_custom_call.1} parent=1 // loop_exit
      _
    %3185 = vsyncpa [#allocation3], 1
    %s3186 = scalar_lea.sflag [#allocation3], 1
    %3187 = vsyncpa %s3186, 1
    %3188 = vsyncpa [#allocation6], 1
    %s3189 = scalar_lea.sflag [#allocation6], 1
    %3190 = vsyncpa %s3189, 1
    %3191 = vsyncpa [#allocation9], 1
    %3192 = vsyncpa [#allocation4], 1
    %s3193 = scalar_lea.sflag [#allocation4], 1
    %3194 = vsyncpa %s3193, 1

</llo_original>
